<compile_context>
chip_gen: v6e
topology: v6e:2x2x1
jax: 0.10.0
libtpu: 0.0.40
codegen_flags: <defaults>
</compile_context>

<pallas_src>
import math
import jax
import jax.numpy as jnp
from jax.experimental import pallas as pl
from jax.experimental.pallas import tpu as pltpu

# ----- model hyper-parameters (small, consistent with the module) -----
VOCAB = 64
V_PAD = 128          # lane-dense logits (pad 64 -> 128), sliced back in the wrapper
D_MODEL = 32
NUM_HEADS = 4
DEPTH = D_MODEL // NUM_HEADS
D_FF = 64
NUM_LAYERS = 2
MAX_LEN = 64
LN_EPS = 1e-5
NEG_BIAS = -1e9      # finite additive mask bias (avoids -inf - -inf = NaN)


# ----------------------------- in-kernel helpers -----------------------------
def _dot_bf16(a, b):
    """Weight matmul on the MXU: bf16 inputs, f32 accumulation."""
    return jnp.dot(a.astype(jnp.bfloat16), b.astype(jnp.bfloat16),
                   preferred_element_type=jnp.float32)


def _dot_nt(a, b):
    """a @ b.T contracting the last dims (no explicit transpose), f32 accumulation."""
    return jax.lax.dot_general(a, b, (((1,), (1,)), ((), ())),
                               preferred_element_type=jnp.float32)


def _layernorm(x, g, b):
    mu = jnp.mean(x, axis=-1, keepdims=True)
    var = jnp.mean(jnp.square(x - mu), axis=-1, keepdims=True)
    return (x - mu) * jax.lax.rsqrt(var + LN_EPS) * g + b


def _mha_core(q, k, v, bias, wo, bo):
    """q:(Sq,D), k/v:(Sk,D) f32; bias additive, broadcastable to (Sq,Sk);
    wo:(D,D) bf16; bo:(1,D) f32."""
    scale = 1.0 / math.sqrt(DEPTH)
    heads = []
    # TODO(synk): batching all heads in one MXU push needs a rank-4 / two-batch-dim
    # dot_general which Mosaic does not lower; heads stay a static unrolled loop of
    # 2-D matmuls (DEPTH=8 contraction is launch/overhead-dominated either way).
    for h in range(NUM_HEADS):
        sl = slice(h * DEPTH, (h + 1) * DEPTH)
        s = _dot_nt(q[:, sl], k[:, sl]) * scale + bias          # (Sq, Sk)
        s = s - jnp.max(s, axis=-1, keepdims=True)
        e = jnp.exp(s)
        p = e * pl.reciprocal(jnp.sum(e, axis=-1, keepdims=True), approx=True)
        heads.append(jnp.dot(p, v[:, sl], preferred_element_type=jnp.float32))
    ctx = jnp.concatenate(heads, axis=-1)                       # (Sq, D)
    return _dot_bf16(ctx, wo) + bo                              # single Wo matmul


# ----------------------------- fused Pallas kernel -----------------------------
def fused_decoder_kernel(x_ref, enc_ref, sab_ref, cab_ref,
                         wqkv_ref, bqkv_ref, wo_ref, bo_ref,
                         wff1_ref, bff1_ref, wff2_ref, bff2_ref,
                         lng_ref, lnb_ref, wout_ref, bout_ref,
                         out_ref):
    x = x_ref[0]              # (S, D)      current batch element
    enc = enc_ref[0]          # (S_enc, D)
    sab = sab_ref[...]        # (S, S)      additive self-attention bias
    cab = cab_ref[0]          # (1, S_enc)  additive cross-attention bias

    for li in range(NUM_LAYERS):
        # ---- masked self-attention (fused QKV projection) ----
        qkv = _dot_bf16(x, wqkv_ref[li, 0]) + bqkv_ref[li, 0]   # (S, 3D)
        q = qkv[:, :D_MODEL]
        k = qkv[:, D_MODEL:2 * D_MODEL]
        v = qkv[:, 2 * D_MODEL:]
        a1 = _mha_core(q, k, v, sab, wo_ref[li, 0], bo_ref[li, 0])
        x = _layernorm(x + a1, lng_ref[li, 0], lnb_ref[li, 0])

        # ---- encoder-decoder attention (fused KV projection) ----
        wqkv = wqkv_ref[li, 1]
        bqkv = bqkv_ref[li, 1]
        q = _dot_bf16(x, wqkv[:, :D_MODEL]) + bqkv[:, :D_MODEL]
        kv = _dot_bf16(enc, wqkv[:, D_MODEL:]) + bqkv[:, D_MODEL:]
        k = kv[:, :D_MODEL]
        v = kv[:, D_MODEL:]
        a2 = _mha_core(q, k, v, cab, wo_ref[li, 1], bo_ref[li, 1])
        x = _layernorm(x + a2, lng_ref[li, 1], lnb_ref[li, 1])

        # ---- feed-forward ----
        h1 = jnp.maximum(_dot_bf16(x, wff1_ref[li]) + bff1_ref[li], 0.0)
        f = _dot_bf16(h1, wff2_ref[li]) + bff2_ref[li]
        x = _layernorm(x + f, lng_ref[li, 2], lnb_ref[li, 2])

    # ---- output projection into a lane-dense (S, V_PAD) slab ----
    out_ref[...] = _dot_bf16(x, wout_ref[...]) + bout_ref[...]


# ----------------------------- wrapper -----------------------------
def _full_spec(arr):
    nd = arr.ndim
    return pl.BlockSpec(arr.shape, lambda b, _n=nd: (0,) * _n)


@jax.jit
def transformer_decoder_forward(tokens, enc_output, look_ahead_mask, padding_mask, params):
    B, S = tokens.shape
    S_enc = enc_output.shape[1]

    # embedding gather + scale + positional encoding (gather glue kept outside the kernel)
    x = params['embedding'][tokens] * math.sqrt(D_MODEL) + params['pe'][:, :S, :]
    x = x.astype(jnp.float32)
    # dropout: identity (inference)

    # masks -> finite additive biases, computed once and reused by every head/layer
    sa_bias = (1.0 - look_ahead_mask.astype(jnp.float32)) * NEG_BIAS   # (S, S)
    ca_bias = (1.0 - padding_mask.astype(jnp.float32)) * NEG_BIAS      # (B, 1, S_enc)

    weight_args = (params['w_qkv'], params['b_qkv'], params['w_o'], params['b_o'],
                   params['w_ff1'], params['b_ff1'], params['w_ff2'], params['b_ff2'],
                   params['ln_g'], params['ln_b'], params['w_out'], params['b_out'])

    in_specs = [
        pl.BlockSpec((1, S, D_MODEL), lambda b: (b, 0, 0)),        # x, per-batch block
        pl.BlockSpec((1, S_enc, D_MODEL), lambda b: (b, 0, 0)),    # encoder output
        pl.BlockSpec((S, S), lambda b: (0, 0)),                    # self-attn bias (shared)
        pl.BlockSpec((1, 1, S_enc), lambda b: (b, 0, 0)),          # cross-attn bias
    ] + [_full_spec(w) for w in weight_args]                       # packed weight blobs

    out = pl.pallas_call(
        fused_decoder_kernel,
        out_shape=jax.ShapeDtypeStruct((B * S, V_PAD), jnp.float32),
        grid=(B,),
        in_specs=in_specs,
        out_specs=pl.BlockSpec((S, V_PAD), lambda b: (b, 0)),
        compiler_params=pltpu.CompilerParams(
            dimension_semantics=("parallel",)),    # shards across the 2 TCs on v7x
    )(x, enc_output, sa_bias, ca_bias, *weight_args)

    return out.reshape(B, S, V_PAD)[:, :, :VOCAB]


# ----------------------------- params -----------------------------
def positional_encoding(d_model, max_len):
    pos = jnp.arange(max_len, dtype=jnp.float32)[:, None]
    div = jnp.exp(jnp.arange(0, d_model, 2, dtype=jnp.float32)
                  * (-math.log(10000.0) / d_model))
    pe = jnp.zeros((max_len, d_model), jnp.float32)
    pe = pe.at[:, 0::2].set(jnp.sin(pos * div))
    pe = pe.at[:, 1::2].set(jnp.cos(pos * div))
    return pe[None]  # (1, max_len, d_model)


def init_params(key):
    def normal(k, shape, scale=0.02):
        return scale * jax.random.normal(k, shape, jnp.float32)

    keys = jax.random.split(key, 7)
    w_out = jnp.zeros((D_MODEL, V_PAD), jnp.float32)
    w_out = w_out.at[:, :VOCAB].set(normal(keys[5], (D_MODEL, VOCAB)))
    return {
        'embedding': normal(keys[0], (VOCAB, D_MODEL), 1.0),
        'pe': positional_encoding(D_MODEL, MAX_LEN),
        # per-layer params packed into stacked blobs; weights stored bf16 for the MXU.
        # axis 1 of the attention blobs: 0 = self-attention, 1 = encoder-decoder attention.
        'w_qkv': normal(keys[1], (NUM_LAYERS, 2, D_MODEL, 3 * D_MODEL)).astype(jnp.bfloat16),
        'b_qkv': jnp.zeros((NUM_LAYERS, 2, 1, 3 * D_MODEL), jnp.float32),
        'w_o':   normal(keys[2], (NUM_LAYERS, 2, D_MODEL, D_MODEL)).astype(jnp.bfloat16),
        'b_o':   jnp.zeros((NUM_LAYERS, 2, 1, D_MODEL), jnp.float32),
        'w_ff1': normal(keys[3], (NUM_LAYERS, D_MODEL, D_FF)).astype(jnp.bfloat16),
        'b_ff1': jnp.zeros((NUM_LAYERS, 1, D_FF), jnp.float32),
        'w_ff2': normal(keys[4], (NUM_LAYERS, D_FF, D_MODEL)).astype(jnp.bfloat16),
        'b_ff2': jnp.zeros((NUM_LAYERS, 1, D_MODEL), jnp.float32),
        'ln_g':  jnp.ones((NUM_LAYERS, 3, 1, D_MODEL), jnp.float32),
        'ln_b':  jnp.zeros((NUM_LAYERS, 3, 1, D_MODEL), jnp.float32),
        'w_out': w_out.astype(jnp.bfloat16),           # (D, V_PAD), cols >= VOCAB are zero
        'b_out': jnp.zeros((1, V_PAD), jnp.float32),
    }


if __name__ == "__main__":
    B, S, S_ENC = 2, 8, 10
    key = jax.random.PRNGKey(0)
    k_tok, k_enc, k_params = jax.random.split(key, 3)

    tokens = jax.random.randint(k_tok, (B, S), 0, VOCAB)
    enc_output = jax.random.normal(k_enc, (B, S_ENC, D_MODEL), jnp.float32)
    look_ahead_mask = jnp.tril(jnp.ones((S, S), jnp.float32))       # 0 => masked
    padding_mask = jnp.ones((B, 1, S_ENC), jnp.float32)             # all valid

    params = init_params(k_params)

    logits = transformer_decoder_forward(tokens, enc_output,
                                         look_ahead_mask, padding_mask, params)
    logits = jax.block_until_ready(logits)

    assert logits.shape == (B, S, VOCAB)
    assert bool(jnp.isfinite(logits).all())
    print("KERNEL_OK")
</pallas_src>

<mosaic_0001>
module attributes {stable_mosaic.version = 11 : i64} {
  func.func @fused_decoder_kernel(%arg0: i32, %arg1: memref<1x8x32xf32, #tpu.memory_space<vmem>>, %arg2: memref<1x10x32xf32, #tpu.memory_space<vmem>>, %arg3: memref<8x8xf32, #tpu.memory_space<vmem>>, %arg4: memref<1x1x10xf32, #tpu.memory_space<vmem>>, %arg5: memref<2x2x32x96xbf16, #tpu.memory_space<vmem>>, %arg6: memref<2x2x1x96xf32, #tpu.memory_space<vmem>>, %arg7: memref<2x2x32x32xbf16, #tpu.memory_space<vmem>>, %arg8: memref<2x2x1x32xf32, #tpu.memory_space<vmem>>, %arg9: memref<2x32x64xbf16, #tpu.memory_space<vmem>>, %arg10: memref<2x1x64xf32, #tpu.memory_space<vmem>>, %arg11: memref<2x64x32xbf16, #tpu.memory_space<vmem>>, %arg12: memref<2x1x32xf32, #tpu.memory_space<vmem>>, %arg13: memref<2x3x1x32xf32, #tpu.memory_space<vmem>>, %arg14: memref<2x3x1x32xf32, #tpu.memory_space<vmem>>, %arg15: memref<32x128xbf16, #tpu.memory_space<vmem>>, %arg16: memref<1x128xf32, #tpu.memory_space<vmem>>, %arg17: memref<8x128xf32, #tpu.memory_space<vmem>>) attributes {dimension_semantics = [#tpu.dimension_semantics<parallel>], iteration_bounds = array<i64: 2>, scalar_prefetch = 0 : i64, scratch_operands = 0 : i64, tpu.core_type = #tpu.core_type<tc>, window_params = [{transform_indices = @transform_0, window_bounds = array<i64: 1, 8, 32>}, {transform_indices = @transform_1, window_bounds = array<i64: 1, 10, 32>}, {pipeline_mode = #tpu.pipeline_mode<synchronous>, transform_indices = @transform_2, window_bounds = array<i64: 8, 8>}, {transform_indices = @transform_3, window_bounds = array<i64: 1, 1, 10>}, {pipeline_mode = #tpu.pipeline_mode<synchronous>, transform_indices = @transform_4, window_bounds = array<i64: 2, 2, 32, 96>}, {pipeline_mode = #tpu.pipeline_mode<synchronous>, transform_indices = @transform_5, window_bounds = array<i64: 2, 2, 1, 96>}, {pipeline_mode = #tpu.pipeline_mode<synchronous>, transform_indices = @transform_6, window_bounds = array<i64: 2, 2, 32, 32>}, {pipeline_mode = #tpu.pipeline_mode<synchronous>, transform_indices = @transform_7, window_bounds = array<i64: 2, 2, 1, 32>}, {pipeline_mode = #tpu.pipeline_mode<synchronous>, transform_indices = @transform_8, window_bounds = array<i64: 2, 32, 64>}, {pipeline_mode = #tpu.pipeline_mode<synchronous>, transform_indices = @transform_9, window_bounds = array<i64: 2, 1, 64>}, {pipeline_mode = #tpu.pipeline_mode<synchronous>, transform_indices = @transform_10, window_bounds = array<i64: 2, 64, 32>}, {pipeline_mode = #tpu.pipeline_mode<synchronous>, transform_indices = @transform_11, window_bounds = array<i64: 2, 1, 32>}, {pipeline_mode = #tpu.pipeline_mode<synchronous>, transform_indices = @transform_12, window_bounds = array<i64: 2, 3, 1, 32>}, {pipeline_mode = #tpu.pipeline_mode<synchronous>, transform_indices = @transform_13, window_bounds = array<i64: 2, 3, 1, 32>}, {pipeline_mode = #tpu.pipeline_mode<synchronous>, transform_indices = @transform_14, window_bounds = array<i64: 32, 128>}, {pipeline_mode = #tpu.pipeline_mode<synchronous>, transform_indices = @transform_15, window_bounds = array<i64: 1, 128>}, {transform_indices = @transform_16, window_bounds = array<i64: 8, 128>}]} {
    %c0 = arith.constant 0 : index
    %c0_0 = arith.constant 0 : index
    %c0_1 = arith.constant 0 : index
    %0 = vector.load %arg1[%c0, %c0_0, %c0_1] : memref<1x8x32xf32, #tpu.memory_space<vmem>>, vector<1x8x32xf32>
    %1 = vector.shape_cast %0 : vector<1x8x32xf32> to vector<8x32xf32>
    %c0_2 = arith.constant 0 : index
    %c0_3 = arith.constant 0 : index
    %c0_4 = arith.constant 0 : index
    %2 = vector.load %arg2[%c0_2, %c0_3, %c0_4] : memref<1x10x32xf32, #tpu.memory_space<vmem>>, vector<1x10x32xf32>
    %3 = vector.shape_cast %2 : vector<1x10x32xf32> to vector<10x32xf32>
    %c0_5 = arith.constant 0 : index
    %c0_6 = arith.constant 0 : index
    %4 = vector.load %arg3[%c0_5, %c0_6] : memref<8x8xf32, #tpu.memory_space<vmem>>, vector<8x8xf32>
    %c0_7 = arith.constant 0 : index
    %c0_8 = arith.constant 0 : index
    %c0_9 = arith.constant 0 : index
    %5 = vector.load %arg4[%c0_7, %c0_8, %c0_9] : memref<1x1x10xf32, #tpu.memory_space<vmem>>, vector<1x1x10xf32>
    %6 = vector.shape_cast %5 : vector<1x1x10xf32> to vector<1x10xf32>
    %c0_10 = arith.constant 0 : index
    %c0_11 = arith.constant 0 : index
    %c0_12 = arith.constant 0 : index
    %c0_13 = arith.constant 0 : index
    %7 = vector.load %arg5[%c0_10, %c0_11, %c0_12, %c0_13] : memref<2x2x32x96xbf16, #tpu.memory_space<vmem>>, vector<1x1x32x96xbf16>
    %8 = vector.shape_cast %7 : vector<1x1x32x96xbf16> to vector<32x96xbf16>
    %9 = arith.truncf %1 : vector<8x32xf32> to vector<8x32xbf16>
    %cst = arith.constant dense<0.000000e+00> : vector<8x96xf32>
    %10 = tpu.matmul %9, %8, %cst {dimension_numbers = #tpu.dot_dimension_numbers<[1], [0], [0], [1], [0, 0, 1, 1], [], []>} : vector<8x32xbf16>, vector<32x96xbf16>, vector<8x96xf32> -> vector<8x96xf32>
    %c0_14 = arith.constant 0 : index
    %c0_15 = arith.constant 0 : index
    %c0_16 = arith.constant 0 : index
    %c0_17 = arith.constant 0 : index
    %11 = vector.load %arg6[%c0_14, %c0_15, %c0_16, %c0_17] : memref<2x2x1x96xf32, #tpu.memory_space<vmem>>, vector<1x1x1x96xf32>
    %12 = vector.shape_cast %11 : vector<1x1x1x96xf32> to vector<1x96xf32>
    %13 = vector.broadcast %12 : vector<1x96xf32> to vector<8x96xf32>
    %14 = arith.addf %10, %13 : vector<8x96xf32>
    %15 = vector.extract_strided_slice %14 {offsets = [0, 0], sizes = [8, 32], strides = [1, 1]} : vector<8x96xf32> to vector<8x32xf32>
    %16 = vector.extract_strided_slice %14 {offsets = [0, 32], sizes = [8, 32], strides = [1, 1]} : vector<8x96xf32> to vector<8x32xf32>
    %17 = vector.extract_strided_slice %14 {offsets = [0, 64], sizes = [8, 32], strides = [1, 1]} : vector<8x96xf32> to vector<8x32xf32>
    %c0_18 = arith.constant 0 : index
    %c0_19 = arith.constant 0 : index
    %c0_20 = arith.constant 0 : index
    %c0_21 = arith.constant 0 : index
    %18 = vector.load %arg7[%c0_18, %c0_19, %c0_20, %c0_21] : memref<2x2x32x32xbf16, #tpu.memory_space<vmem>>, vector<1x1x32x32xbf16>
    %19 = vector.shape_cast %18 : vector<1x1x32x32xbf16> to vector<32x32xbf16>
    %c0_22 = arith.constant 0 : index
    %c0_23 = arith.constant 0 : index
    %c0_24 = arith.constant 0 : index
    %c0_25 = arith.constant 0 : index
    %20 = vector.load %arg8[%c0_22, %c0_23, %c0_24, %c0_25] : memref<2x2x1x32xf32, #tpu.memory_space<vmem>>, vector<1x1x1x32xf32>
    %21 = vector.shape_cast %20 : vector<1x1x1x32xf32> to vector<1x32xf32>
    %22 = vector.extract_strided_slice %15 {offsets = [0, 0], sizes = [8, 8], strides = [1, 1]} : vector<8x32xf32> to vector<8x8xf32>
    %23 = vector.extract_strided_slice %16 {offsets = [0, 0], sizes = [8, 8], strides = [1, 1]} : vector<8x32xf32> to vector<8x8xf32>
    %cst_26 = arith.constant dense<0.000000e+00> : vector<8x8xf32>
    %24 = tpu.matmul %22, %23, %cst_26 {dimension_numbers = #tpu.dot_dimension_numbers<[1], [1], [0], [0], [0, 0, 1, 0], [], []>} : vector<8x8xf32>, vector<8x8xf32>, vector<8x8xf32> -> vector<8x8xf32>
    %cst_27 = arith.constant 0.353553385 : f32
    %25 = vector.broadcast %cst_27 : f32 to vector<8x8xf32>
    %26 = arith.mulf %24, %25 : vector<8x8xf32>
    %27 = arith.addf %26, %4 : vector<8x8xf32>
    %cst_28 = arith.constant dense<0xFF800000> : vector<8xf32>
    %28 = vector.multi_reduction <maximumf>, %27, %cst_28 [1] : vector<8x8xf32> to vector<8xf32>
    %29 = vector.shape_cast %28 : vector<8xf32> to vector<8x1xf32>
    %30 = vector.broadcast %29 : vector<8x1xf32> to vector<8x8xf32>
    %31 = arith.subf %27, %30 : vector<8x8xf32>
    %32 = math.exp %31 : vector<8x8xf32>
    %cst_29 = arith.constant dense<0.000000e+00> : vector<8xf32>
    %33 = vector.multi_reduction <add>, %32, %cst_29 [1] : vector<8x8xf32> to vector<8xf32>
    %34 = vector.shape_cast %33 : vector<8xf32> to vector<8x1xf32>
    %35 = tpu.reciprocal %34 {approx = true} : vector<8x1xf32> -> vector<8x1xf32>
    %36 = vector.broadcast %35 : vector<8x1xf32> to vector<8x8xf32>
    %37 = arith.mulf %32, %36 : vector<8x8xf32>
    %38 = vector.extract_strided_slice %17 {offsets = [0, 0], sizes = [8, 8], strides = [1, 1]} : vector<8x32xf32> to vector<8x8xf32>
    %cst_30 = arith.constant dense<0.000000e+00> : vector<8x8xf32>
    %39 = tpu.matmul %37, %38, %cst_30 {dimension_numbers = #tpu.dot_dimension_numbers<[1], [0], [0], [1], [0, 0, 1, 1], [], []>} : vector<8x8xf32>, vector<8x8xf32>, vector<8x8xf32> -> vector<8x8xf32>
    %40 = vector.extract_strided_slice %15 {offsets = [0, 8], sizes = [8, 8], strides = [1, 1]} : vector<8x32xf32> to vector<8x8xf32>
    %41 = vector.extract_strided_slice %16 {offsets = [0, 8], sizes = [8, 8], strides = [1, 1]} : vector<8x32xf32> to vector<8x8xf32>
    %cst_31 = arith.constant dense<0.000000e+00> : vector<8x8xf32>
    %42 = tpu.matmul %40, %41, %cst_31 {dimension_numbers = #tpu.dot_dimension_numbers<[1], [1], [0], [0], [0, 0, 1, 0], [], []>} : vector<8x8xf32>, vector<8x8xf32>, vector<8x8xf32> -> vector<8x8xf32>
    %cst_32 = arith.constant 0.353553385 : f32
    %43 = vector.broadcast %cst_32 : f32 to vector<8x8xf32>
    %44 = arith.mulf %42, %43 : vector<8x8xf32>
    %45 = arith.addf %44, %4 : vector<8x8xf32>
    %cst_33 = arith.constant dense<0xFF800000> : vector<8xf32>
    %46 = vector.multi_reduction <maximumf>, %45, %cst_33 [1] : vector<8x8xf32> to vector<8xf32>
    %47 = vector.shape_cast %46 : vector<8xf32> to vector<8x1xf32>
    %48 = vector.broadcast %47 : vector<8x1xf32> to vector<8x8xf32>
    %49 = arith.subf %45, %48 : vector<8x8xf32>
    %50 = math.exp %49 : vector<8x8xf32>
    %cst_34 = arith.constant dense<0.000000e+00> : vector<8xf32>
    %51 = vector.multi_reduction <add>, %50, %cst_34 [1] : vector<8x8xf32> to vector<8xf32>
    %52 = vector.shape_cast %51 : vector<8xf32> to vector<8x1xf32>
    %53 = tpu.reciprocal %52 {approx = true} : vector<8x1xf32> -> vector<8x1xf32>
    %54 = vector.broadcast %53 : vector<8x1xf32> to vector<8x8xf32>
    %55 = arith.mulf %50, %54 : vector<8x8xf32>
    %56 = vector.extract_strided_slice %17 {offsets = [0, 8], sizes = [8, 8], strides = [1, 1]} : vector<8x32xf32> to vector<8x8xf32>
    %cst_35 = arith.constant dense<0.000000e+00> : vector<8x8xf32>
    %57 = tpu.matmul %55, %56, %cst_35 {dimension_numbers = #tpu.dot_dimension_numbers<[1], [0], [0], [1], [0, 0, 1, 1], [], []>} : vector<8x8xf32>, vector<8x8xf32>, vector<8x8xf32> -> vector<8x8xf32>
    %58 = vector.extract_strided_slice %15 {offsets = [0, 16], sizes = [8, 8], strides = [1, 1]} : vector<8x32xf32> to vector<8x8xf32>
    %59 = vector.extract_strided_slice %16 {offsets = [0, 16], sizes = [8, 8], strides = [1, 1]} : vector<8x32xf32> to vector<8x8xf32>
    %cst_36 = arith.constant dense<0.000000e+00> : vector<8x8xf32>
    %60 = tpu.matmul %58, %59, %cst_36 {dimension_numbers = #tpu.dot_dimension_numbers<[1], [1], [0], [0], [0, 0, 1, 0], [], []>} : vector<8x8xf32>, vector<8x8xf32>, vector<8x8xf32> -> vector<8x8xf32>
    %cst_37 = arith.constant 0.353553385 : f32
    %61 = vector.broadcast %cst_37 : f32 to vector<8x8xf32>
    %62 = arith.mulf %60, %61 : vector<8x8xf32>
    %63 = arith.addf %62, %4 : vector<8x8xf32>
    %cst_38 = arith.constant dense<0xFF800000> : vector<8xf32>
    %64 = vector.multi_reduction <maximumf>, %63, %cst_38 [1] : vector<8x8xf32> to vector<8xf32>
    %65 = vector.shape_cast %64 : vector<8xf32> to vector<8x1xf32>
    %66 = vector.broadcast %65 : vector<8x1xf32> to vector<8x8xf32>
    %67 = arith.subf %63, %66 : vector<8x8xf32>
    %68 = math.exp %67 : vector<8x8xf32>
    %cst_39 = arith.constant dense<0.000000e+00> : vector<8xf32>
    %69 = vector.multi_reduction <add>, %68, %cst_39 [1] : vector<8x8xf32> to vector<8xf32>
    %70 = vector.shape_cast %69 : vector<8xf32> to vector<8x1xf32>
    %71 = tpu.reciprocal %70 {approx = true} : vector<8x1xf32> -> vector<8x1xf32>
    %72 = vector.broadcast %71 : vector<8x1xf32> to vector<8x8xf32>
    %73 = arith.mulf %68, %72 : vector<8x8xf32>
    %74 = vector.extract_strided_slice %17 {offsets = [0, 16], sizes = [8, 8], strides = [1, 1]} : vector<8x32xf32> to vector<8x8xf32>
    %cst_40 = arith.constant dense<0.000000e+00> : vector<8x8xf32>
    %75 = tpu.matmul %73, %74, %cst_40 {dimension_numbers = #tpu.dot_dimension_numbers<[1], [0], [0], [1], [0, 0, 1, 1], [], []>} : vector<8x8xf32>, vector<8x8xf32>, vector<8x8xf32> -> vector<8x8xf32>
    %76 = vector.extract_strided_slice %15 {offsets = [0, 24], sizes = [8, 8], strides = [1, 1]} : vector<8x32xf32> to vector<8x8xf32>
    %77 = vector.extract_strided_slice %16 {offsets = [0, 24], sizes = [8, 8], strides = [1, 1]} : vector<8x32xf32> to vector<8x8xf32>
    %cst_41 = arith.constant dense<0.000000e+00> : vector<8x8xf32>
    %78 = tpu.matmul %76, %77, %cst_41 {dimension_numbers = #tpu.dot_dimension_numbers<[1], [1], [0], [0], [0, 0, 1, 0], [], []>} : vector<8x8xf32>, vector<8x8xf32>, vector<8x8xf32> -> vector<8x8xf32>
    %cst_42 = arith.constant 0.353553385 : f32
    %79 = vector.broadcast %cst_42 : f32 to vector<8x8xf32>
    %80 = arith.mulf %78, %79 : vector<8x8xf32>
    %81 = arith.addf %80, %4 : vector<8x8xf32>
    %cst_43 = arith.constant dense<0xFF800000> : vector<8xf32>
    %82 = vector.multi_reduction <maximumf>, %81, %cst_43 [1] : vector<8x8xf32> to vector<8xf32>
    %83 = vector.shape_cast %82 : vector<8xf32> to vector<8x1xf32>
    %84 = vector.broadcast %83 : vector<8x1xf32> to vector<8x8xf32>
    %85 = arith.subf %81, %84 : vector<8x8xf32>
    %86 = math.exp %85 : vector<8x8xf32>
    %cst_44 = arith.constant dense<0.000000e+00> : vector<8xf32>
    %87 = vector.multi_reduction <add>, %86, %cst_44 [1] : vector<8x8xf32> to vector<8xf32>
    %88 = vector.shape_cast %87 : vector<8xf32> to vector<8x1xf32>
    %89 = tpu.reciprocal %88 {approx = true} : vector<8x1xf32> -> vector<8x1xf32>
    %90 = vector.broadcast %89 : vector<8x1xf32> to vector<8x8xf32>
    %91 = arith.mulf %86, %90 : vector<8x8xf32>
    %92 = vector.extract_strided_slice %17 {offsets = [0, 24], sizes = [8, 8], strides = [1, 1]} : vector<8x32xf32> to vector<8x8xf32>
    %cst_45 = arith.constant dense<0.000000e+00> : vector<8x8xf32>
    %93 = tpu.matmul %91, %92, %cst_45 {dimension_numbers = #tpu.dot_dimension_numbers<[1], [0], [0], [1], [0, 0, 1, 1], [], []>} : vector<8x8xf32>, vector<8x8xf32>, vector<8x8xf32> -> vector<8x8xf32>
    %94 = tpu.concatenate %39, %57, %75, %93 in 1 : vector<8x8xf32>, vector<8x8xf32>, vector<8x8xf32>, vector<8x8xf32> -> vector<8x32xf32>
    %95 = arith.truncf %94 : vector<8x32xf32> to vector<8x32xbf16>
    %cst_46 = arith.constant dense<0.000000e+00> : vector<8x32xf32>
    %96 = tpu.matmul %95, %19, %cst_46 {dimension_numbers = #tpu.dot_dimension_numbers<[1], [0], [0], [1], [0, 0, 1, 1], [], []>} : vector<8x32xbf16>, vector<32x32xbf16>, vector<8x32xf32> -> vector<8x32xf32>
    %97 = vector.broadcast %21 : vector<1x32xf32> to vector<8x32xf32>
    %98 = arith.addf %96, %97 : vector<8x32xf32>
    %99 = arith.addf %1, %98 : vector<8x32xf32>
    %c0_47 = arith.constant 0 : index
    %c0_48 = arith.constant 0 : index
    %c0_49 = arith.constant 0 : index
    %c0_50 = arith.constant 0 : index
    %100 = vector.load %arg13[%c0_47, %c0_48, %c0_49, %c0_50] : memref<2x3x1x32xf32, #tpu.memory_space<vmem>>, vector<1x1x1x32xf32>
    %101 = vector.shape_cast %100 : vector<1x1x1x32xf32> to vector<1x32xf32>
    %c0_51 = arith.constant 0 : index
    %c0_52 = arith.constant 0 : index
    %c0_53 = arith.constant 0 : index
    %c0_54 = arith.constant 0 : index
    %102 = vector.load %arg14[%c0_51, %c0_52, %c0_53, %c0_54] : memref<2x3x1x32xf32, #tpu.memory_space<vmem>>, vector<1x1x1x32xf32>
    %103 = vector.shape_cast %102 : vector<1x1x1x32xf32> to vector<1x32xf32>
    %cst_55 = arith.constant dense<0.000000e+00> : vector<8xf32>
    %104 = vector.multi_reduction <add>, %99, %cst_55 [1] : vector<8x32xf32> to vector<8xf32>
    %105 = vector.shape_cast %104 : vector<8xf32> to vector<8x1xf32>
    %cst_56 = arith.constant 3.200000e+01 : f32
    %106 = vector.broadcast %cst_56 : f32 to vector<8x1xf32>
    %107 = arith.divf %105, %106 : vector<8x1xf32>
    %108 = vector.broadcast %107 : vector<8x1xf32> to vector<8x32xf32>
    %109 = arith.subf %99, %108 : vector<8x32xf32>
    %110 = arith.mulf %109, %109 : vector<8x32xf32>
    %cst_57 = arith.constant dense<0.000000e+00> : vector<8xf32>
    %111 = vector.multi_reduction <add>, %110, %cst_57 [1] : vector<8x32xf32> to vector<8xf32>
    %112 = vector.shape_cast %111 : vector<8xf32> to vector<8x1xf32>
    %cst_58 = arith.constant 3.200000e+01 : f32
    %113 = vector.broadcast %cst_58 : f32 to vector<8x1xf32>
    %114 = arith.divf %112, %113 : vector<8x1xf32>
    %115 = vector.broadcast %107 : vector<8x1xf32> to vector<8x32xf32>
    %116 = arith.subf %99, %115 : vector<8x32xf32>
    %cst_59 = arith.constant 9.99999974E-6 : f32
    %117 = vector.broadcast %cst_59 : f32 to vector<8x1xf32>
    %118 = arith.addf %114, %117 : vector<8x1xf32>
    %119 = math.rsqrt %118 : vector<8x1xf32>
    %120 = vector.broadcast %119 : vector<8x1xf32> to vector<8x32xf32>
    %121 = arith.mulf %116, %120 : vector<8x32xf32>
    %122 = vector.broadcast %101 : vector<1x32xf32> to vector<8x32xf32>
    %123 = arith.mulf %121, %122 : vector<8x32xf32>
    %124 = vector.broadcast %103 : vector<1x32xf32> to vector<8x32xf32>
    %125 = arith.addf %123, %124 : vector<8x32xf32>
    %c0_60 = arith.constant 0 : index
    %c1 = arith.constant 1 : index
    %c0_61 = arith.constant 0 : index
    %c0_62 = arith.constant 0 : index
    %126 = vector.load %arg5[%c0_60, %c1, %c0_61, %c0_62] : memref<2x2x32x96xbf16, #tpu.memory_space<vmem>>, vector<1x1x32x96xbf16>
    %127 = vector.shape_cast %126 : vector<1x1x32x96xbf16> to vector<32x96xbf16>
    %c0_63 = arith.constant 0 : index
    %c1_64 = arith.constant 1 : index
    %c0_65 = arith.constant 0 : index
    %c0_66 = arith.constant 0 : index
    %128 = vector.load %arg6[%c0_63, %c1_64, %c0_65, %c0_66] : memref<2x2x1x96xf32, #tpu.memory_space<vmem>>, vector<1x1x1x96xf32>
    %129 = vector.shape_cast %128 : vector<1x1x1x96xf32> to vector<1x96xf32>
    %130 = vector.extract_strided_slice %127 {offsets = [0, 0], sizes = [32, 32], strides = [1, 1]} : vector<32x96xbf16> to vector<32x32xbf16>
    %131 = arith.truncf %125 : vector<8x32xf32> to vector<8x32xbf16>
    %cst_67 = arith.constant dense<0.000000e+00> : vector<8x32xf32>
    %132 = tpu.matmul %131, %130, %cst_67 {dimension_numbers = #tpu.dot_dimension_numbers<[1], [0], [0], [1], [0, 0, 1, 1], [], []>} : vector<8x32xbf16>, vector<32x32xbf16>, vector<8x32xf32> -> vector<8x32xf32>
    %133 = vector.extract_strided_slice %129 {offsets = [0, 0], sizes = [1, 32], strides = [1, 1]} : vector<1x96xf32> to vector<1x32xf32>
    %134 = vector.broadcast %133 : vector<1x32xf32> to vector<8x32xf32>
    %135 = arith.addf %132, %134 : vector<8x32xf32>
    %136 = vector.extract_strided_slice %127 {offsets = [0, 32], sizes = [32, 64], strides = [1, 1]} : vector<32x96xbf16> to vector<32x64xbf16>
    %137 = arith.truncf %3 : vector<10x32xf32> to vector<10x32xbf16>
    %cst_68 = arith.constant dense<0.000000e+00> : vector<10x64xf32>
    %138 = tpu.matmul %137, %136, %cst_68 {dimension_numbers = #tpu.dot_dimension_numbers<[1], [0], [0], [1], [0, 0, 1, 1], [], []>} : vector<10x32xbf16>, vector<32x64xbf16>, vector<10x64xf32> -> vector<10x64xf32>
    %139 = vector.extract_strided_slice %129 {offsets = [0, 32], sizes = [1, 64], strides = [1, 1]} : vector<1x96xf32> to vector<1x64xf32>
    %140 = vector.broadcast %139 : vector<1x64xf32> to vector<10x64xf32>
    %141 = arith.addf %138, %140 : vector<10x64xf32>
    %142 = vector.extract_strided_slice %141 {offsets = [0, 0], sizes = [10, 32], strides = [1, 1]} : vector<10x64xf32> to vector<10x32xf32>
    %143 = vector.extract_strided_slice %141 {offsets = [0, 32], sizes = [10, 32], strides = [1, 1]} : vector<10x64xf32> to vector<10x32xf32>
    %c0_69 = arith.constant 0 : index
    %c1_70 = arith.constant 1 : index
    %c0_71 = arith.constant 0 : index
    %c0_72 = arith.constant 0 : index
    %144 = vector.load %arg7[%c0_69, %c1_70, %c0_71, %c0_72] : memref<2x2x32x32xbf16, #tpu.memory_space<vmem>>, vector<1x1x32x32xbf16>
    %145 = vector.shape_cast %144 : vector<1x1x32x32xbf16> to vector<32x32xbf16>
    %c0_73 = arith.constant 0 : index
    %c1_74 = arith.constant 1 : index
    %c0_75 = arith.constant 0 : index
    %c0_76 = arith.constant 0 : index
    %146 = vector.load %arg8[%c0_73, %c1_74, %c0_75, %c0_76] : memref<2x2x1x32xf32, #tpu.memory_space<vmem>>, vector<1x1x1x32xf32>
    %147 = vector.shape_cast %146 : vector<1x1x1x32xf32> to vector<1x32xf32>
    %148 = vector.extract_strided_slice %135 {offsets = [0, 0], sizes = [8, 8], strides = [1, 1]} : vector<8x32xf32> to vector<8x8xf32>
    %149 = vector.extract_strided_slice %142 {offsets = [0, 0], sizes = [10, 8], strides = [1, 1]} : vector<10x32xf32> to vector<10x8xf32>
    %cst_77 = arith.constant dense<0.000000e+00> : vector<8x10xf32>
    %150 = tpu.matmul %148, %149, %cst_77 {dimension_numbers = #tpu.dot_dimension_numbers<[1], [1], [0], [0], [0, 0, 1, 0], [], []>} : vector<8x8xf32>, vector<10x8xf32>, vector<8x10xf32> -> vector<8x10xf32>
    %cst_78 = arith.constant 0.353553385 : f32
    %151 = vector.broadcast %cst_78 : f32 to vector<8x10xf32>
    %152 = arith.mulf %150, %151 : vector<8x10xf32>
    %153 = vector.broadcast %6 : vector<1x10xf32> to vector<8x10xf32>
    %154 = arith.addf %152, %153 : vector<8x10xf32>
    %cst_79 = arith.constant dense<0xFF800000> : vector<8xf32>
    %155 = vector.multi_reduction <maximumf>, %154, %cst_79 [1] : vector<8x10xf32> to vector<8xf32>
    %156 = vector.shape_cast %155 : vector<8xf32> to vector<8x1xf32>
    %157 = vector.broadcast %156 : vector<8x1xf32> to vector<8x10xf32>
    %158 = arith.subf %154, %157 : vector<8x10xf32>
    %159 = math.exp %158 : vector<8x10xf32>
    %cst_80 = arith.constant dense<0.000000e+00> : vector<8xf32>
    %160 = vector.multi_reduction <add>, %159, %cst_80 [1] : vector<8x10xf32> to vector<8xf32>
    %161 = vector.shape_cast %160 : vector<8xf32> to vector<8x1xf32>
    %162 = tpu.reciprocal %161 {approx = true} : vector<8x1xf32> -> vector<8x1xf32>
    %163 = vector.broadcast %162 : vector<8x1xf32> to vector<8x10xf32>
    %164 = arith.mulf %159, %163 : vector<8x10xf32>
    %165 = vector.extract_strided_slice %143 {offsets = [0, 0], sizes = [10, 8], strides = [1, 1]} : vector<10x32xf32> to vector<10x8xf32>
    %cst_81 = arith.constant dense<0.000000e+00> : vector<8x8xf32>
    %166 = tpu.matmul %164, %165, %cst_81 {dimension_numbers = #tpu.dot_dimension_numbers<[1], [0], [0], [1], [0, 0, 1, 1], [], []>} : vector<8x10xf32>, vector<10x8xf32>, vector<8x8xf32> -> vector<8x8xf32>
    %167 = vector.extract_strided_slice %135 {offsets = [0, 8], sizes = [8, 8], strides = [1, 1]} : vector<8x32xf32> to vector<8x8xf32>
    %168 = vector.extract_strided_slice %142 {offsets = [0, 8], sizes = [10, 8], strides = [1, 1]} : vector<10x32xf32> to vector<10x8xf32>
    %cst_82 = arith.constant dense<0.000000e+00> : vector<8x10xf32>
    %169 = tpu.matmul %167, %168, %cst_82 {dimension_numbers = #tpu.dot_dimension_numbers<[1], [1], [0], [0], [0, 0, 1, 0], [], []>} : vector<8x8xf32>, vector<10x8xf32>, vector<8x10xf32> -> vector<8x10xf32>
    %cst_83 = arith.constant 0.353553385 : f32
    %170 = vector.broadcast %cst_83 : f32 to vector<8x10xf32>
    %171 = arith.mulf %169, %170 : vector<8x10xf32>
    %172 = vector.broadcast %6 : vector<1x10xf32> to vector<8x10xf32>
    %173 = arith.addf %171, %172 : vector<8x10xf32>
    %cst_84 = arith.constant dense<0xFF800000> : vector<8xf32>
    %174 = vector.multi_reduction <maximumf>, %173, %cst_84 [1] : vector<8x10xf32> to vector<8xf32>
    %175 = vector.shape_cast %174 : vector<8xf32> to vector<8x1xf32>
    %176 = vector.broadcast %175 : vector<8x1xf32> to vector<8x10xf32>
    %177 = arith.subf %173, %176 : vector<8x10xf32>
    %178 = math.exp %177 : vector<8x10xf32>
    %cst_85 = arith.constant dense<0.000000e+00> : vector<8xf32>
    %179 = vector.multi_reduction <add>, %178, %cst_85 [1] : vector<8x10xf32> to vector<8xf32>
    %180 = vector.shape_cast %179 : vector<8xf32> to vector<8x1xf32>
    %181 = tpu.reciprocal %180 {approx = true} : vector<8x1xf32> -> vector<8x1xf32>
    %182 = vector.broadcast %181 : vector<8x1xf32> to vector<8x10xf32>
    %183 = arith.mulf %178, %182 : vector<8x10xf32>
    %184 = vector.extract_strided_slice %143 {offsets = [0, 8], sizes = [10, 8], strides = [1, 1]} : vector<10x32xf32> to vector<10x8xf32>
    %cst_86 = arith.constant dense<0.000000e+00> : vector<8x8xf32>
    %185 = tpu.matmul %183, %184, %cst_86 {dimension_numbers = #tpu.dot_dimension_numbers<[1], [0], [0], [1], [0, 0, 1, 1], [], []>} : vector<8x10xf32>, vector<10x8xf32>, vector<8x8xf32> -> vector<8x8xf32>
    %186 = vector.extract_strided_slice %135 {offsets = [0, 16], sizes = [8, 8], strides = [1, 1]} : vector<8x32xf32> to vector<8x8xf32>
    %187 = vector.extract_strided_slice %142 {offsets = [0, 16], sizes = [10, 8], strides = [1, 1]} : vector<10x32xf32> to vector<10x8xf32>
    %cst_87 = arith.constant dense<0.000000e+00> : vector<8x10xf32>
    %188 = tpu.matmul %186, %187, %cst_87 {dimension_numbers = #tpu.dot_dimension_numbers<[1], [1], [0], [0], [0, 0, 1, 0], [], []>} : vector<8x8xf32>, vector<10x8xf32>, vector<8x10xf32> -> vector<8x10xf32>
    %cst_88 = arith.constant 0.353553385 : f32
    %189 = vector.broadcast %cst_88 : f32 to vector<8x10xf32>
    %190 = arith.mulf %188, %189 : vector<8x10xf32>
    %191 = vector.broadcast %6 : vector<1x10xf32> to vector<8x10xf32>
    %192 = arith.addf %190, %191 : vector<8x10xf32>
    %cst_89 = arith.constant dense<0xFF800000> : vector<8xf32>
    %193 = vector.multi_reduction <maximumf>, %192, %cst_89 [1] : vector<8x10xf32> to vector<8xf32>
    %194 = vector.shape_cast %193 : vector<8xf32> to vector<8x1xf32>
    %195 = vector.broadcast %194 : vector<8x1xf32> to vector<8x10xf32>
    %196 = arith.subf %192, %195 : vector<8x10xf32>
    %197 = math.exp %196 : vector<8x10xf32>
    %cst_90 = arith.constant dense<0.000000e+00> : vector<8xf32>
    %198 = vector.multi_reduction <add>, %197, %cst_90 [1] : vector<8x10xf32> to vector<8xf32>
    %199 = vector.shape_cast %198 : vector<8xf32> to vector<8x1xf32>
    %200 = tpu.reciprocal %199 {approx = true} : vector<8x1xf32> -> vector<8x1xf32>
    %201 = vector.broadcast %200 : vector<8x1xf32> to vector<8x10xf32>
    %202 = arith.mulf %197, %201 : vector<8x10xf32>
    %203 = vector.extract_strided_slice %143 {offsets = [0, 16], sizes = [10, 8], strides = [1, 1]} : vector<10x32xf32> to vector<10x8xf32>
    %cst_91 = arith.constant dense<0.000000e+00> : vector<8x8xf32>
    %204 = tpu.matmul %202, %203, %cst_91 {dimension_numbers = #tpu.dot_dimension_numbers<[1], [0], [0], [1], [0, 0, 1, 1], [], []>} : vector<8x10xf32>, vector<10x8xf32>, vector<8x8xf32> -> vector<8x8xf32>
    %205 = vector.extract_strided_slice %135 {offsets = [0, 24], sizes = [8, 8], strides = [1, 1]} : vector<8x32xf32> to vector<8x8xf32>
    %206 = vector.extract_strided_slice %142 {offsets = [0, 24], sizes = [10, 8], strides = [1, 1]} : vector<10x32xf32> to vector<10x8xf32>
    %cst_92 = arith.constant dense<0.000000e+00> : vector<8x10xf32>
    %207 = tpu.matmul %205, %206, %cst_92 {dimension_numbers = #tpu.dot_dimension_numbers<[1], [1], [0], [0], [0, 0, 1, 0], [], []>} : vector<8x8xf32>, vector<10x8xf32>, vector<8x10xf32> -> vector<8x10xf32>
    %cst_93 = arith.constant 0.353553385 : f32
    %208 = vector.broadcast %cst_93 : f32 to vector<8x10xf32>
    %209 = arith.mulf %207, %208 : vector<8x10xf32>
    %210 = vector.broadcast %6 : vector<1x10xf32> to vector<8x10xf32>
    %211 = arith.addf %209, %210 : vector<8x10xf32>
    %cst_94 = arith.constant dense<0xFF800000> : vector<8xf32>
    %212 = vector.multi_reduction <maximumf>, %211, %cst_94 [1] : vector<8x10xf32> to vector<8xf32>
    %213 = vector.shape_cast %212 : vector<8xf32> to vector<8x1xf32>
    %214 = vector.broadcast %213 : vector<8x1xf32> to vector<8x10xf32>
    %215 = arith.subf %211, %214 : vector<8x10xf32>
    %216 = math.exp %215 : vector<8x10xf32>
    %cst_95 = arith.constant dense<0.000000e+00> : vector<8xf32>
    %217 = vector.multi_reduction <add>, %216, %cst_95 [1] : vector<8x10xf32> to vector<8xf32>
    %218 = vector.shape_cast %217 : vector<8xf32> to vector<8x1xf32>
    %219 = tpu.reciprocal %218 {approx = true} : vector<8x1xf32> -> vector<8x1xf32>
    %220 = vector.broadcast %219 : vector<8x1xf32> to vector<8x10xf32>
    %221 = arith.mulf %216, %220 : vector<8x10xf32>
    %222 = vector.extract_strided_slice %143 {offsets = [0, 24], sizes = [10, 8], strides = [1, 1]} : vector<10x32xf32> to vector<10x8xf32>
    %cst_96 = arith.constant dense<0.000000e+00> : vector<8x8xf32>
    %223 = tpu.matmul %221, %222, %cst_96 {dimension_numbers = #tpu.dot_dimension_numbers<[1], [0], [0], [1], [0, 0, 1, 1], [], []>} : vector<8x10xf32>, vector<10x8xf32>, vector<8x8xf32> -> vector<8x8xf32>
    %224 = tpu.concatenate %166, %185, %204, %223 in 1 : vector<8x8xf32>, vector<8x8xf32>, vector<8x8xf32>, vector<8x8xf32> -> vector<8x32xf32>
    %225 = arith.truncf %224 : vector<8x32xf32> to vector<8x32xbf16>
    %cst_97 = arith.constant dense<0.000000e+00> : vector<8x32xf32>
    %226 = tpu.matmul %225, %145, %cst_97 {dimension_numbers = #tpu.dot_dimension_numbers<[1], [0], [0], [1], [0, 0, 1, 1], [], []>} : vector<8x32xbf16>, vector<32x32xbf16>, vector<8x32xf32> -> vector<8x32xf32>
    %227 = vector.broadcast %147 : vector<1x32xf32> to vector<8x32xf32>
    %228 = arith.addf %226, %227 : vector<8x32xf32>
    %229 = arith.addf %125, %228 : vector<8x32xf32>
    %c0_98 = arith.constant 0 : index
    %c1_99 = arith.constant 1 : index
    %c0_100 = arith.constant 0 : index
    %c0_101 = arith.constant 0 : index
    %230 = vector.load %arg13[%c0_98, %c1_99, %c0_100, %c0_101] : memref<2x3x1x32xf32, #tpu.memory_space<vmem>>, vector<1x1x1x32xf32>
    %231 = vector.shape_cast %230 : vector<1x1x1x32xf32> to vector<1x32xf32>
    %c0_102 = arith.constant 0 : index
    %c1_103 = arith.constant 1 : index
    %c0_104 = arith.constant 0 : index
    %c0_105 = arith.constant 0 : index
    %232 = vector.load %arg14[%c0_102, %c1_103, %c0_104, %c0_105] : memref<2x3x1x32xf32, #tpu.memory_space<vmem>>, vector<1x1x1x32xf32>
    %233 = vector.shape_cast %232 : vector<1x1x1x32xf32> to vector<1x32xf32>
    %cst_106 = arith.constant dense<0.000000e+00> : vector<8xf32>
    %234 = vector.multi_reduction <add>, %229, %cst_106 [1] : vector<8x32xf32> to vector<8xf32>
    %235 = vector.shape_cast %234 : vector<8xf32> to vector<8x1xf32>
    %cst_107 = arith.constant 3.200000e+01 : f32
    %236 = vector.broadcast %cst_107 : f32 to vector<8x1xf32>
    %237 = arith.divf %235, %236 : vector<8x1xf32>
    %238 = vector.broadcast %237 : vector<8x1xf32> to vector<8x32xf32>
    %239 = arith.subf %229, %238 : vector<8x32xf32>
    %240 = arith.mulf %239, %239 : vector<8x32xf32>
    %cst_108 = arith.constant dense<0.000000e+00> : vector<8xf32>
    %241 = vector.multi_reduction <add>, %240, %cst_108 [1] : vector<8x32xf32> to vector<8xf32>
    %242 = vector.shape_cast %241 : vector<8xf32> to vector<8x1xf32>
    %cst_109 = arith.constant 3.200000e+01 : f32
    %243 = vector.broadcast %cst_109 : f32 to vector<8x1xf32>
    %244 = arith.divf %242, %243 : vector<8x1xf32>
    %245 = vector.broadcast %237 : vector<8x1xf32> to vector<8x32xf32>
    %246 = arith.subf %229, %245 : vector<8x32xf32>
    %cst_110 = arith.constant 9.99999974E-6 : f32
    %247 = vector.broadcast %cst_110 : f32 to vector<8x1xf32>
    %248 = arith.addf %244, %247 : vector<8x1xf32>
    %249 = math.rsqrt %248 : vector<8x1xf32>
    %250 = vector.broadcast %249 : vector<8x1xf32> to vector<8x32xf32>
    %251 = arith.mulf %246, %250 : vector<8x32xf32>
    %252 = vector.broadcast %231 : vector<1x32xf32> to vector<8x32xf32>
    %253 = arith.mulf %251, %252 : vector<8x32xf32>
    %254 = vector.broadcast %233 : vector<1x32xf32> to vector<8x32xf32>
    %255 = arith.addf %253, %254 : vector<8x32xf32>
    %c0_111 = arith.constant 0 : index
    %c0_112 = arith.constant 0 : index
    %c0_113 = arith.constant 0 : index
    %256 = vector.load %arg9[%c0_111, %c0_112, %c0_113] : memref<2x32x64xbf16, #tpu.memory_space<vmem>>, vector<1x32x64xbf16>
    %257 = vector.shape_cast %256 : vector<1x32x64xbf16> to vector<32x64xbf16>
    %258 = arith.truncf %255 : vector<8x32xf32> to vector<8x32xbf16>
    %cst_114 = arith.constant dense<0.000000e+00> : vector<8x64xf32>
    %259 = tpu.matmul %258, %257, %cst_114 {dimension_numbers = #tpu.dot_dimension_numbers<[1], [0], [0], [1], [0, 0, 1, 1], [], []>} : vector<8x32xbf16>, vector<32x64xbf16>, vector<8x64xf32> -> vector<8x64xf32>
    %c0_115 = arith.constant 0 : index
    %c0_116 = arith.constant 0 : index
    %c0_117 = arith.constant 0 : index
    %260 = vector.load %arg10[%c0_115, %c0_116, %c0_117] : memref<2x1x64xf32, #tpu.memory_space<vmem>>, vector<1x1x64xf32>
    %261 = vector.shape_cast %260 : vector<1x1x64xf32> to vector<1x64xf32>
    %262 = vector.broadcast %261 : vector<1x64xf32> to vector<8x64xf32>
    %263 = arith.addf %259, %262 : vector<8x64xf32>
    %cst_118 = arith.constant 0.000000e+00 : f32
    %264 = vector.broadcast %cst_118 : f32 to vector<8x64xf32>
    %265 = arith.maximumf %263, %264 : vector<8x64xf32>
    %c0_119 = arith.constant 0 : index
    %c0_120 = arith.constant 0 : index
    %c0_121 = arith.constant 0 : index
    %266 = vector.load %arg11[%c0_119, %c0_120, %c0_121] : memref<2x64x32xbf16, #tpu.memory_space<vmem>>, vector<1x64x32xbf16>
    %267 = vector.shape_cast %266 : vector<1x64x32xbf16> to vector<64x32xbf16>
    %268 = arith.truncf %265 : vector<8x64xf32> to vector<8x64xbf16>
    %cst_122 = arith.constant dense<0.000000e+00> : vector<8x32xf32>
    %269 = tpu.matmul %268, %267, %cst_122 {dimension_numbers = #tpu.dot_dimension_numbers<[1], [0], [0], [1], [0, 0, 1, 1], [], []>} : vector<8x64xbf16>, vector<64x32xbf16>, vector<8x32xf32> -> vector<8x32xf32>
    %c0_123 = arith.constant 0 : index
    %c0_124 = arith.constant 0 : index
    %c0_125 = arith.constant 0 : index
    %270 = vector.load %arg12[%c0_123, %c0_124, %c0_125] : memref<2x1x32xf32, #tpu.memory_space<vmem>>, vector<1x1x32xf32>
    %271 = vector.shape_cast %270 : vector<1x1x32xf32> to vector<1x32xf32>
    %272 = vector.broadcast %271 : vector<1x32xf32> to vector<8x32xf32>
    %273 = arith.addf %269, %272 : vector<8x32xf32>
    %274 = arith.addf %255, %273 : vector<8x32xf32>
    %c0_126 = arith.constant 0 : index
    %c2 = arith.constant 2 : index
    %c0_127 = arith.constant 0 : index
    %c0_128 = arith.constant 0 : index
    %275 = vector.load %arg13[%c0_126, %c2, %c0_127, %c0_128] : memref<2x3x1x32xf32, #tpu.memory_space<vmem>>, vector<1x1x1x32xf32>
    %276 = vector.shape_cast %275 : vector<1x1x1x32xf32> to vector<1x32xf32>
    %c0_129 = arith.constant 0 : index
    %c2_130 = arith.constant 2 : index
    %c0_131 = arith.constant 0 : index
    %c0_132 = arith.constant 0 : index
    %277 = vector.load %arg14[%c0_129, %c2_130, %c0_131, %c0_132] : memref<2x3x1x32xf32, #tpu.memory_space<vmem>>, vector<1x1x1x32xf32>
    %278 = vector.shape_cast %277 : vector<1x1x1x32xf32> to vector<1x32xf32>
    %cst_133 = arith.constant dense<0.000000e+00> : vector<8xf32>
    %279 = vector.multi_reduction <add>, %274, %cst_133 [1] : vector<8x32xf32> to vector<8xf32>
    %280 = vector.shape_cast %279 : vector<8xf32> to vector<8x1xf32>
    %cst_134 = arith.constant 3.200000e+01 : f32
    %281 = vector.broadcast %cst_134 : f32 to vector<8x1xf32>
    %282 = arith.divf %280, %281 : vector<8x1xf32>
    %283 = vector.broadcast %282 : vector<8x1xf32> to vector<8x32xf32>
    %284 = arith.subf %274, %283 : vector<8x32xf32>
    %285 = arith.mulf %284, %284 : vector<8x32xf32>
    %cst_135 = arith.constant dense<0.000000e+00> : vector<8xf32>
    %286 = vector.multi_reduction <add>, %285, %cst_135 [1] : vector<8x32xf32> to vector<8xf32>
    %287 = vector.shape_cast %286 : vector<8xf32> to vector<8x1xf32>
    %cst_136 = arith.constant 3.200000e+01 : f32
    %288 = vector.broadcast %cst_136 : f32 to vector<8x1xf32>
    %289 = arith.divf %287, %288 : vector<8x1xf32>
    %290 = vector.broadcast %282 : vector<8x1xf32> to vector<8x32xf32>
    %291 = arith.subf %274, %290 : vector<8x32xf32>
    %cst_137 = arith.constant 9.99999974E-6 : f32
    %292 = vector.broadcast %cst_137 : f32 to vector<8x1xf32>
    %293 = arith.addf %289, %292 : vector<8x1xf32>
    %294 = math.rsqrt %293 : vector<8x1xf32>
    %295 = vector.broadcast %294 : vector<8x1xf32> to vector<8x32xf32>
    %296 = arith.mulf %291, %295 : vector<8x32xf32>
    %297 = vector.broadcast %276 : vector<1x32xf32> to vector<8x32xf32>
    %298 = arith.mulf %296, %297 : vector<8x32xf32>
    %299 = vector.broadcast %278 : vector<1x32xf32> to vector<8x32xf32>
    %300 = arith.addf %298, %299 : vector<8x32xf32>
    %c1_138 = arith.constant 1 : index
    %c0_139 = arith.constant 0 : index
    %c0_140 = arith.constant 0 : index
    %c0_141 = arith.constant 0 : index
    %301 = vector.load %arg5[%c1_138, %c0_139, %c0_140, %c0_141] : memref<2x2x32x96xbf16, #tpu.memory_space<vmem>>, vector<1x1x32x96xbf16>
    %302 = vector.shape_cast %301 : vector<1x1x32x96xbf16> to vector<32x96xbf16>
    %303 = arith.truncf %300 : vector<8x32xf32> to vector<8x32xbf16>
    %cst_142 = arith.constant dense<0.000000e+00> : vector<8x96xf32>
    %304 = tpu.matmul %303, %302, %cst_142 {dimension_numbers = #tpu.dot_dimension_numbers<[1], [0], [0], [1], [0, 0, 1, 1], [], []>} : vector<8x32xbf16>, vector<32x96xbf16>, vector<8x96xf32> -> vector<8x96xf32>
    %c1_143 = arith.constant 1 : index
    %c0_144 = arith.constant 0 : index
    %c0_145 = arith.constant 0 : index
    %c0_146 = arith.constant 0 : index
    %305 = vector.load %arg6[%c1_143, %c0_144, %c0_145, %c0_146] : memref<2x2x1x96xf32, #tpu.memory_space<vmem>>, vector<1x1x1x96xf32>
    %306 = vector.shape_cast %305 : vector<1x1x1x96xf32> to vector<1x96xf32>
    %307 = vector.broadcast %306 : vector<1x96xf32> to vector<8x96xf32>
    %308 = arith.addf %304, %307 : vector<8x96xf32>
    %309 = vector.extract_strided_slice %308 {offsets = [0, 0], sizes = [8, 32], strides = [1, 1]} : vector<8x96xf32> to vector<8x32xf32>
    %310 = vector.extract_strided_slice %308 {offsets = [0, 32], sizes = [8, 32], strides = [1, 1]} : vector<8x96xf32> to vector<8x32xf32>
    %311 = vector.extract_strided_slice %308 {offsets = [0, 64], sizes = [8, 32], strides = [1, 1]} : vector<8x96xf32> to vector<8x32xf32>
    %c1_147 = arith.constant 1 : index
    %c0_148 = arith.constant 0 : index
    %c0_149 = arith.constant 0 : index
    %c0_150 = arith.constant 0 : index
    %312 = vector.load %arg7[%c1_147, %c0_148, %c0_149, %c0_150] : memref<2x2x32x32xbf16, #tpu.memory_space<vmem>>, vector<1x1x32x32xbf16>
    %313 = vector.shape_cast %312 : vector<1x1x32x32xbf16> to vector<32x32xbf16>
    %c1_151 = arith.constant 1 : index
    %c0_152 = arith.constant 0 : index
    %c0_153 = arith.constant 0 : index
    %c0_154 = arith.constant 0 : index
    %314 = vector.load %arg8[%c1_151, %c0_152, %c0_153, %c0_154] : memref<2x2x1x32xf32, #tpu.memory_space<vmem>>, vector<1x1x1x32xf32>
    %315 = vector.shape_cast %314 : vector<1x1x1x32xf32> to vector<1x32xf32>
    %316 = vector.extract_strided_slice %309 {offsets = [0, 0], sizes = [8, 8], strides = [1, 1]} : vector<8x32xf32> to vector<8x8xf32>
    %317 = vector.extract_strided_slice %310 {offsets = [0, 0], sizes = [8, 8], strides = [1, 1]} : vector<8x32xf32> to vector<8x8xf32>
    %cst_155 = arith.constant dense<0.000000e+00> : vector<8x8xf32>
    %318 = tpu.matmul %316, %317, %cst_155 {dimension_numbers = #tpu.dot_dimension_numbers<[1], [1], [0], [0], [0, 0, 1, 0], [], []>} : vector<8x8xf32>, vector<8x8xf32>, vector<8x8xf32> -> vector<8x8xf32>
    %cst_156 = arith.constant 0.353553385 : f32
    %319 = vector.broadcast %cst_156 : f32 to vector<8x8xf32>
    %320 = arith.mulf %318, %319 : vector<8x8xf32>
    %321 = arith.addf %320, %4 : vector<8x8xf32>
    %cst_157 = arith.constant dense<0xFF800000> : vector<8xf32>
    %322 = vector.multi_reduction <maximumf>, %321, %cst_157 [1] : vector<8x8xf32> to vector<8xf32>
    %323 = vector.shape_cast %322 : vector<8xf32> to vector<8x1xf32>
    %324 = vector.broadcast %323 : vector<8x1xf32> to vector<8x8xf32>
    %325 = arith.subf %321, %324 : vector<8x8xf32>
    %326 = math.exp %325 : vector<8x8xf32>
    %cst_158 = arith.constant dense<0.000000e+00> : vector<8xf32>
    %327 = vector.multi_reduction <add>, %326, %cst_158 [1] : vector<8x8xf32> to vector<8xf32>
    %328 = vector.shape_cast %327 : vector<8xf32> to vector<8x1xf32>
    %329 = tpu.reciprocal %328 {approx = true} : vector<8x1xf32> -> vector<8x1xf32>
    %330 = vector.broadcast %329 : vector<8x1xf32> to vector<8x8xf32>
    %331 = arith.mulf %326, %330 : vector<8x8xf32>
    %332 = vector.extract_strided_slice %311 {offsets = [0, 0], sizes = [8, 8], strides = [1, 1]} : vector<8x32xf32> to vector<8x8xf32>
    %cst_159 = arith.constant dense<0.000000e+00> : vector<8x8xf32>
    %333 = tpu.matmul %331, %332, %cst_159 {dimension_numbers = #tpu.dot_dimension_numbers<[1], [0], [0], [1], [0, 0, 1, 1], [], []>} : vector<8x8xf32>, vector<8x8xf32>, vector<8x8xf32> -> vector<8x8xf32>
    %334 = vector.extract_strided_slice %309 {offsets = [0, 8], sizes = [8, 8], strides = [1, 1]} : vector<8x32xf32> to vector<8x8xf32>
    %335 = vector.extract_strided_slice %310 {offsets = [0, 8], sizes = [8, 8], strides = [1, 1]} : vector<8x32xf32> to vector<8x8xf32>
    %cst_160 = arith.constant dense<0.000000e+00> : vector<8x8xf32>
    %336 = tpu.matmul %334, %335, %cst_160 {dimension_numbers = #tpu.dot_dimension_numbers<[1], [1], [0], [0], [0, 0, 1, 0], [], []>} : vector<8x8xf32>, vector<8x8xf32>, vector<8x8xf32> -> vector<8x8xf32>
    %cst_161 = arith.constant 0.353553385 : f32
    %337 = vector.broadcast %cst_161 : f32 to vector<8x8xf32>
    %338 = arith.mulf %336, %337 : vector<8x8xf32>
    %339 = arith.addf %338, %4 : vector<8x8xf32>
    %cst_162 = arith.constant dense<0xFF800000> : vector<8xf32>
    %340 = vector.multi_reduction <maximumf>, %339, %cst_162 [1] : vector<8x8xf32> to vector<8xf32>
    %341 = vector.shape_cast %340 : vector<8xf32> to vector<8x1xf32>
    %342 = vector.broadcast %341 : vector<8x1xf32> to vector<8x8xf32>
    %343 = arith.subf %339, %342 : vector<8x8xf32>
    %344 = math.exp %343 : vector<8x8xf32>
    %cst_163 = arith.constant dense<0.000000e+00> : vector<8xf32>
    %345 = vector.multi_reduction <add>, %344, %cst_163 [1] : vector<8x8xf32> to vector<8xf32>
    %346 = vector.shape_cast %345 : vector<8xf32> to vector<8x1xf32>
    %347 = tpu.reciprocal %346 {approx = true} : vector<8x1xf32> -> vector<8x1xf32>
    %348 = vector.broadcast %347 : vector<8x1xf32> to vector<8x8xf32>
    %349 = arith.mulf %344, %348 : vector<8x8xf32>
    %350 = vector.extract_strided_slice %311 {offsets = [0, 8], sizes = [8, 8], strides = [1, 1]} : vector<8x32xf32> to vector<8x8xf32>
    %cst_164 = arith.constant dense<0.000000e+00> : vector<8x8xf32>
    %351 = tpu.matmul %349, %350, %cst_164 {dimension_numbers = #tpu.dot_dimension_numbers<[1], [0], [0], [1], [0, 0, 1, 1], [], []>} : vector<8x8xf32>, vector<8x8xf32>, vector<8x8xf32> -> vector<8x8xf32>
    %352 = vector.extract_strided_slice %309 {offsets = [0, 16], sizes = [8, 8], strides = [1, 1]} : vector<8x32xf32> to vector<8x8xf32>
    %353 = vector.extract_strided_slice %310 {offsets = [0, 16], sizes = [8, 8], strides = [1, 1]} : vector<8x32xf32> to vector<8x8xf32>
    %cst_165 = arith.constant dense<0.000000e+00> : vector<8x8xf32>
    %354 = tpu.matmul %352, %353, %cst_165 {dimension_numbers = #tpu.dot_dimension_numbers<[1], [1], [0], [0], [0, 0, 1, 0], [], []>} : vector<8x8xf32>, vector<8x8xf32>, vector<8x8xf32> -> vector<8x8xf32>
    %cst_166 = arith.constant 0.353553385 : f32
    %355 = vector.broadcast %cst_166 : f32 to vector<8x8xf32>
    %356 = arith.mulf %354, %355 : vector<8x8xf32>
    %357 = arith.addf %356, %4 : vector<8x8xf32>
    %cst_167 = arith.constant dense<0xFF800000> : vector<8xf32>
    %358 = vector.multi_reduction <maximumf>, %357, %cst_167 [1] : vector<8x8xf32> to vector<8xf32>
    %359 = vector.shape_cast %358 : vector<8xf32> to vector<8x1xf32>
    %360 = vector.broadcast %359 : vector<8x1xf32> to vector<8x8xf32>
    %361 = arith.subf %357, %360 : vector<8x8xf32>
    %362 = math.exp %361 : vector<8x8xf32>
    %cst_168 = arith.constant dense<0.000000e+00> : vector<8xf32>
    %363 = vector.multi_reduction <add>, %362, %cst_168 [1] : vector<8x8xf32> to vector<8xf32>
    %364 = vector.shape_cast %363 : vector<8xf32> to vector<8x1xf32>
    %365 = tpu.reciprocal %364 {approx = true} : vector<8x1xf32> -> vector<8x1xf32>
    %366 = vector.broadcast %365 : vector<8x1xf32> to vector<8x8xf32>
    %367 = arith.mulf %362, %366 : vector<8x8xf32>
    %368 = vector.extract_strided_slice %311 {offsets = [0, 16], sizes = [8, 8], strides = [1, 1]} : vector<8x32xf32> to vector<8x8xf32>
    %cst_169 = arith.constant dense<0.000000e+00> : vector<8x8xf32>
    %369 = tpu.matmul %367, %368, %cst_169 {dimension_numbers = #tpu.dot_dimension_numbers<[1], [0], [0], [1], [0, 0, 1, 1], [], []>} : vector<8x8xf32>, vector<8x8xf32>, vector<8x8xf32> -> vector<8x8xf32>
    %370 = vector.extract_strided_slice %309 {offsets = [0, 24], sizes = [8, 8], strides = [1, 1]} : vector<8x32xf32> to vector<8x8xf32>
    %371 = vector.extract_strided_slice %310 {offsets = [0, 24], sizes = [8, 8], strides = [1, 1]} : vector<8x32xf32> to vector<8x8xf32>
    %cst_170 = arith.constant dense<0.000000e+00> : vector<8x8xf32>
    %372 = tpu.matmul %370, %371, %cst_170 {dimension_numbers = #tpu.dot_dimension_numbers<[1], [1], [0], [0], [0, 0, 1, 0], [], []>} : vector<8x8xf32>, vector<8x8xf32>, vector<8x8xf32> -> vector<8x8xf32>
    %cst_171 = arith.constant 0.353553385 : f32
    %373 = vector.broadcast %cst_171 : f32 to vector<8x8xf32>
    %374 = arith.mulf %372, %373 : vector<8x8xf32>
    %375 = arith.addf %374, %4 : vector<8x8xf32>
    %cst_172 = arith.constant dense<0xFF800000> : vector<8xf32>
    %376 = vector.multi_reduction <maximumf>, %375, %cst_172 [1] : vector<8x8xf32> to vector<8xf32>
    %377 = vector.shape_cast %376 : vector<8xf32> to vector<8x1xf32>
    %378 = vector.broadcast %377 : vector<8x1xf32> to vector<8x8xf32>
    %379 = arith.subf %375, %378 : vector<8x8xf32>
    %380 = math.exp %379 : vector<8x8xf32>
    %cst_173 = arith.constant dense<0.000000e+00> : vector<8xf32>
    %381 = vector.multi_reduction <add>, %380, %cst_173 [1] : vector<8x8xf32> to vector<8xf32>
    %382 = vector.shape_cast %381 : vector<8xf32> to vector<8x1xf32>
    %383 = tpu.reciprocal %382 {approx = true} : vector<8x1xf32> -> vector<8x1xf32>
    %384 = vector.broadcast %383 : vector<8x1xf32> to vector<8x8xf32>
    %385 = arith.mulf %380, %384 : vector<8x8xf32>
    %386 = vector.extract_strided_slice %311 {offsets = [0, 24], sizes = [8, 8], strides = [1, 1]} : vector<8x32xf32> to vector<8x8xf32>
    %cst_174 = arith.constant dense<0.000000e+00> : vector<8x8xf32>
    %387 = tpu.matmul %385, %386, %cst_174 {dimension_numbers = #tpu.dot_dimension_numbers<[1], [0], [0], [1], [0, 0, 1, 1], [], []>} : vector<8x8xf32>, vector<8x8xf32>, vector<8x8xf32> -> vector<8x8xf32>
    %388 = tpu.concatenate %333, %351, %369, %387 in 1 : vector<8x8xf32>, vector<8x8xf32>, vector<8x8xf32>, vector<8x8xf32> -> vector<8x32xf32>
    %389 = arith.truncf %388 : vector<8x32xf32> to vector<8x32xbf16>
    %cst_175 = arith.constant dense<0.000000e+00> : vector<8x32xf32>
    %390 = tpu.matmul %389, %313, %cst_175 {dimension_numbers = #tpu.dot_dimension_numbers<[1], [0], [0], [1], [0, 0, 1, 1], [], []>} : vector<8x32xbf16>, vector<32x32xbf16>, vector<8x32xf32> -> vector<8x32xf32>
    %391 = vector.broadcast %315 : vector<1x32xf32> to vector<8x32xf32>
    %392 = arith.addf %390, %391 : vector<8x32xf32>
    %393 = arith.addf %300, %392 : vector<8x32xf32>
    %c1_176 = arith.constant 1 : index
    %c0_177 = arith.constant 0 : index
    %c0_178 = arith.constant 0 : index
    %c0_179 = arith.constant 0 : index
    %394 = vector.load %arg13[%c1_176, %c0_177, %c0_178, %c0_179] : memref<2x3x1x32xf32, #tpu.memory_space<vmem>>, vector<1x1x1x32xf32>
    %395 = vector.shape_cast %394 : vector<1x1x1x32xf32> to vector<1x32xf32>
    %c1_180 = arith.constant 1 : index
    %c0_181 = arith.constant 0 : index
    %c0_182 = arith.constant 0 : index
    %c0_183 = arith.constant 0 : index
    %396 = vector.load %arg14[%c1_180, %c0_181, %c0_182, %c0_183] : memref<2x3x1x32xf32, #tpu.memory_space<vmem>>, vector<1x1x1x32xf32>
    %397 = vector.shape_cast %396 : vector<1x1x1x32xf32> to vector<1x32xf32>
    %cst_184 = arith.constant dense<0.000000e+00> : vector<8xf32>
    %398 = vector.multi_reduction <add>, %393, %cst_184 [1] : vector<8x32xf32> to vector<8xf32>
    %399 = vector.shape_cast %398 : vector<8xf32> to vector<8x1xf32>
    %cst_185 = arith.constant 3.200000e+01 : f32
    %400 = vector.broadcast %cst_185 : f32 to vector<8x1xf32>
    %401 = arith.divf %399, %400 : vector<8x1xf32>
    %402 = vector.broadcast %401 : vector<8x1xf32> to vector<8x32xf32>
    %403 = arith.subf %393, %402 : vector<8x32xf32>
    %404 = arith.mulf %403, %403 : vector<8x32xf32>
    %cst_186 = arith.constant dense<0.000000e+00> : vector<8xf32>
    %405 = vector.multi_reduction <add>, %404, %cst_186 [1] : vector<8x32xf32> to vector<8xf32>
    %406 = vector.shape_cast %405 : vector<8xf32> to vector<8x1xf32>
    %cst_187 = arith.constant 3.200000e+01 : f32
    %407 = vector.broadcast %cst_187 : f32 to vector<8x1xf32>
    %408 = arith.divf %406, %407 : vector<8x1xf32>
    %409 = vector.broadcast %401 : vector<8x1xf32> to vector<8x32xf32>
    %410 = arith.subf %393, %409 : vector<8x32xf32>
    %cst_188 = arith.constant 9.99999974E-6 : f32
    %411 = vector.broadcast %cst_188 : f32 to vector<8x1xf32>
    %412 = arith.addf %408, %411 : vector<8x1xf32>
    %413 = math.rsqrt %412 : vector<8x1xf32>
    %414 = vector.broadcast %413 : vector<8x1xf32> to vector<8x32xf32>
    %415 = arith.mulf %410, %414 : vector<8x32xf32>
    %416 = vector.broadcast %395 : vector<1x32xf32> to vector<8x32xf32>
    %417 = arith.mulf %415, %416 : vector<8x32xf32>
    %418 = vector.broadcast %397 : vector<1x32xf32> to vector<8x32xf32>
    %419 = arith.addf %417, %418 : vector<8x32xf32>
    %c1_189 = arith.constant 1 : index
    %c1_190 = arith.constant 1 : index
    %c0_191 = arith.constant 0 : index
    %c0_192 = arith.constant 0 : index
    %420 = vector.load %arg5[%c1_189, %c1_190, %c0_191, %c0_192] : memref<2x2x32x96xbf16, #tpu.memory_space<vmem>>, vector<1x1x32x96xbf16>
    %421 = vector.shape_cast %420 : vector<1x1x32x96xbf16> to vector<32x96xbf16>
    %c1_193 = arith.constant 1 : index
    %c1_194 = arith.constant 1 : index
    %c0_195 = arith.constant 0 : index
    %c0_196 = arith.constant 0 : index
    %422 = vector.load %arg6[%c1_193, %c1_194, %c0_195, %c0_196] : memref<2x2x1x96xf32, #tpu.memory_space<vmem>>, vector<1x1x1x96xf32>
    %423 = vector.shape_cast %422 : vector<1x1x1x96xf32> to vector<1x96xf32>
    %424 = vector.extract_strided_slice %421 {offsets = [0, 0], sizes = [32, 32], strides = [1, 1]} : vector<32x96xbf16> to vector<32x32xbf16>
    %425 = arith.truncf %419 : vector<8x32xf32> to vector<8x32xbf16>
    %cst_197 = arith.constant dense<0.000000e+00> : vector<8x32xf32>
    %426 = tpu.matmul %425, %424, %cst_197 {dimension_numbers = #tpu.dot_dimension_numbers<[1], [0], [0], [1], [0, 0, 1, 1], [], []>} : vector<8x32xbf16>, vector<32x32xbf16>, vector<8x32xf32> -> vector<8x32xf32>
    %427 = vector.extract_strided_slice %423 {offsets = [0, 0], sizes = [1, 32], strides = [1, 1]} : vector<1x96xf32> to vector<1x32xf32>
    %428 = vector.broadcast %427 : vector<1x32xf32> to vector<8x32xf32>
    %429 = arith.addf %426, %428 : vector<8x32xf32>
    %430 = vector.extract_strided_slice %421 {offsets = [0, 32], sizes = [32, 64], strides = [1, 1]} : vector<32x96xbf16> to vector<32x64xbf16>
    %431 = arith.truncf %3 : vector<10x32xf32> to vector<10x32xbf16>
    %cst_198 = arith.constant dense<0.000000e+00> : vector<10x64xf32>
    %432 = tpu.matmul %431, %430, %cst_198 {dimension_numbers = #tpu.dot_dimension_numbers<[1], [0], [0], [1], [0, 0, 1, 1], [], []>} : vector<10x32xbf16>, vector<32x64xbf16>, vector<10x64xf32> -> vector<10x64xf32>
    %433 = vector.extract_strided_slice %423 {offsets = [0, 32], sizes = [1, 64], strides = [1, 1]} : vector<1x96xf32> to vector<1x64xf32>
    %434 = vector.broadcast %433 : vector<1x64xf32> to vector<10x64xf32>
    %435 = arith.addf %432, %434 : vector<10x64xf32>
    %436 = vector.extract_strided_slice %435 {offsets = [0, 0], sizes = [10, 32], strides = [1, 1]} : vector<10x64xf32> to vector<10x32xf32>
    %437 = vector.extract_strided_slice %435 {offsets = [0, 32], sizes = [10, 32], strides = [1, 1]} : vector<10x64xf32> to vector<10x32xf32>
    %c1_199 = arith.constant 1 : index
    %c1_200 = arith.constant 1 : index
    %c0_201 = arith.constant 0 : index
    %c0_202 = arith.constant 0 : index
    %438 = vector.load %arg7[%c1_199, %c1_200, %c0_201, %c0_202] : memref<2x2x32x32xbf16, #tpu.memory_space<vmem>>, vector<1x1x32x32xbf16>
    %439 = vector.shape_cast %438 : vector<1x1x32x32xbf16> to vector<32x32xbf16>
    %c1_203 = arith.constant 1 : index
    %c1_204 = arith.constant 1 : index
    %c0_205 = arith.constant 0 : index
    %c0_206 = arith.constant 0 : index
    %440 = vector.load %arg8[%c1_203, %c1_204, %c0_205, %c0_206] : memref<2x2x1x32xf32, #tpu.memory_space<vmem>>, vector<1x1x1x32xf32>
    %441 = vector.shape_cast %440 : vector<1x1x1x32xf32> to vector<1x32xf32>
    %442 = vector.extract_strided_slice %429 {offsets = [0, 0], sizes = [8, 8], strides = [1, 1]} : vector<8x32xf32> to vector<8x8xf32>
    %443 = vector.extract_strided_slice %436 {offsets = [0, 0], sizes = [10, 8], strides = [1, 1]} : vector<10x32xf32> to vector<10x8xf32>
    %cst_207 = arith.constant dense<0.000000e+00> : vector<8x10xf32>
    %444 = tpu.matmul %442, %443, %cst_207 {dimension_numbers = #tpu.dot_dimension_numbers<[1], [1], [0], [0], [0, 0, 1, 0], [], []>} : vector<8x8xf32>, vector<10x8xf32>, vector<8x10xf32> -> vector<8x10xf32>
    %cst_208 = arith.constant 0.353553385 : f32
    %445 = vector.broadcast %cst_208 : f32 to vector<8x10xf32>
    %446 = arith.mulf %444, %445 : vector<8x10xf32>
    %447 = vector.broadcast %6 : vector<1x10xf32> to vector<8x10xf32>
    %448 = arith.addf %446, %447 : vector<8x10xf32>
    %cst_209 = arith.constant dense<0xFF800000> : vector<8xf32>
    %449 = vector.multi_reduction <maximumf>, %448, %cst_209 [1] : vector<8x10xf32> to vector<8xf32>
    %450 = vector.shape_cast %449 : vector<8xf32> to vector<8x1xf32>
    %451 = vector.broadcast %450 : vector<8x1xf32> to vector<8x10xf32>
    %452 = arith.subf %448, %451 : vector<8x10xf32>
    %453 = math.exp %452 : vector<8x10xf32>
    %cst_210 = arith.constant dense<0.000000e+00> : vector<8xf32>
    %454 = vector.multi_reduction <add>, %453, %cst_210 [1] : vector<8x10xf32> to vector<8xf32>
    %455 = vector.shape_cast %454 : vector<8xf32> to vector<8x1xf32>
    %456 = tpu.reciprocal %455 {approx = true} : vector<8x1xf32> -> vector<8x1xf32>
    %457 = vector.broadcast %456 : vector<8x1xf32> to vector<8x10xf32>
    %458 = arith.mulf %453, %457 : vector<8x10xf32>
    %459 = vector.extract_strided_slice %437 {offsets = [0, 0], sizes = [10, 8], strides = [1, 1]} : vector<10x32xf32> to vector<10x8xf32>
    %cst_211 = arith.constant dense<0.000000e+00> : vector<8x8xf32>
    %460 = tpu.matmul %458, %459, %cst_211 {dimension_numbers = #tpu.dot_dimension_numbers<[1], [0], [0], [1], [0, 0, 1, 1], [], []>} : vector<8x10xf32>, vector<10x8xf32>, vector<8x8xf32> -> vector<8x8xf32>
    %461 = vector.extract_strided_slice %429 {offsets = [0, 8], sizes = [8, 8], strides = [1, 1]} : vector<8x32xf32> to vector<8x8xf32>
    %462 = vector.extract_strided_slice %436 {offsets = [0, 8], sizes = [10, 8], strides = [1, 1]} : vector<10x32xf32> to vector<10x8xf32>
    %cst_212 = arith.constant dense<0.000000e+00> : vector<8x10xf32>
    %463 = tpu.matmul %461, %462, %cst_212 {dimension_numbers = #tpu.dot_dimension_numbers<[1], [1], [0], [0], [0, 0, 1, 0], [], []>} : vector<8x8xf32>, vector<10x8xf32>, vector<8x10xf32> -> vector<8x10xf32>
    %cst_213 = arith.constant 0.353553385 : f32
    %464 = vector.broadcast %cst_213 : f32 to vector<8x10xf32>
    %465 = arith.mulf %463, %464 : vector<8x10xf32>
    %466 = vector.broadcast %6 : vector<1x10xf32> to vector<8x10xf32>
    %467 = arith.addf %465, %466 : vector<8x10xf32>
    %cst_214 = arith.constant dense<0xFF800000> : vector<8xf32>
    %468 = vector.multi_reduction <maximumf>, %467, %cst_214 [1] : vector<8x10xf32> to vector<8xf32>
    %469 = vector.shape_cast %468 : vector<8xf32> to vector<8x1xf32>
    %470 = vector.broadcast %469 : vector<8x1xf32> to vector<8x10xf32>
    %471 = arith.subf %467, %470 : vector<8x10xf32>
    %472 = math.exp %471 : vector<8x10xf32>
    %cst_215 = arith.constant dense<0.000000e+00> : vector<8xf32>
    %473 = vector.multi_reduction <add>, %472, %cst_215 [1] : vector<8x10xf32> to vector<8xf32>
    %474 = vector.shape_cast %473 : vector<8xf32> to vector<8x1xf32>
    %475 = tpu.reciprocal %474 {approx = true} : vector<8x1xf32> -> vector<8x1xf32>
    %476 = vector.broadcast %475 : vector<8x1xf32> to vector<8x10xf32>
    %477 = arith.mulf %472, %476 : vector<8x10xf32>
    %478 = vector.extract_strided_slice %437 {offsets = [0, 8], sizes = [10, 8], strides = [1, 1]} : vector<10x32xf32> to vector<10x8xf32>
    %cst_216 = arith.constant dense<0.000000e+00> : vector<8x8xf32>
    %479 = tpu.matmul %477, %478, %cst_216 {dimension_numbers = #tpu.dot_dimension_numbers<[1], [0], [0], [1], [0, 0, 1, 1], [], []>} : vector<8x10xf32>, vector<10x8xf32>, vector<8x8xf32> -> vector<8x8xf32>
    %480 = vector.extract_strided_slice %429 {offsets = [0, 16], sizes = [8, 8], strides = [1, 1]} : vector<8x32xf32> to vector<8x8xf32>
    %481 = vector.extract_strided_slice %436 {offsets = [0, 16], sizes = [10, 8], strides = [1, 1]} : vector<10x32xf32> to vector<10x8xf32>
    %cst_217 = arith.constant dense<0.000000e+00> : vector<8x10xf32>
    %482 = tpu.matmul %480, %481, %cst_217 {dimension_numbers = #tpu.dot_dimension_numbers<[1], [1], [0], [0], [0, 0, 1, 0], [], []>} : vector<8x8xf32>, vector<10x8xf32>, vector<8x10xf32> -> vector<8x10xf32>
    %cst_218 = arith.constant 0.353553385 : f32
    %483 = vector.broadcast %cst_218 : f32 to vector<8x10xf32>
    %484 = arith.mulf %482, %483 : vector<8x10xf32>
    %485 = vector.broadcast %6 : vector<1x10xf32> to vector<8x10xf32>
    %486 = arith.addf %484, %485 : vector<8x10xf32>
    %cst_219 = arith.constant dense<0xFF800000> : vector<8xf32>
    %487 = vector.multi_reduction <maximumf>, %486, %cst_219 [1] : vector<8x10xf32> to vector<8xf32>
    %488 = vector.shape_cast %487 : vector<8xf32> to vector<8x1xf32>
    %489 = vector.broadcast %488 : vector<8x1xf32> to vector<8x10xf32>
    %490 = arith.subf %486, %489 : vector<8x10xf32>
    %491 = math.exp %490 : vector<8x10xf32>
    %cst_220 = arith.constant dense<0.000000e+00> : vector<8xf32>
    %492 = vector.multi_reduction <add>, %491, %cst_220 [1] : vector<8x10xf32> to vector<8xf32>
    %493 = vector.shape_cast %492 : vector<8xf32> to vector<8x1xf32>
    %494 = tpu.reciprocal %493 {approx = true} : vector<8x1xf32> -> vector<8x1xf32>
    %495 = vector.broadcast %494 : vector<8x1xf32> to vector<8x10xf32>
    %496 = arith.mulf %491, %495 : vector<8x10xf32>
    %497 = vector.extract_strided_slice %437 {offsets = [0, 16], sizes = [10, 8], strides = [1, 1]} : vector<10x32xf32> to vector<10x8xf32>
    %cst_221 = arith.constant dense<0.000000e+00> : vector<8x8xf32>
    %498 = tpu.matmul %496, %497, %cst_221 {dimension_numbers = #tpu.dot_dimension_numbers<[1], [0], [0], [1], [0, 0, 1, 1], [], []>} : vector<8x10xf32>, vector<10x8xf32>, vector<8x8xf32> -> vector<8x8xf32>
    %499 = vector.extract_strided_slice %429 {offsets = [0, 24], sizes = [8, 8], strides = [1, 1]} : vector<8x32xf32> to vector<8x8xf32>
    %500 = vector.extract_strided_slice %436 {offsets = [0, 24], sizes = [10, 8], strides = [1, 1]} : vector<10x32xf32> to vector<10x8xf32>
    %cst_222 = arith.constant dense<0.000000e+00> : vector<8x10xf32>
    %501 = tpu.matmul %499, %500, %cst_222 {dimension_numbers = #tpu.dot_dimension_numbers<[1], [1], [0], [0], [0, 0, 1, 0], [], []>} : vector<8x8xf32>, vector<10x8xf32>, vector<8x10xf32> -> vector<8x10xf32>
    %cst_223 = arith.constant 0.353553385 : f32
    %502 = vector.broadcast %cst_223 : f32 to vector<8x10xf32>
    %503 = arith.mulf %501, %502 : vector<8x10xf32>
    %504 = vector.broadcast %6 : vector<1x10xf32> to vector<8x10xf32>
    %505 = arith.addf %503, %504 : vector<8x10xf32>
    %cst_224 = arith.constant dense<0xFF800000> : vector<8xf32>
    %506 = vector.multi_reduction <maximumf>, %505, %cst_224 [1] : vector<8x10xf32> to vector<8xf32>
    %507 = vector.shape_cast %506 : vector<8xf32> to vector<8x1xf32>
    %508 = vector.broadcast %507 : vector<8x1xf32> to vector<8x10xf32>
    %509 = arith.subf %505, %508 : vector<8x10xf32>
    %510 = math.exp %509 : vector<8x10xf32>
    %cst_225 = arith.constant dense<0.000000e+00> : vector<8xf32>
    %511 = vector.multi_reduction <add>, %510, %cst_225 [1] : vector<8x10xf32> to vector<8xf32>
    %512 = vector.shape_cast %511 : vector<8xf32> to vector<8x1xf32>
    %513 = tpu.reciprocal %512 {approx = true} : vector<8x1xf32> -> vector<8x1xf32>
    %514 = vector.broadcast %513 : vector<8x1xf32> to vector<8x10xf32>
    %515 = arith.mulf %510, %514 : vector<8x10xf32>
    %516 = vector.extract_strided_slice %437 {offsets = [0, 24], sizes = [10, 8], strides = [1, 1]} : vector<10x32xf32> to vector<10x8xf32>
    %cst_226 = arith.constant dense<0.000000e+00> : vector<8x8xf32>
    %517 = tpu.matmul %515, %516, %cst_226 {dimension_numbers = #tpu.dot_dimension_numbers<[1], [0], [0], [1], [0, 0, 1, 1], [], []>} : vector<8x10xf32>, vector<10x8xf32>, vector<8x8xf32> -> vector<8x8xf32>
    %518 = tpu.concatenate %460, %479, %498, %517 in 1 : vector<8x8xf32>, vector<8x8xf32>, vector<8x8xf32>, vector<8x8xf32> -> vector<8x32xf32>
    %519 = arith.truncf %518 : vector<8x32xf32> to vector<8x32xbf16>
    %cst_227 = arith.constant dense<0.000000e+00> : vector<8x32xf32>
    %520 = tpu.matmul %519, %439, %cst_227 {dimension_numbers = #tpu.dot_dimension_numbers<[1], [0], [0], [1], [0, 0, 1, 1], [], []>} : vector<8x32xbf16>, vector<32x32xbf16>, vector<8x32xf32> -> vector<8x32xf32>
    %521 = vector.broadcast %441 : vector<1x32xf32> to vector<8x32xf32>
    %522 = arith.addf %520, %521 : vector<8x32xf32>
    %523 = arith.addf %419, %522 : vector<8x32xf32>
    %c1_228 = arith.constant 1 : index
    %c1_229 = arith.constant 1 : index
    %c0_230 = arith.constant 0 : index
    %c0_231 = arith.constant 0 : index
    %524 = vector.load %arg13[%c1_228, %c1_229, %c0_230, %c0_231] : memref<2x3x1x32xf32, #tpu.memory_space<vmem>>, vector<1x1x1x32xf32>
    %525 = vector.shape_cast %524 : vector<1x1x1x32xf32> to vector<1x32xf32>
    %c1_232 = arith.constant 1 : index
    %c1_233 = arith.constant 1 : index
    %c0_234 = arith.constant 0 : index
    %c0_235 = arith.constant 0 : index
    %526 = vector.load %arg14[%c1_232, %c1_233, %c0_234, %c0_235] : memref<2x3x1x32xf32, #tpu.memory_space<vmem>>, vector<1x1x1x32xf32>
    %527 = vector.shape_cast %526 : vector<1x1x1x32xf32> to vector<1x32xf32>
    %cst_236 = arith.constant dense<0.000000e+00> : vector<8xf32>
    %528 = vector.multi_reduction <add>, %523, %cst_236 [1] : vector<8x32xf32> to vector<8xf32>
    %529 = vector.shape_cast %528 : vector<8xf32> to vector<8x1xf32>
    %cst_237 = arith.constant 3.200000e+01 : f32
    %530 = vector.broadcast %cst_237 : f32 to vector<8x1xf32>
    %531 = arith.divf %529, %530 : vector<8x1xf32>
    %532 = vector.broadcast %531 : vector<8x1xf32> to vector<8x32xf32>
    %533 = arith.subf %523, %532 : vector<8x32xf32>
    %534 = arith.mulf %533, %533 : vector<8x32xf32>
    %cst_238 = arith.constant dense<0.000000e+00> : vector<8xf32>
    %535 = vector.multi_reduction <add>, %534, %cst_238 [1] : vector<8x32xf32> to vector<8xf32>
    %536 = vector.shape_cast %535 : vector<8xf32> to vector<8x1xf32>
    %cst_239 = arith.constant 3.200000e+01 : f32
    %537 = vector.broadcast %cst_239 : f32 to vector<8x1xf32>
    %538 = arith.divf %536, %537 : vector<8x1xf32>
    %539 = vector.broadcast %531 : vector<8x1xf32> to vector<8x32xf32>
    %540 = arith.subf %523, %539 : vector<8x32xf32>
    %cst_240 = arith.constant 9.99999974E-6 : f32
    %541 = vector.broadcast %cst_240 : f32 to vector<8x1xf32>
    %542 = arith.addf %538, %541 : vector<8x1xf32>
    %543 = math.rsqrt %542 : vector<8x1xf32>
    %544 = vector.broadcast %543 : vector<8x1xf32> to vector<8x32xf32>
    %545 = arith.mulf %540, %544 : vector<8x32xf32>
    %546 = vector.broadcast %525 : vector<1x32xf32> to vector<8x32xf32>
    %547 = arith.mulf %545, %546 : vector<8x32xf32>
    %548 = vector.broadcast %527 : vector<1x32xf32> to vector<8x32xf32>
    %549 = arith.addf %547, %548 : vector<8x32xf32>
    %c1_241 = arith.constant 1 : index
    %c0_242 = arith.constant 0 : index
    %c0_243 = arith.constant 0 : index
    %550 = vector.load %arg9[%c1_241, %c0_242, %c0_243] : memref<2x32x64xbf16, #tpu.memory_space<vmem>>, vector<1x32x64xbf16>
    %551 = vector.shape_cast %550 : vector<1x32x64xbf16> to vector<32x64xbf16>
    %552 = arith.truncf %549 : vector<8x32xf32> to vector<8x32xbf16>
    %cst_244 = arith.constant dense<0.000000e+00> : vector<8x64xf32>
    %553 = tpu.matmul %552, %551, %cst_244 {dimension_numbers = #tpu.dot_dimension_numbers<[1], [0], [0], [1], [0, 0, 1, 1], [], []>} : vector<8x32xbf16>, vector<32x64xbf16>, vector<8x64xf32> -> vector<8x64xf32>
    %c1_245 = arith.constant 1 : index
    %c0_246 = arith.constant 0 : index
    %c0_247 = arith.constant 0 : index
    %554 = vector.load %arg10[%c1_245, %c0_246, %c0_247] : memref<2x1x64xf32, #tpu.memory_space<vmem>>, vector<1x1x64xf32>
    %555 = vector.shape_cast %554 : vector<1x1x64xf32> to vector<1x64xf32>
    %556 = vector.broadcast %555 : vector<1x64xf32> to vector<8x64xf32>
    %557 = arith.addf %553, %556 : vector<8x64xf32>
    %cst_248 = arith.constant 0.000000e+00 : f32
    %558 = vector.broadcast %cst_248 : f32 to vector<8x64xf32>
    %559 = arith.maximumf %557, %558 : vector<8x64xf32>
    %c1_249 = arith.constant 1 : index
    %c0_250 = arith.constant 0 : index
    %c0_251 = arith.constant 0 : index
    %560 = vector.load %arg11[%c1_249, %c0_250, %c0_251] : memref<2x64x32xbf16, #tpu.memory_space<vmem>>, vector<1x64x32xbf16>
    %561 = vector.shape_cast %560 : vector<1x64x32xbf16> to vector<64x32xbf16>
    %562 = arith.truncf %559 : vector<8x64xf32> to vector<8x64xbf16>
    %cst_252 = arith.constant dense<0.000000e+00> : vector<8x32xf32>
    %563 = tpu.matmul %562, %561, %cst_252 {dimension_numbers = #tpu.dot_dimension_numbers<[1], [0], [0], [1], [0, 0, 1, 1], [], []>} : vector<8x64xbf16>, vector<64x32xbf16>, vector<8x32xf32> -> vector<8x32xf32>
    %c1_253 = arith.constant 1 : index
    %c0_254 = arith.constant 0 : index
    %c0_255 = arith.constant 0 : index
    %564 = vector.load %arg12[%c1_253, %c0_254, %c0_255] : memref<2x1x32xf32, #tpu.memory_space<vmem>>, vector<1x1x32xf32>
    %565 = vector.shape_cast %564 : vector<1x1x32xf32> to vector<1x32xf32>
    %566 = vector.broadcast %565 : vector<1x32xf32> to vector<8x32xf32>
    %567 = arith.addf %563, %566 : vector<8x32xf32>
    %568 = arith.addf %549, %567 : vector<8x32xf32>
    %c1_256 = arith.constant 1 : index
    %c2_257 = arith.constant 2 : index
    %c0_258 = arith.constant 0 : index
    %c0_259 = arith.constant 0 : index
    %569 = vector.load %arg13[%c1_256, %c2_257, %c0_258, %c0_259] : memref<2x3x1x32xf32, #tpu.memory_space<vmem>>, vector<1x1x1x32xf32>
    %570 = vector.shape_cast %569 : vector<1x1x1x32xf32> to vector<1x32xf32>
    %c1_260 = arith.constant 1 : index
    %c2_261 = arith.constant 2 : index
    %c0_262 = arith.constant 0 : index
    %c0_263 = arith.constant 0 : index
    %571 = vector.load %arg14[%c1_260, %c2_261, %c0_262, %c0_263] : memref<2x3x1x32xf32, #tpu.memory_space<vmem>>, vector<1x1x1x32xf32>
    %572 = vector.shape_cast %571 : vector<1x1x1x32xf32> to vector<1x32xf32>
    %cst_264 = arith.constant dense<0.000000e+00> : vector<8xf32>
    %573 = vector.multi_reduction <add>, %568, %cst_264 [1] : vector<8x32xf32> to vector<8xf32>
    %574 = vector.shape_cast %573 : vector<8xf32> to vector<8x1xf32>
    %cst_265 = arith.constant 3.200000e+01 : f32
    %575 = vector.broadcast %cst_265 : f32 to vector<8x1xf32>
    %576 = arith.divf %574, %575 : vector<8x1xf32>
    %577 = vector.broadcast %576 : vector<8x1xf32> to vector<8x32xf32>
    %578 = arith.subf %568, %577 : vector<8x32xf32>
    %579 = arith.mulf %578, %578 : vector<8x32xf32>
    %cst_266 = arith.constant dense<0.000000e+00> : vector<8xf32>
    %580 = vector.multi_reduction <add>, %579, %cst_266 [1] : vector<8x32xf32> to vector<8xf32>
    %581 = vector.shape_cast %580 : vector<8xf32> to vector<8x1xf32>
    %cst_267 = arith.constant 3.200000e+01 : f32
    %582 = vector.broadcast %cst_267 : f32 to vector<8x1xf32>
    %583 = arith.divf %581, %582 : vector<8x1xf32>
    %584 = vector.broadcast %576 : vector<8x1xf32> to vector<8x32xf32>
    %585 = arith.subf %568, %584 : vector<8x32xf32>
    %cst_268 = arith.constant 9.99999974E-6 : f32
    %586 = vector.broadcast %cst_268 : f32 to vector<8x1xf32>
    %587 = arith.addf %583, %586 : vector<8x1xf32>
    %588 = math.rsqrt %587 : vector<8x1xf32>
    %589 = vector.broadcast %588 : vector<8x1xf32> to vector<8x32xf32>
    %590 = arith.mulf %585, %589 : vector<8x32xf32>
    %591 = vector.broadcast %570 : vector<1x32xf32> to vector<8x32xf32>
    %592 = arith.mulf %590, %591 : vector<8x32xf32>
    %593 = vector.broadcast %572 : vector<1x32xf32> to vector<8x32xf32>
    %594 = arith.addf %592, %593 : vector<8x32xf32>
    %c0_269 = arith.constant 0 : index
    %c0_270 = arith.constant 0 : index
    %595 = vector.load %arg15[%c0_269, %c0_270] : memref<32x128xbf16, #tpu.memory_space<vmem>>, vector<32x128xbf16>
    %596 = arith.truncf %594 : vector<8x32xf32> to vector<8x32xbf16>
    %cst_271 = arith.constant dense<0.000000e+00> : vector<8x128xf32>
    %597 = tpu.matmul %596, %595, %cst_271 {dimension_numbers = #tpu.dot_dimension_numbers<[1], [0], [0], [1], [0, 0, 1, 1], [], []>} : vector<8x32xbf16>, vector<32x128xbf16>, vector<8x128xf32> -> vector<8x128xf32>
    %c0_272 = arith.constant 0 : index
    %c0_273 = arith.constant 0 : index
    %598 = vector.load %arg16[%c0_272, %c0_273] : memref<1x128xf32, #tpu.memory_space<vmem>>, vector<1x128xf32>
    %599 = vector.broadcast %598 : vector<1x128xf32> to vector<8x128xf32>
    %600 = arith.addf %597, %599 : vector<8x128xf32>
    %c0_274 = arith.constant 0 : index
    %c0_275 = arith.constant 0 : index
    %601 = vector.load %arg17[%c0_274, %c0_275] : memref<8x128xf32, #tpu.memory_space<vmem>>, vector<8x128xf32>
    tpu.vector_store %arg17[%c0_274, %c0_275], %600 {strides = array<i32>} : memref<8x128xf32, #tpu.memory_space<vmem>>, vector<8x128xf32>,
    return
  }
  func.func @transform_0(%arg0: i32) -> (i32, i32, i32) {
    %c0_i32 = arith.constant 0 : i32
    %c0_i32_0 = arith.constant 0 : i32
    %c0_i32_1 = arith.constant 0 : i32
    return %arg0, %c0_i32, %c0_i32_0 : i32, i32, i32
  }
  func.func @transform_1(%arg0: i32) -> (i32, i32, i32) {
    %c0_i32 = arith.constant 0 : i32
    %c0_i32_0 = arith.constant 0 : i32
    %c0_i32_1 = arith.constant 0 : i32
    return %arg0, %c0_i32, %c0_i32_0 : i32, i32, i32
  }
  func.func @transform_2(%arg0: i32) -> (i32, i32) {
    %c0_i32 = arith.constant 0 : i32
    %c0_i32_0 = arith.constant 0 : i32
    %c0_i32_1 = arith.constant 0 : i32
    return %c0_i32, %c0_i32_0 : i32, i32
  }
  func.func @transform_3(%arg0: i32) -> (i32, i32, i32) {
    %c0_i32 = arith.constant 0 : i32
    %c0_i32_0 = arith.constant 0 : i32
    %c0_i32_1 = arith.constant 0 : i32
    return %arg0, %c0_i32, %c0_i32_0 : i32, i32, i32
  }
  func.func @transform_4(%arg0: i32) -> (i32, i32, i32, i32) {
    %c0_i32 = arith.constant 0 : i32
    %c0_i32_0 = arith.constant 0 : i32
    %c0_i32_1 = arith.constant 0 : i32
    %c0_i32_2 = arith.constant 0 : i32
    %c0_i32_3 = arith.constant 0 : i32
    return %c0_i32, %c0_i32_0, %c0_i32_1, %c0_i32_2 : i32, i32, i32, i32
  }
  func.func @transform_5(%arg0: i32) -> (i32, i32, i32, i32) {
    %c0_i32 = arith.constant 0 : i32
    %c0_i32_0 = arith.constant 0 : i32
    %c0_i32_1 = arith.constant 0 : i32
    %c0_i32_2 = arith.constant 0 : i32
    %c0_i32_3 = arith.constant 0 : i32
    return %c0_i32, %c0_i32_0, %c0_i32_1, %c0_i32_2 : i32, i32, i32, i32
  }
  func.func @transform_6(%arg0: i32) -> (i32, i32, i32, i32) {
    %c0_i32 = arith.constant 0 : i32
    %c0_i32_0 = arith.constant 0 : i32
    %c0_i32_1 = arith.constant 0 : i32
    %c0_i32_2 = arith.constant 0 : i32
    %c0_i32_3 = arith.constant 0 : i32
    return %c0_i32, %c0_i32_0, %c0_i32_1, %c0_i32_2 : i32, i32, i32, i32
  }
  func.func @transform_7(%arg0: i32) -> (i32, i32, i32, i32) {
    %c0_i32 = arith.constant 0 : i32
    %c0_i32_0 = arith.constant 0 : i32
    %c0_i32_1 = arith.constant 0 : i32
    %c0_i32_2 = arith.constant 0 : i32
    %c0_i32_3 = arith.constant 0 : i32
    return %c0_i32, %c0_i32_0, %c0_i32_1, %c0_i32_2 : i32, i32, i32, i32
  }
  func.func @transform_8(%arg0: i32) -> (i32, i32, i32) {
    %c0_i32 = arith.constant 0 : i32
    %c0_i32_0 = arith.constant 0 : i32
    %c0_i32_1 = arith.constant 0 : i32
    %c0_i32_2 = arith.constant 0 : i32
    return %c0_i32, %c0_i32_0, %c0_i32_1 : i32, i32, i32
  }
  func.func @transform_9(%arg0: i32) -> (i32, i32, i32) {
    %c0_i32 = arith.constant 0 : i32
    %c0_i32_0 = arith.constant 0 : i32
    %c0_i32_1 = arith.constant 0 : i32
    %c0_i32_2 = arith.constant 0 : i32
    return %c0_i32, %c0_i32_0, %c0_i32_1 : i32, i32, i32
  }
  func.func @transform_10(%arg0: i32) -> (i32, i32, i32) {
    %c0_i32 = arith.constant 0 : i32
    %c0_i32_0 = arith.constant 0 : i32
    %c0_i32_1 = arith.constant 0 : i32
    %c0_i32_2 = arith.constant 0 : i32
    return %c0_i32, %c0_i32_0, %c0_i32_1 : i32, i32, i32
  }
  func.func @transform_11(%arg0: i32) -> (i32, i32, i32) {
    %c0_i32 = arith.constant 0 : i32
    %c0_i32_0 = arith.constant 0 : i32
    %c0_i32_1 = arith.constant 0 : i32
    %c0_i32_2 = arith.constant 0 : i32
    return %c0_i32, %c0_i32_0, %c0_i32_1 : i32, i32, i32
  }
  func.func @transform_12(%arg0: i32) -> (i32, i32, i32, i32) {
    %c0_i32 = arith.constant 0 : i32
    %c0_i32_0 = arith.constant 0 : i32
    %c0_i32_1 = arith.constant 0 : i32
    %c0_i32_2 = arith.constant 0 : i32
    %c0_i32_3 = arith.constant 0 : i32
    return %c0_i32, %c0_i32_0, %c0_i32_1, %c0_i32_2 : i32, i32, i32, i32
  }
  func.func @transform_13(%arg0: i32) -> (i32, i32, i32, i32) {
    %c0_i32 = arith.constant 0 : i32
    %c0_i32_0 = arith.constant 0 : i32
    %c0_i32_1 = arith.constant 0 : i32
    %c0_i32_2 = arith.constant 0 : i32
    %c0_i32_3 = arith.constant 0 : i32
    return %c0_i32, %c0_i32_0, %c0_i32_1, %c0_i32_2 : i32, i32, i32, i32
  }
  func.func @transform_14(%arg0: i32) -> (i32, i32) {
    %c0_i32 = arith.constant 0 : i32
    %c0_i32_0 = arith.constant 0 : i32
    %c0_i32_1 = arith.constant 0 : i32
    return %c0_i32, %c0_i32_0 : i32, i32
  }
  func.func @transform_15(%arg0: i32) -> (i32, i32) {
    %c0_i32 = arith.constant 0 : i32
    %c0_i32_0 = arith.constant 0 : i32
    %c0_i32_1 = arith.constant 0 : i32
    return %c0_i32, %c0_i32_0 : i32, i32
  }
  func.func @transform_16(%arg0: i32) -> (i32, i32) {
    %c0_i32 = arith.constant 0 : i32
    %c0_i32_0 = arith.constant 0 : i32
    return %arg0, %c0_i32 : i32, i32
  }
}

</mosaic_0001>

<llo_original>
// kernel: transformer_decoder_forward.1
$region0: #{transformer_decoder_forward.1}
  #allocation0 [shape = 'u32[]', space=smem, size = 0x4, offset = 0x4, fixed_abs, tag = 'smem constant byte address 0x4 - core index']
  #allocation1 [shape = 'u32[144,128]{1,0:T(1,128)}', space=vmem, size = 0x12000, scoped, tag = 'internal scratch']
  %s0 = inlined_call_operand.vmem [shape: f32[2,8,32], index: 0, kind: input, shape index: {}]
  %s1 = inlined_call_operand.vmem [shape: f32[2,10,32], index: 1, kind: input, shape index: {}]
  %s2 = inlined_call_operand.vmem [shape: f32[8,8], index: 2, kind: input, shape index: {}]
  %s3 = inlined_call_operand.vmem [shape: f32[2,1,10], index: 3, kind: input, shape index: {}]
  %s4 = inlined_call_operand.vmem [shape: bf16[2,2,32,96], index: 4, kind: input, shape index: {}]
  %s5 = inlined_call_operand.vmem [shape: f32[2,2,1,96], index: 5, kind: input, shape index: {}]
  %s6 = inlined_call_operand.vmem [shape: bf16[2,2,32,32], index: 6, kind: input, shape index: {}]
  %s7 = inlined_call_operand.vmem [shape: f32[2,2,1,32], index: 7, kind: input, shape index: {}]
  %s8 = inlined_call_operand.vmem [shape: bf16[2,32,64], index: 8, kind: input, shape index: {}]
  %s9 = inlined_call_operand.vmem [shape: f32[2,1,64], index: 9, kind: input, shape index: {}]
  %s10 = inlined_call_operand.vmem [shape: bf16[2,64,32], index: 10, kind: input, shape index: {}]
  %s11 = inlined_call_operand.vmem [shape: f32[2,1,32], index: 11, kind: input, shape index: {}]
  %s12 = inlined_call_operand.vmem [shape: f32[2,3,1,32], index: 12, kind: input, shape index: {}]
  %s13 = inlined_call_operand.vmem [shape: f32[2,3,1,32], index: 13, kind: input, shape index: {}]
  %s14 = inlined_call_operand.vmem [shape: bf16[32,128], index: 14, kind: input, shape index: {}]
  %s15 = inlined_call_operand.vmem [shape: f32[1,128], index: 15, kind: input, shape index: {}]
  %s16 = inlined_call_operand.hbm [shape: f32[16,128], index: 16, kind: output, shape index: {}]
  %s17 = sld [smem:[#allocation0]]
  $region97: #{transformer_decoder_forward.1} parent=0
    _
  %s19 = ssub.s32 1, %s17
  %s20 = scalar_select 0, %s19, %s17
  $region1: #{transformer_decoder_forward.1} parent=0
    #allocation2 [shape = 'u8[8192]{0}', space=vmem, size = 0x2000, scoped, tag = 'output window, operand 0']
    #allocation3 [shape = 's32[2]{0}', space=sflag, size = 0x8, scoped, tag = 'scoped memory for transformer_decoder_forward.1']
    %21 = vsyncpa [#allocation3], 0
    %s22 = scalar_lea.sflag [#allocation3], 1
    %23 = vsyncpa %s22, 0
    loop: start=0, step=1, limit=4
    $region2: #{transformer_decoder_forward.1} parent=1 // loop_pre_header
      _
    $region3: #{transformer_decoder_forward.1} parent=1 // loop_header
      %s25 = sphi 0, %s29
      %p26 = scmp.ge.s32.totalorder %s25, 4
      %s35 = sphi 0, %s37
      %s38 = sphi 0, %s35
      %s39 = sphi 0, %s38
      %s55 = sphi 0, %s39
      %s61 = sphi 0, %s63
      %s64 = sphi 0, %s61
      %s65 = sphi 0, %s64
      %s81 = sphi 0, %s65
      %s85 = sphi 0, %s85
      %s87 = sphi 0, %s85
      %s88 = sphi 0, %s87
      %s102 = sphi 0, %s88
      %s108 = sphi 0, %s110
      %s111 = sphi 0, %s108
      %s112 = sphi 0, %s111
      %s128 = sphi 0, %s112
      %s132 = sphi 0, %s132
      %s134 = sphi 0, %s132
      %s135 = sphi 0, %s134
      %s149 = sphi 0, %s135
      %s153 = sphi 0, %s153
      %s155 = sphi 0, %s153
      %s156 = sphi 0, %s155
      %s170 = sphi 0, %s156
      %s174 = sphi 0, %s174
      %s176 = sphi 0, %s174
      %s177 = sphi 0, %s176
      %s191 = sphi 0, %s177
      %s195 = sphi 0, %s195
      %s197 = sphi 0, %s195
      %s198 = sphi 0, %s197
      %s212 = sphi 0, %s198
      %s216 = sphi 0, %s216
      %s218 = sphi 0, %s216
      %s219 = sphi 0, %s218
      %s233 = sphi 0, %s219
      %s237 = sphi 0, %s237
      %s239 = sphi 0, %s237
      %s240 = sphi 0, %s239
      %s254 = sphi 0, %s240
      %s258 = sphi 0, %s258
      %s260 = sphi 0, %s258
      %s261 = sphi 0, %s260
      %s275 = sphi 0, %s261
      %s279 = sphi 0, %s279
      %s281 = sphi 0, %s279
      %s282 = sphi 0, %s281
      %s296 = sphi 0, %s282
      %s300 = sphi 0, %s300
      %s302 = sphi 0, %s300
      %s303 = sphi 0, %s302
      %s317 = sphi 0, %s303
      %s321 = sphi 0, %s321
      %s323 = sphi 0, %s321
      %s324 = sphi 0, %s323
      %s338 = sphi 0, %s324
      %s342 = sphi 0, %s342
      %s344 = sphi 0, %s342
      %s345 = sphi 0, %s344
      %s359 = sphi 0, %s345
      %s363 = sphi 0, %s363
      %s365 = sphi 0, %s363
      %s366 = sphi 0, %s365
      %s380 = sphi 0, %s366
      %s386 = sphi 0, %s388
      %s389 = sphi 0, %s386
      %s390 = sphi 0, %s389
      %s406 = sphi 0, %s390
    $region4: #{transformer_decoder_forward.1} parent=1 // loop_header_branch
      %28 = sbr.rel (%p26) target = $region8
    $region5: #{transformer_decoder_forward.1} parent=1 // loop_body
      %s30 = ssub.s32 %s25, 1
      %s31 = ssub.s32 %s25, 2
      %s32 = sadd.s32 %s25, 1
      %s33 = ssub.s32 %s25, %s32
      %p34 = scmp.eq.s32.totalorder %s33, 0
      %s36 = sadd.s32 %s35, 1
      %s37 = scalar_select %p34, %s35, %s36
      %p40 = pneg %p34
      %p41 = scmp.eq.s32.totalorder %s25, 1
      %p42 = por %p40, %p41
      %p43 = scmp.ne.s32.totalorder %s35, %s38
      %p44 = scmp.eq.s32.totalorder %s25, 0
      %p45 = por %p43, %p44
      %p46 = scmp.ne.s32.totalorder %s35, %s38
      %p47 = scmp.eq.s32.totalorder %s30, 1
      %p48 = por %p46, %p47
      %p49 = scmp.ne.s32.totalorder %s38, %s39
      %p50 = scmp.eq.s32.totalorder %s30, 0
      %p51 = por %p49, %p50
      %p52 = scmp.ne.s32.totalorder %s38, %s39
      %p53 = scmp.eq.s32.totalorder %s31, 1
      %p54 = por %p52, %p53
      %p56 = scmp.ne.s32.totalorder %s39, %s55
      %p57 = scmp.eq.s32.totalorder %s31, 0
      %p58 = por %p56, %p57
      %s59 = ssub.s32 %s25, %s32
      %p60 = scmp.eq.s32.totalorder %s59, 0
      %s62 = sadd.s32 %s61, 1
      %s63 = scalar_select %p60, %s61, %s62
      %p66 = pneg %p60
      %p67 = scmp.eq.s32.totalorder %s25, 1
      %p68 = por %p66, %p67
      %p69 = scmp.ne.s32.totalorder %s61, %s64
      %p70 = scmp.eq.s32.totalorder %s25, 0
      %p71 = por %p69, %p70
      %p72 = scmp.ne.s32.totalorder %s61, %s64
      %p73 = scmp.eq.s32.totalorder %s30, 1
      %p74 = por %p72, %p73
      %p75 = scmp.ne.s32.totalorder %s64, %s65
      %p76 = scmp.eq.s32.totalorder %s30, 0
      %p77 = por %p75, %p76
      %p78 = scmp.ne.s32.totalorder %s64, %s65
      %p79 = scmp.eq.s32.totalorder %s31, 1
      %p80 = por %p78, %p79
      %p82 = scmp.ne.s32.totalorder %s65, %s81
      %p83 = scmp.eq.s32.totalorder %s31, 0
      %p84 = por %p82, %p83
      %s86 = sadd.s32 %s85, 1
      %p89 = scmp.eq.s32.totalorder %s25, 1
      %p90 = scmp.ne.s32.totalorder %s85, %s87
      %p91 = scmp.eq.s32.totalorder %s25, 0
      %p92 = por %p90, %p91
      %p93 = scmp.ne.s32.totalorder %s85, %s87
      %p94 = scmp.eq.s32.totalorder %s30, 1
      %p95 = por %p93, %p94
      %p96 = scmp.ne.s32.totalorder %s87, %s88
      %p97 = scmp.eq.s32.totalorder %s30, 0
      %p98 = por %p96, %p97
      %p99 = scmp.ne.s32.totalorder %s87, %s88
      %p100 = scmp.eq.s32.totalorder %s31, 1
      %p101 = por %p99, %p100
      %p103 = scmp.ne.s32.totalorder %s88, %s102
      %p104 = scmp.eq.s32.totalorder %s31, 0
      %p105 = por %p103, %p104
      %s106 = ssub.s32 %s25, %s32
      %p107 = scmp.eq.s32.totalorder %s106, 0
      %s109 = sadd.s32 %s108, 1
      %s110 = scalar_select %p107, %s108, %s109
      %p113 = pneg %p107
      %p114 = scmp.eq.s32.totalorder %s25, 1
      %p115 = por %p113, %p114
      %p116 = scmp.ne.s32.totalorder %s108, %s111
      %p117 = scmp.eq.s32.totalorder %s25, 0
      %p118 = por %p116, %p117
      %p119 = scmp.ne.s32.totalorder %s108, %s111
      %p120 = scmp.eq.s32.totalorder %s30, 1
      %p121 = por %p119, %p120
      %p122 = scmp.ne.s32.totalorder %s111, %s112
      %p123 = scmp.eq.s32.totalorder %s30, 0
      %p124 = por %p122, %p123
      %p125 = scmp.ne.s32.totalorder %s111, %s112
      %p126 = scmp.eq.s32.totalorder %s31, 1
      %p127 = por %p125, %p126
      %p129 = scmp.ne.s32.totalorder %s112, %s128
      %p130 = scmp.eq.s32.totalorder %s31, 0
      %p131 = por %p129, %p130
      %s133 = sadd.s32 %s132, 1
      %p136 = scmp.eq.s32.totalorder %s25, 1
      %p137 = scmp.ne.s32.totalorder %s132, %s134
      %p138 = scmp.eq.s32.totalorder %s25, 0
      %p139 = por %p137, %p138
      %p140 = scmp.ne.s32.totalorder %s132, %s134
      %p141 = scmp.eq.s32.totalorder %s30, 1
      %p142 = por %p140, %p141
      %p143 = scmp.ne.s32.totalorder %s134, %s135
      %p144 = scmp.eq.s32.totalorder %s30, 0
      %p145 = por %p143, %p144
      %p146 = scmp.ne.s32.totalorder %s134, %s135
      %p147 = scmp.eq.s32.totalorder %s31, 1
      %p148 = por %p146, %p147
      %p150 = scmp.ne.s32.totalorder %s135, %s149
      %p151 = scmp.eq.s32.totalorder %s31, 0
      %p152 = por %p150, %p151
      %s154 = sadd.s32 %s153, 1
      %p157 = scmp.eq.s32.totalorder %s25, 1
      %p158 = scmp.ne.s32.totalorder %s153, %s155
      %p159 = scmp.eq.s32.totalorder %s25, 0
      %p160 = por %p158, %p159
      %p161 = scmp.ne.s32.totalorder %s153, %s155
      %p162 = scmp.eq.s32.totalorder %s30, 1
      %p163 = por %p161, %p162
      %p164 = scmp.ne.s32.totalorder %s155, %s156
      %p165 = scmp.eq.s32.totalorder %s30, 0
      %p166 = por %p164, %p165
      %p167 = scmp.ne.s32.totalorder %s155, %s156
      %p168 = scmp.eq.s32.totalorder %s31, 1
      %p169 = por %p167, %p168
      %p171 = scmp.ne.s32.totalorder %s156, %s170
      %p172 = scmp.eq.s32.totalorder %s31, 0
      %p173 = por %p171, %p172
      %s175 = sadd.s32 %s174, 1
      %p178 = scmp.eq.s32.totalorder %s25, 1
      %p179 = scmp.ne.s32.totalorder %s174, %s176
      %p180 = scmp.eq.s32.totalorder %s25, 0
      %p181 = por %p179, %p180
      %p182 = scmp.ne.s32.totalorder %s174, %s176
      %p183 = scmp.eq.s32.totalorder %s30, 1
      %p184 = por %p182, %p183
      %p185 = scmp.ne.s32.totalorder %s176, %s177
      %p186 = scmp.eq.s32.totalorder %s30, 0
      %p187 = por %p185, %p186
      %p188 = scmp.ne.s32.totalorder %s176, %s177
      %p189 = scmp.eq.s32.totalorder %s31, 1
      %p190 = por %p188, %p189
      %p192 = scmp.ne.s32.totalorder %s177, %s191
      %p193 = scmp.eq.s32.totalorder %s31, 0
      %p194 = por %p192, %p193
      %s196 = sadd.s32 %s195, 1
      %p199 = scmp.eq.s32.totalorder %s25, 1
      %p200 = scmp.ne.s32.totalorder %s195, %s197
      %p201 = scmp.eq.s32.totalorder %s25, 0
      %p202 = por %p200, %p201
      %p203 = scmp.ne.s32.totalorder %s195, %s197
      %p204 = scmp.eq.s32.totalorder %s30, 1
      %p205 = por %p203, %p204
      %p206 = scmp.ne.s32.totalorder %s197, %s198
      %p207 = scmp.eq.s32.totalorder %s30, 0
      %p208 = por %p206, %p207
      %p209 = scmp.ne.s32.totalorder %s197, %s198
      %p210 = scmp.eq.s32.totalorder %s31, 1
      %p211 = por %p209, %p210
      %p213 = scmp.ne.s32.totalorder %s198, %s212
      %p214 = scmp.eq.s32.totalorder %s31, 0
      %p215 = por %p213, %p214
      %s217 = sadd.s32 %s216, 1
      %p220 = scmp.eq.s32.totalorder %s25, 1
      %p221 = scmp.ne.s32.totalorder %s216, %s218
      %p222 = scmp.eq.s32.totalorder %s25, 0
      %p223 = por %p221, %p222
      %p224 = scmp.ne.s32.totalorder %s216, %s218
      %p225 = scmp.eq.s32.totalorder %s30, 1
      %p226 = por %p224, %p225
      %p227 = scmp.ne.s32.totalorder %s218, %s219
      %p228 = scmp.eq.s32.totalorder %s30, 0
      %p229 = por %p227, %p228
      %p230 = scmp.ne.s32.totalorder %s218, %s219
      %p231 = scmp.eq.s32.totalorder %s31, 1
      %p232 = por %p230, %p231
      %p234 = scmp.ne.s32.totalorder %s219, %s233
      %p235 = scmp.eq.s32.totalorder %s31, 0
      %p236 = por %p234, %p235
      %s238 = sadd.s32 %s237, 1
      %p241 = scmp.eq.s32.totalorder %s25, 1
      %p242 = scmp.ne.s32.totalorder %s237, %s239
      %p243 = scmp.eq.s32.totalorder %s25, 0
      %p244 = por %p242, %p243
      %p245 = scmp.ne.s32.totalorder %s237, %s239
      %p246 = scmp.eq.s32.totalorder %s30, 1
      %p247 = por %p245, %p246
      %p248 = scmp.ne.s32.totalorder %s239, %s240
      %p249 = scmp.eq.s32.totalorder %s30, 0
      %p250 = por %p248, %p249
      %p251 = scmp.ne.s32.totalorder %s239, %s240
      %p252 = scmp.eq.s32.totalorder %s31, 1
      %p253 = por %p251, %p252
      %p255 = scmp.ne.s32.totalorder %s240, %s254
      %p256 = scmp.eq.s32.totalorder %s31, 0
      %p257 = por %p255, %p256
      %s259 = sadd.s32 %s258, 1
      %p262 = scmp.eq.s32.totalorder %s25, 1
      %p263 = scmp.ne.s32.totalorder %s258, %s260
      %p264 = scmp.eq.s32.totalorder %s25, 0
      %p265 = por %p263, %p264
      %p266 = scmp.ne.s32.totalorder %s258, %s260
      %p267 = scmp.eq.s32.totalorder %s30, 1
      %p268 = por %p266, %p267
      %p269 = scmp.ne.s32.totalorder %s260, %s261
      %p270 = scmp.eq.s32.totalorder %s30, 0
      %p271 = por %p269, %p270
      %p272 = scmp.ne.s32.totalorder %s260, %s261
      %p273 = scmp.eq.s32.totalorder %s31, 1
      %p274 = por %p272, %p273
      %p276 = scmp.ne.s32.totalorder %s261, %s275
      %p277 = scmp.eq.s32.totalorder %s31, 0
      %p278 = por %p276, %p277
      %s280 = sadd.s32 %s279, 1
      %p283 = scmp.eq.s32.totalorder %s25, 1
      %p284 = scmp.ne.s32.totalorder %s279, %s281
      %p285 = scmp.eq.s32.totalorder %s25, 0
      %p286 = por %p284, %p285
      %p287 = scmp.ne.s32.totalorder %s279, %s281
      %p288 = scmp.eq.s32.totalorder %s30, 1
      %p289 = por %p287, %p288
      %p290 = scmp.ne.s32.totalorder %s281, %s282
      %p291 = scmp.eq.s32.totalorder %s30, 0
      %p292 = por %p290, %p291
      %p293 = scmp.ne.s32.totalorder %s281, %s282
      %p294 = scmp.eq.s32.totalorder %s31, 1
      %p295 = por %p293, %p294
      %p297 = scmp.ne.s32.totalorder %s282, %s296
      %p298 = scmp.eq.s32.totalorder %s31, 0
      %p299 = por %p297, %p298
      %s301 = sadd.s32 %s300, 1
      %p304 = scmp.eq.s32.totalorder %s25, 1
      %p305 = scmp.ne.s32.totalorder %s300, %s302
      %p306 = scmp.eq.s32.totalorder %s25, 0
      %p307 = por %p305, %p306
      %p308 = scmp.ne.s32.totalorder %s300, %s302
      %p309 = scmp.eq.s32.totalorder %s30, 1
      %p310 = por %p308, %p309
      %p311 = scmp.ne.s32.totalorder %s302, %s303
      %p312 = scmp.eq.s32.totalorder %s30, 0
      %p313 = por %p311, %p312
      %p314 = scmp.ne.s32.totalorder %s302, %s303
      %p315 = scmp.eq.s32.totalorder %s31, 1
      %p316 = por %p314, %p315
      %p318 = scmp.ne.s32.totalorder %s303, %s317
      %p319 = scmp.eq.s32.totalorder %s31, 0
      %p320 = por %p318, %p319
      %s322 = sadd.s32 %s321, 1
      %p325 = scmp.eq.s32.totalorder %s25, 1
      %p326 = scmp.ne.s32.totalorder %s321, %s323
      %p327 = scmp.eq.s32.totalorder %s25, 0
      %p328 = por %p326, %p327
      %p329 = scmp.ne.s32.totalorder %s321, %s323
      %p330 = scmp.eq.s32.totalorder %s30, 1
      %p331 = por %p329, %p330
      %p332 = scmp.ne.s32.totalorder %s323, %s324
      %p333 = scmp.eq.s32.totalorder %s30, 0
      %p334 = por %p332, %p333
      %p335 = scmp.ne.s32.totalorder %s323, %s324
      %p336 = scmp.eq.s32.totalorder %s31, 1
      %p337 = por %p335, %p336
      %p339 = scmp.ne.s32.totalorder %s324, %s338
      %p340 = scmp.eq.s32.totalorder %s31, 0
      %p341 = por %p339, %p340
      %s343 = sadd.s32 %s342, 1
      %p346 = scmp.eq.s32.totalorder %s25, 1
      %p347 = scmp.ne.s32.totalorder %s342, %s344
      %p348 = scmp.eq.s32.totalorder %s25, 0
      %p349 = por %p347, %p348
      %p350 = scmp.ne.s32.totalorder %s342, %s344
      %p351 = scmp.eq.s32.totalorder %s30, 1
      %p352 = por %p350, %p351
      %p353 = scmp.ne.s32.totalorder %s344, %s345
      %p354 = scmp.eq.s32.totalorder %s30, 0
      %p355 = por %p353, %p354
      %p356 = scmp.ne.s32.totalorder %s344, %s345
      %p357 = scmp.eq.s32.totalorder %s31, 1
      %p358 = por %p356, %p357
      %p360 = scmp.ne.s32.totalorder %s345, %s359
      %p361 = scmp.eq.s32.totalorder %s31, 0
      %p362 = por %p360, %p361
      %s364 = sadd.s32 %s363, 1
      %p367 = scmp.eq.s32.totalorder %s25, 1
      %p368 = scmp.ne.s32.totalorder %s363, %s365
      %p369 = scmp.eq.s32.totalorder %s25, 0
      %p370 = por %p368, %p369
      %p371 = scmp.ne.s32.totalorder %s363, %s365
      %p372 = scmp.eq.s32.totalorder %s30, 1
      %p373 = por %p371, %p372
      %p374 = scmp.ne.s32.totalorder %s365, %s366
      %p375 = scmp.eq.s32.totalorder %s30, 0
      %p376 = por %p374, %p375
      %p377 = scmp.ne.s32.totalorder %s365, %s366
      %p378 = scmp.eq.s32.totalorder %s31, 1
      %p379 = por %p377, %p378
      %p381 = scmp.ne.s32.totalorder %s366, %s380
      %p382 = scmp.eq.s32.totalorder %s31, 0
      %p383 = por %p381, %p382
      %s384 = ssub.s32 %s25, %s32
      %p385 = scmp.eq.s32.totalorder %s384, 0
      %s387 = sadd.s32 %s386, 1
      %s388 = scalar_select %p385, %s386, %s387
      %p391 = pneg %p385
      %p392 = scmp.eq.s32.totalorder %s25, 1
      %p393 = por %p391, %p392
      %p394 = scmp.ne.s32.totalorder %s386, %s389
      %p395 = scmp.eq.s32.totalorder %s25, 0
      %p396 = por %p394, %p395
      %p397 = scmp.ne.s32.totalorder %s386, %s389
      %p398 = scmp.eq.s32.totalorder %s30, 1
      %p399 = por %p397, %p398
      %p400 = scmp.ne.s32.totalorder %s389, %s390
      %p401 = scmp.eq.s32.totalorder %s30, 0
      %p402 = por %p400, %p401
      %p403 = scmp.ne.s32.totalorder %s389, %s390
      %p404 = scmp.eq.s32.totalorder %s31, 1
      %p405 = por %p403, %p404
      %p407 = scmp.ne.s32.totalorder %s390, %s406
      %p408 = scmp.eq.s32.totalorder %s31, 0
      %p409 = por %p407, %p408
      %p410 = scmp.le.s32.totalorder 1, %s25
      %p411 = scmp.lt.s32.totalorder %s25, 3
      %p412 = pnand %p410, %p411
      %p413 = pneg %p412
      // Predicated region
      $region9: #{transformer_decoder_forward.1} parent=5 // pred_check
        _
      $region10: #{transformer_decoder_forward.1} parent=5 // pred_check_branch
        %415 = sbr.rel (%p412) target = $region12
      $region11: #{transformer_decoder_forward.1} parent=5 // pred_region
        %s416 = ssub.s32 %s25, 1
        // Predicated region
        $region13: #{transformer_decoder_forward.1} parent=11 // pred_check
          %p417 = pneg %p98
        $region14: #{transformer_decoder_forward.1} parent=11 // pred_check_branch
          %419 = sbr.rel (%p417) target = $region16
        $region15: #{transformer_decoder_forward.1} parent=11 // pred_region
          _
        $region16: #{transformer_decoder_forward.1} parent=11 // pred_fallthru
          _
        // Predicated region
        $region17: #{transformer_decoder_forward.1} parent=11 // pred_check
          %p420 = pneg %p145
        $region18: #{transformer_decoder_forward.1} parent=11 // pred_check_branch
          %422 = sbr.rel (%p420) target = $region20
        $region19: #{transformer_decoder_forward.1} parent=11 // pred_region
          _
        $region20: #{transformer_decoder_forward.1} parent=11 // pred_fallthru
          _
        // Predicated region
        $region21: #{transformer_decoder_forward.1} parent=11 // pred_check
          %p423 = pneg %p166
        $region22: #{transformer_decoder_forward.1} parent=11 // pred_check_branch
          %425 = sbr.rel (%p423) target = $region24
        $region23: #{transformer_decoder_forward.1} parent=11 // pred_region
          _
        $region24: #{transformer_decoder_forward.1} parent=11 // pred_fallthru
          _
        // Predicated region
        $region25: #{transformer_decoder_forward.1} parent=11 // pred_check
          %p426 = pneg %p187
        $region26: #{transformer_decoder_forward.1} parent=11 // pred_check_branch
          %428 = sbr.rel (%p426) target = $region28
        $region27: #{transformer_decoder_forward.1} parent=11 // pred_region
          _
        $region28: #{transformer_decoder_forward.1} parent=11 // pred_fallthru
          _
        // Predicated region
        $region29: #{transformer_decoder_forward.1} parent=11 // pred_check
          %p429 = pneg %p208
        $region30: #{transformer_decoder_forward.1} parent=11 // pred_check_branch
          %431 = sbr.rel (%p429) target = $region32
        $region31: #{transformer_decoder_forward.1} parent=11 // pred_region
          _
        $region32: #{transformer_decoder_forward.1} parent=11 // pred_fallthru
          _
        // Predicated region
        $region33: #{transformer_decoder_forward.1} parent=11 // pred_check
          %p432 = pneg %p229
        $region34: #{transformer_decoder_forward.1} parent=11 // pred_check_branch
          %434 = sbr.rel (%p432) target = $region36
        $region35: #{transformer_decoder_forward.1} parent=11 // pred_region
          _
        $region36: #{transformer_decoder_forward.1} parent=11 // pred_fallthru
          _
        // Predicated region
        $region37: #{transformer_decoder_forward.1} parent=11 // pred_check
          %p435 = pneg %p250
        $region38: #{transformer_decoder_forward.1} parent=11 // pred_check_branch
          %437 = sbr.rel (%p435) target = $region40
        $region39: #{transformer_decoder_forward.1} parent=11 // pred_region
          _
        $region40: #{transformer_decoder_forward.1} parent=11 // pred_fallthru
          _
        // Predicated region
        $region41: #{transformer_decoder_forward.1} parent=11 // pred_check
          %p438 = pneg %p271
        $region42: #{transformer_decoder_forward.1} parent=11 // pred_check_branch
          %440 = sbr.rel (%p438) target = $region44
        $region43: #{transformer_decoder_forward.1} parent=11 // pred_region
          _
        $region44: #{transformer_decoder_forward.1} parent=11 // pred_fallthru
          _
        // Predicated region
        $region45: #{transformer_decoder_forward.1} parent=11 // pred_check
          %p441 = pneg %p292
        $region46: #{transformer_decoder_forward.1} parent=11 // pred_check_branch
          %443 = sbr.rel (%p441) target = $region48
        $region47: #{transformer_decoder_forward.1} parent=11 // pred_region
          _
        $region48: #{transformer_decoder_forward.1} parent=11 // pred_fallthru
          _
        // Predicated region
        $region49: #{transformer_decoder_forward.1} parent=11 // pred_check
          %p444 = pneg %p313
        $region50: #{transformer_decoder_forward.1} parent=11 // pred_check_branch
          %446 = sbr.rel (%p444) target = $region52
        $region51: #{transformer_decoder_forward.1} parent=11 // pred_region
          _
        $region52: #{transformer_decoder_forward.1} parent=11 // pred_fallthru
          _
        // Predicated region
        $region53: #{transformer_decoder_forward.1} parent=11 // pred_check
          %p447 = pneg %p334
        $region54: #{transformer_decoder_forward.1} parent=11 // pred_check_branch
          %449 = sbr.rel (%p447) target = $region56
        $region55: #{transformer_decoder_forward.1} parent=11 // pred_region
          _
        $region56: #{transformer_decoder_forward.1} parent=11 // pred_fallthru
          _
        // Predicated region
        $region57: #{transformer_decoder_forward.1} parent=11 // pred_check
          %p450 = pneg %p355
        $region58: #{transformer_decoder_forward.1} parent=11 // pred_check_branch
          %452 = sbr.rel (%p450) target = $region60
        $region59: #{transformer_decoder_forward.1} parent=11 // pred_region
          _
        $region60: #{transformer_decoder_forward.1} parent=11 // pred_fallthru
          _
        // Predicated region
        $region61: #{transformer_decoder_forward.1} parent=11 // pred_check
          %p453 = pneg %p376
        $region62: #{transformer_decoder_forward.1} parent=11 // pred_check_branch
          %455 = sbr.rel (%p453) target = $region64
        $region63: #{transformer_decoder_forward.1} parent=11 // pred_region
          _
        $region64: #{transformer_decoder_forward.1} parent=11 // pred_fallthru
          _
      $region12: #{transformer_decoder_forward.1} parent=5 // pred_fallthru
        _
      %p456 = scmp.lt.s32.totalorder %s25, 2
      // Predicated region
      $region65: #{transformer_decoder_forward.1} parent=5 // pred_check
        %p457 = pneg %p456
      $region66: #{transformer_decoder_forward.1} parent=5 // pred_check_branch
        %459 = sbr.rel (%p457) target = $region68
      $region67: #{transformer_decoder_forward.1} parent=5 // pred_region
        // Predicated region
        $region69: #{transformer_decoder_forward.1} parent=67 // pred_check
          %p460 = pneg %p45
        $region70: #{transformer_decoder_forward.1} parent=67 // pred_check_branch
          %462 = sbr.rel (%p460) target = $region72
        $region71: #{transformer_decoder_forward.1} parent=67 // pred_region
          %p463 = scmp.lt.s32.totalorder %s25, 1
          %s464 = scalar_select %p463, %s25, 1
          %s465 = smul.addr %s464, 8
          %s466 = scalar_lea.vmem %s0, %s465
        $region72: #{transformer_decoder_forward.1} parent=67 // pred_fallthru
          _
        // Predicated region
        $region73: #{transformer_decoder_forward.1} parent=67 // pred_check
          %p467 = pneg %p71
        $region74: #{transformer_decoder_forward.1} parent=67 // pred_check_branch
          %469 = sbr.rel (%p467) target = $region76
        $region75: #{transformer_decoder_forward.1} parent=67 // pred_region
          %p470 = scmp.lt.s32.totalorder %s25, 1
          %s471 = scalar_select %p470, %s25, 1
          %s472 = smul.addr %s471, 2
          %s473 = smul.addr %s472, 8
          %s474 = scalar_lea.vmem %s1, %s473
        $region76: #{transformer_decoder_forward.1} parent=67 // pred_fallthru
          _
        // Predicated region
        $region77: #{transformer_decoder_forward.1} parent=67 // pred_check
          %p475 = pneg %p118
        $region78: #{transformer_decoder_forward.1} parent=67 // pred_check_branch
          %477 = sbr.rel (%p475) target = $region80
        $region79: #{transformer_decoder_forward.1} parent=67 // pred_region
          %p478 = scmp.lt.s32.totalorder %s25, 1
          %s479 = scalar_select %p478, %s25, 1
          %s480 = scalar_lea.vmem %s3, %s479
        $region80: #{transformer_decoder_forward.1} parent=67 // pred_fallthru
          _
      $region68: #{transformer_decoder_forward.1} parent=5 // pred_fallthru
        _
      %p481 = scmp.le.s32.totalorder 1, %s25
      %p482 = scmp.lt.s32.totalorder %s25, 3
      %p483 = pnand %p481, %p482
      %p484 = pneg %p483
      // Predicated region
      $region81: #{transformer_decoder_forward.1} parent=5 // pred_check
        _
      $region82: #{transformer_decoder_forward.1} parent=5 // pred_check_branch
        %486 = sbr.rel (%p483) target = $region84
      $region83: #{transformer_decoder_forward.1} parent=5 // pred_region
        %s487 = ssub.s32 %s25, 1
        %p488 = scmp.lt.s32.totalorder %s30, 1
        %s489 = scalar_select %p488, %s30, 1
        %s490 = smul.addr %s489, 8
        %s491 = scalar_lea.vmem %s0, %s490
        %p492 = pneg %p51
        %p493 = pneg %p48
        %p494 = scmp.lt.s32.totalorder %s30, 1
        %s495 = scalar_select %p494, %s30, 1
        %s496 = smul.addr %s495, 2
        %s497 = smul.addr %s496, 8
        %s498 = scalar_lea.vmem %s1, %s497
        %p499 = pneg %p77
        %p500 = pneg %p74
        %p501 = pneg %p98
        %p502 = pneg %p95
        %p503 = scmp.lt.s32.totalorder %s30, 1
        %s504 = scalar_select %p503, %s30, 1
        %s505 = scalar_lea.vmem %s3, %s504
        %p506 = pneg %p124
        %p507 = pneg %p121
        %p508 = pneg %p145
        %p509 = pneg %p142
        %p510 = pneg %p166
        %p511 = pneg %p163
        %p512 = pneg %p187
        %p513 = pneg %p184
        %p514 = pneg %p208
        %p515 = pneg %p205
        %p516 = pneg %p229
        %p517 = pneg %p226
        %p518 = pneg %p250
        %p519 = pneg %p247
        %p520 = pneg %p271
        %p521 = pneg %p268
        %p522 = pneg %p292
        %p523 = pneg %p289
        %p524 = pneg %p313
        %p525 = pneg %p310
        %p526 = pneg %p334
        %p527 = pneg %p331
        %p528 = pneg %p355
        %p529 = pneg %p352
        %p530 = pneg %p376
        %p531 = pneg %p373
        %p532 = pneg %p402
        %p533 = pneg %p399
        %s534 = sand.u32 %s389, 1
        %s535 = scalar_lea.sflag [#allocation3], %s534
        %s536 = sand.u32 %s389, 1
        %s537 = smul.addr %s536, 8
        %s538 = scalar_lea.vmem [#allocation2], %s537
        %p539 = scmp.lt.s32.totalorder %s30, 1
        %s540 = scalar_select %p539, %s30, 1
        %s541 = smul.addr %s540, 8
        %s542 = scalar_lea.vmem %s0, %s541
        %p543 = scmp.lt.s32.totalorder %s30, 1
        %s544 = scalar_select %p543, %s30, 1
        %s545 = smul.addr %s544, 2
        %s546 = smul.addr %s545, 8
        %s547 = scalar_lea.vmem %s1, %s546
        %p548 = scmp.lt.s32.totalorder %s30, 1
        %s549 = scalar_select %p548, %s30, 1
        %s550 = scalar_lea.vmem %s3, %s549
        %v552 = vld [vmem:[%s542] sm:$0xff]
        %v553 = vld [vmem:[%s547] sm:$0xff]
        %v554 = vld [vmem:[%s547 + $0x8] sm:$0x3]
        %v555 = vld [vmem:[%s2] sm:$0xff]
        %v556 = vld [vmem:[%s550] sm:$0x1]
        %v557 = vld [vmem:[%s4] sm:$0xf]
        %v558 = vld [vmem:[%s4 + $0x4] sm:$0xf]
        %v559 = vld [vmem:[%s4 + $0x8] sm:$0xf]
        %v560 = vld [vmem:[%s4 + $0xc] sm:$0xf]
        %v561 = vpack.c.bf16 %v552, %v552
        %v562 = vld [vmem:[%s5] sm:$0x1]
        %v564 = vlaneseq
        %v565 = vshrl.u32 %v564, 7
        %v566 = vsub.s32 0, %v565
        %v567 = vrot.slane %v562, %v566
        %v573 = vunpack.c.l.b16 %v557
        %v574 = vunpack.c.l.b16 %v558
        %v575 = vunpack.c.l.b16 %v559
        %v576 = vunpack.c.l.b16 %v560
        %v577 = vpack.c.b16 %v574, %v573
        %v578 = vpack.c.b16 %v576, %v575
        %vm581 = vcmask 261120
        %v583 = vsel %vm581, %v561, 0
        %585 = vmatprep.subr.bf16.mxu0 0
        %586 = vmatpush1.bf16.msra.mxu0 0
        %587 = vmatprep.subr.bf16.mxu0 0
        %588 = vmatpush1.bf16.msra.mxu0 0
        %589 = vmatprep.subr.bf16.mxu0 0
        %590 = vmatpush1.bf16.msra.mxu0 0
        %591 = vmatprep.subr.bf16.mxu0 0
        %592 = vmatpush1.bf16.msra.mxu0 0
        %593 = vmatprep.subr.bf16.mxu0 0
        %594 = vmatpush1.bf16.msra.mxu0 0
        %595 = vmatprep.subr.bf16.mxu0 0
        %596 = vmatpush1.bf16.msra.mxu0 0
        %597 = vmatprep.subr.bf16.mxu0 0
        %598 = vmatpush1.bf16.msra.mxu0 %v578
        %599 = vmatprep.subr.bf16.mxu0 0
        %600 = vmatpush1.bf16.msra.mxu0 %v577
        %601 = vmatprep.subr.bf16.mxu0 0
        %602 = vmatpush2.bf16.msra.mxu0 0
        %603 = vmatprep.subr.bf16.mxu0 0
        %604 = vmatpush2.bf16.msra.mxu0 0
        %605 = vmatprep.subr.bf16.mxu0 0
        %606 = vmatpush2.bf16.msra.mxu0 0
        %607 = vmatprep.subr.bf16.mxu0 0
        %608 = vmatpush2.bf16.msra.mxu0 0
        %609 = vmatprep.subr.bf16.mxu0 0
        %610 = vmatpush2.bf16.msra.mxu0 0
        %611 = vmatprep.subr.bf16.mxu0 0
        %612 = vmatpush2.bf16.msra.mxu0 0
        %613 = vmatprep.subr.bf16.mxu0 0
        %614 = vmatpush2.bf16.msra.mxu0 0
        %615 = vmatprep.subr.bf16.mxu0 0
        %616 = vmatpush2.bf16.msra.mxu0 0
        %617 = vmatprep.mubr.bf16.mxu0 0
        %618 = vmatmul.mubr.bf16.gmra.mxu0 %v583
        %v619 = vpop.f32.mrf.mxu0
        %v620 = vadd.f32 %v567, %v619
        %v621 = vpop.f32.mrf.mxu0
        %v622 = vpop.f32.mrf.mxu0
        %v623 = vpop.f32.mrf.mxu0
        %624 = vdwg.mxu0
        %v625 = vld [vmem:[%s6] sm:$0xf]
        %v626 = vld [vmem:[%s6 + $0x4] sm:$0xf]
        %v627 = vld [vmem:[%s6 + $0x8] sm:$0xf]
        %v628 = vld [vmem:[%s6 + $0xc] sm:$0xf]
        %v629 = vld [vmem:[%s7] sm:$0x1]
        %631 = vrot.lane.b32.xlu0 %v620, 96
        %v632 = vpop.permute.xlu0 %631
        %vm633 = vcmask 64512
        %v634 = vsel %vm633, %v620, 0
        %v636 = vsel %vm633, %v632, 0
        %638 = vmatprep.subr.mxu0 0.0
        %639 = vmatpush1.xpose.msra.mxu0 0.0
        %640 = vmatprep.subr.mxu0 0.0
        %641 = vmatpush1.xpose.msra.mxu0 0.0
        %642 = vmatprep.subr.mxu0 0.0
        %643 = vmatpush1.xpose.msra.mxu0 0.0
        %644 = vmatprep.subr.mxu0 0.0
        %645 = vmatpush1.xpose.msra.mxu0 0.0
        %646 = vmatprep.subr.mxu0 0.0
        %647 = vmatpush1.xpose.msra.mxu0 0.0
        %648 = vmatprep.subr.mxu0 0.0
        %649 = vmatpush1.xpose.msra.mxu0 0.0
        %650 = vmatprep.subr.mxu0 0.0
        %651 = vmatpush1.xpose.msra.mxu0 0.0
        %652 = vmatprep.subr.mxu0 0.0
        %653 = vmatpush1.xpose.msra.mxu0 0.0
        %654 = vmatprep.subr.mxu0 0.0
        %655 = vmatpush1.xpose.msra.mxu0 0.0
        %656 = vmatprep.subr.mxu0 0.0
        %657 = vmatpush1.xpose.msra.mxu0 0.0
        %658 = vmatprep.subr.mxu0 0.0
        %659 = vmatpush1.xpose.msra.mxu0 0.0
        %660 = vmatprep.subr.mxu0 0.0
        %661 = vmatpush1.xpose.msra.mxu0 0.0
        %662 = vmatprep.subr.mxu0 0.0
        %663 = vmatpush1.xpose.msra.mxu0 0.0
        %664 = vmatprep.subr.mxu0 0.0
        %665 = vmatpush1.xpose.msra.mxu0 0.0
        %666 = vmatprep.subr.mxu0 0.0
        %667 = vmatpush1.xpose.msra.mxu0 0.0
        %668 = vmatprep.subr.mxu0 0.0
        %669 = vmatpush1.xpose.msra.mxu0 %v636
        %670 = vmatprep.subr.mxu0 0.0
        %671 = vmatpush2.xpose.msra.mxu0 0.0
        %672 = vmatprep.subr.mxu0 0.0
        %673 = vmatpush2.xpose.msra.mxu0 0.0
        %674 = vmatprep.subr.mxu0 0.0
        %675 = vmatpush2.xpose.msra.mxu0 0.0
        %676 = vmatprep.subr.mxu0 0.0
        %677 = vmatpush2.xpose.msra.mxu0 0.0
        %678 = vmatprep.subr.mxu0 0.0
        %679 = vmatpush2.xpose.msra.mxu0 0.0
        %680 = vmatprep.subr.mxu0 0.0
        %681 = vmatpush2.xpose.msra.mxu0 0.0
        %682 = vmatprep.subr.mxu0 0.0
        %683 = vmatpush2.xpose.msra.mxu0 0.0
        %684 = vmatprep.subr.mxu0 0.0
        %685 = vmatpush2.xpose.msra.mxu0 0.0
        %686 = vmatprep.subr.mxu0 0.0
        %687 = vmatpush2.xpose.msra.mxu0 0.0
        %688 = vmatprep.subr.mxu0 0.0
        %689 = vmatpush2.xpose.msra.mxu0 0.0
        %690 = vmatprep.subr.mxu0 0.0
        %691 = vmatpush2.xpose.msra.mxu0 0.0
        %692 = vmatprep.subr.mxu0 0.0
        %693 = vmatpush2.xpose.msra.mxu0 0.0
        %694 = vmatprep.subr.mxu0 0.0
        %695 = vmatpush2.xpose.msra.mxu0 0.0
        %696 = vmatprep.subr.mxu0 0.0
        %697 = vmatpush2.xpose.msra.mxu0 0.0
        %698 = vmatprep.subr.mxu0 0.0
        %699 = vmatpush2.xpose.msra.mxu0 0.0
        %700 = vmatprep.subr.mxu0 0.0
        %701 = vmatpush2.xpose.msra.mxu0 0.0
        %702 = vmatprep.mubr.f32.mxu0 0.0
        %703 = vmatmul.mubr.f32.gmra.mxu0 %v634
        %v704 = vpop.f32.mrf.mxu0
        %v705 = vadd.f32 0.0, %v704
        %v706 = vpop.f32.mrf.mxu0
        %707 = vdwg.mxu0
        %v708 = vmul.f32 %v705, 0.35355338
        %v709 = vadd.f32 %v708, %v555
        %v710 = vsel %vm633, %v709, -inf
        %711 = vmax.xlane.f32.xlu0 %v710
        %v712 = vpop.xlane.xlu0 %711
        %v713 = vsub.f32 %v709, %v712
        %v714 = vmul.f32 %v713, 1.442695
        %v715 = vpow.pop %v714
        %v716 = vsel %vm633, %v715, 0.0
        %717 = vadd.xlane.f32.xlu0 %v716
        %v718 = vpop.xlane.xlu0 %717
        %v719 = vrcp.pop %v718
        %v720 = vmul.f32 %v715, %v719
        %721 = vrot.lane.b32.xlu0 %v620, 64
        %v722 = vpop.permute.xlu0 %721
        %v725 = vsel %vm633, %v720, 0
        %727 = vmatprep.subr.mxu0 0.0
        %728 = vmatpush1.msra.mxu0 0.0
        %729 = vmatprep.subr.mxu0 0.0
        %730 = vmatpush1.msra.mxu0 0.0
        %731 = vmatprep.subr.mxu0 0.0
        %732 = vmatpush1.msra.mxu0 0.0
        %733 = vmatprep.subr.mxu0 0.0
        %734 = vmatpush1.msra.mxu0 0.0
        %735 = vmatprep.subr.mxu0 0.0
        %736 = vmatpush1.msra.mxu0 0.0
        %737 = vmatprep.subr.mxu0 0.0
        %738 = vmatpush1.msra.mxu0 0.0
        %739 = vmatprep.subr.mxu0 0.0
        %740 = vmatpush1.msra.mxu0 0.0
        %741 = vmatprep.subr.mxu0 0.0
        %742 = vmatpush1.msra.mxu0 0.0
        %743 = vmatprep.subr.mxu0 0.0
        %744 = vmatpush1.msra.mxu0 0.0
        %745 = vmatprep.subr.mxu0 0.0
        %746 = vmatpush1.msra.mxu0 0.0
        %747 = vmatprep.subr.mxu0 0.0
        %748 = vmatpush1.msra.mxu0 0.0
        %749 = vmatprep.subr.mxu0 0.0
        %750 = vmatpush1.msra.mxu0 0.0
        %751 = vmatprep.subr.mxu0 0.0
        %752 = vmatpush1.msra.mxu0 0.0
        %753 = vmatprep.subr.mxu0 0.0
        %754 = vmatpush1.msra.mxu0 0.0
        %755 = vmatprep.subr.mxu0 0.0
        %756 = vmatpush1.msra.mxu0 0.0
        %757 = vmatprep.subr.mxu0 0.0
        %758 = vmatpush1.msra.mxu0 %v722
        %759 = vmatprep.subr.mxu0 0.0
        %760 = vmatpush2.msra.mxu0 0.0
        %761 = vmatprep.subr.mxu0 0.0
        %762 = vmatpush2.msra.mxu0 0.0
        %763 = vmatprep.subr.mxu0 0.0
        %764 = vmatpush2.msra.mxu0 0.0
        %765 = vmatprep.subr.mxu0 0.0
        %766 = vmatpush2.msra.mxu0 0.0
        %767 = vmatprep.subr.mxu0 0.0
        %768 = vmatpush2.msra.mxu0 0.0
        %769 = vmatprep.subr.mxu0 0.0
        %770 = vmatpush2.msra.mxu0 0.0
        %771 = vmatprep.subr.mxu0 0.0
        %772 = vmatpush2.msra.mxu0 0.0
        %773 = vmatprep.subr.mxu0 0.0
        %774 = vmatpush2.msra.mxu0 0.0
        %775 = vmatprep.subr.mxu0 0.0
        %776 = vmatpush2.msra.mxu0 0.0
        %777 = vmatprep.subr.mxu0 0.0
        %778 = vmatpush2.msra.mxu0 0.0
        %779 = vmatprep.subr.mxu0 0.0
        %780 = vmatpush2.msra.mxu0 0.0
        %781 = vmatprep.subr.mxu0 0.0
        %782 = vmatpush2.msra.mxu0 0.0
        %783 = vmatprep.subr.mxu0 0.0
        %784 = vmatpush2.msra.mxu0 0.0
        %785 = vmatprep.subr.mxu0 0.0
        %786 = vmatpush2.msra.mxu0 0.0
        %787 = vmatprep.subr.mxu0 0.0
        %788 = vmatpush2.msra.mxu0 0.0
        %789 = vmatprep.subr.mxu0 0.0
        %790 = vmatpush2.msra.mxu0 0.0
        %791 = vmatprep.mubr.f32.mxu0 0.0
        %792 = vmatmul.mubr.f32.gmra.mxu0 %v725
        %v793 = vpop.f32.mrf.mxu0
        %v794 = vadd.f32 0.0, %v793
        %v795 = vpop.f32.mrf.mxu0
        %796 = vdwg.mxu0
        %797 = vrot.lane.b32.xlu0 %v620, 120
        %v798 = vpop.permute.xlu0 %797
        %799 = vrot.lane.b32.xlu0 %v620, 88
        %v800 = vpop.permute.xlu0 %799
        %v801 = vsel %vm633, %v798, 0
        %v803 = vsel %vm633, %v800, 0
        %805 = vmatprep.subr.mxu0 0.0
        %806 = vmatpush1.xpose.msra.mxu0 0.0
        %807 = vmatprep.subr.mxu0 0.0
        %808 = vmatpush1.xpose.msra.mxu0 0.0
        %809 = vmatprep.subr.mxu0 0.0
        %810 = vmatpush1.xpose.msra.mxu0 0.0
        %811 = vmatprep.subr.mxu0 0.0
        %812 = vmatpush1.xpose.msra.mxu0 0.0
        %813 = vmatprep.subr.mxu0 0.0
        %814 = vmatpush1.xpose.msra.mxu0 0.0
        %815 = vmatprep.subr.mxu0 0.0
        %816 = vmatpush1.xpose.msra.mxu0 0.0
        %817 = vmatprep.subr.mxu0 0.0
        %818 = vmatpush1.xpose.msra.mxu0 0.0
        %819 = vmatprep.subr.mxu0 0.0
        %820 = vmatpush1.xpose.msra.mxu0 0.0
        %821 = vmatprep.subr.mxu0 0.0
        %822 = vmatpush1.xpose.msra.mxu0 0.0
        %823 = vmatprep.subr.mxu0 0.0
        %824 = vmatpush1.xpose.msra.mxu0 0.0
        %825 = vmatprep.subr.mxu0 0.0
        %826 = vmatpush1.xpose.msra.mxu0 0.0
        %827 = vmatprep.subr.mxu0 0.0
        %828 = vmatpush1.xpose.msra.mxu0 0.0
        %829 = vmatprep.subr.mxu0 0.0
        %830 = vmatpush1.xpose.msra.mxu0 0.0
        %831 = vmatprep.subr.mxu0 0.0
        %832 = vmatpush1.xpose.msra.mxu0 0.0
        %833 = vmatprep.subr.mxu0 0.0
        %834 = vmatpush1.xpose.msra.mxu0 0.0
        %835 = vmatprep.subr.mxu0 0.0
        %836 = vmatpush1.xpose.msra.mxu0 %v803
        %837 = vmatprep.subr.mxu0 0.0
        %838 = vmatpush2.xpose.msra.mxu0 0.0
        %839 = vmatprep.subr.mxu0 0.0
        %840 = vmatpush2.xpose.msra.mxu0 0.0
        %841 = vmatprep.subr.mxu0 0.0
        %842 = vmatpush2.xpose.msra.mxu0 0.0
        %843 = vmatprep.subr.mxu0 0.0
        %844 = vmatpush2.xpose.msra.mxu0 0.0
        %845 = vmatprep.subr.mxu0 0.0
        %846 = vmatpush2.xpose.msra.mxu0 0.0
        %847 = vmatprep.subr.mxu0 0.0
        %848 = vmatpush2.xpose.msra.mxu0 0.0
        %849 = vmatprep.subr.mxu0 0.0
        %850 = vmatpush2.xpose.msra.mxu0 0.0
        %851 = vmatprep.subr.mxu0 0.0
        %852 = vmatpush2.xpose.msra.mxu0 0.0
        %853 = vmatprep.subr.mxu0 0.0
        %854 = vmatpush2.xpose.msra.mxu0 0.0
        %855 = vmatprep.subr.mxu0 0.0
        %856 = vmatpush2.xpose.msra.mxu0 0.0
        %857 = vmatprep.subr.mxu0 0.0
        %858 = vmatpush2.xpose.msra.mxu0 0.0
        %859 = vmatprep.subr.mxu0 0.0
        %860 = vmatpush2.xpose.msra.mxu0 0.0
        %861 = vmatprep.subr.mxu0 0.0
        %862 = vmatpush2.xpose.msra.mxu0 0.0
        %863 = vmatprep.subr.mxu0 0.0
        %864 = vmatpush2.xpose.msra.mxu0 0.0
        %865 = vmatprep.subr.mxu0 0.0
        %866 = vmatpush2.xpose.msra.mxu0 0.0
        %867 = vmatprep.subr.mxu0 0.0
        %868 = vmatpush2.xpose.msra.mxu0 0.0
        %869 = vmatprep.mubr.f32.mxu0 0.0
        %870 = vmatmul.mubr.f32.gmra.mxu0 %v801
        %v871 = vpop.f32.mrf.mxu0
        %v872 = vadd.f32 0.0, %v871
        %v873 = vpop.f32.mrf.mxu0
        %874 = vdwg.mxu0
        %v875 = vmul.f32 %v872, 0.35355338
        %v876 = vadd.f32 %v875, %v555
        %v877 = vsel %vm633, %v876, -inf
        %878 = vmax.xlane.f32.xlu0 %v877
        %v879 = vpop.xlane.xlu0 %878
        %v880 = vsub.f32 %v876, %v879
        %v881 = vmul.f32 %v880, 1.442695
        %v882 = vpow.pop %v881
        %v883 = vsel %vm633, %v882, 0.0
        %884 = vadd.xlane.f32.xlu0 %v883
        %v885 = vpop.xlane.xlu0 %884
        %v886 = vrcp.pop %v885
        %v887 = vmul.f32 %v882, %v886
        %888 = vrot.lane.b32.xlu0 %v620, 56
        %v889 = vpop.permute.xlu0 %888
        %v892 = vsel %vm633, %v887, 0
        %894 = vmatprep.subr.mxu0 0.0
        %895 = vmatpush1.msra.mxu0 0.0
        %896 = vmatprep.subr.mxu0 0.0
        %897 = vmatpush1.msra.mxu0 0.0
        %898 = vmatprep.subr.mxu0 0.0
        %899 = vmatpush1.msra.mxu0 0.0
        %900 = vmatprep.subr.mxu0 0.0
        %901 = vmatpush1.msra.mxu0 0.0
        %902 = vmatprep.subr.mxu0 0.0
        %903 = vmatpush1.msra.mxu0 0.0
        %904 = vmatprep.subr.mxu0 0.0
        %905 = vmatpush1.msra.mxu0 0.0
        %906 = vmatprep.subr.mxu0 0.0
        %907 = vmatpush1.msra.mxu0 0.0
        %908 = vmatprep.subr.mxu0 0.0
        %909 = vmatpush1.msra.mxu0 0.0
        %910 = vmatprep.subr.mxu0 0.0
        %911 = vmatpush1.msra.mxu0 0.0
        %912 = vmatprep.subr.mxu0 0.0
        %913 = vmatpush1.msra.mxu0 0.0
        %914 = vmatprep.subr.mxu0 0.0
        %915 = vmatpush1.msra.mxu0 0.0
        %916 = vmatprep.subr.mxu0 0.0
        %917 = vmatpush1.msra.mxu0 0.0
        %918 = vmatprep.subr.mxu0 0.0
        %919 = vmatpush1.msra.mxu0 0.0
        %920 = vmatprep.subr.mxu0 0.0
        %921 = vmatpush1.msra.mxu0 0.0
        %922 = vmatprep.subr.mxu0 0.0
        %923 = vmatpush1.msra.mxu0 0.0
        %924 = vmatprep.subr.mxu0 0.0
        %925 = vmatpush1.msra.mxu0 %v889
        %926 = vmatprep.subr.mxu0 0.0
        %927 = vmatpush2.msra.mxu0 0.0
        %928 = vmatprep.subr.mxu0 0.0
        %929 = vmatpush2.msra.mxu0 0.0
        %930 = vmatprep.subr.mxu0 0.0
        %931 = vmatpush2.msra.mxu0 0.0
        %932 = vmatprep.subr.mxu0 0.0
        %933 = vmatpush2.msra.mxu0 0.0
        %934 = vmatprep.subr.mxu0 0.0
        %935 = vmatpush2.msra.mxu0 0.0
        %936 = vmatprep.subr.mxu0 0.0
        %937 = vmatpush2.msra.mxu0 0.0
        %938 = vmatprep.subr.mxu0 0.0
        %939 = vmatpush2.msra.mxu0 0.0
        %940 = vmatprep.subr.mxu0 0.0
        %941 = vmatpush2.msra.mxu0 0.0
        %942 = vmatprep.subr.mxu0 0.0
        %943 = vmatpush2.msra.mxu0 0.0
        %944 = vmatprep.subr.mxu0 0.0
        %945 = vmatpush2.msra.mxu0 0.0
        %946 = vmatprep.subr.mxu0 0.0
        %947 = vmatpush2.msra.mxu0 0.0
        %948 = vmatprep.subr.mxu0 0.0
        %949 = vmatpush2.msra.mxu0 0.0
        %950 = vmatprep.subr.mxu0 0.0
        %951 = vmatpush2.msra.mxu0 0.0
        %952 = vmatprep.subr.mxu0 0.0
        %953 = vmatpush2.msra.mxu0 0.0
        %954 = vmatprep.subr.mxu0 0.0
        %955 = vmatpush2.msra.mxu0 0.0
        %956 = vmatprep.subr.mxu0 0.0
        %957 = vmatpush2.msra.mxu0 0.0
        %958 = vmatprep.mubr.f32.mxu0 0.0
        %959 = vmatmul.mubr.f32.gmra.mxu0 %v892
        %v960 = vpop.f32.mrf.mxu0
        %v961 = vadd.f32 0.0, %v960
        %v962 = vpop.f32.mrf.mxu0
        %963 = vdwg.mxu0
        %964 = vrot.lane.b32.xlu0 %v620, 112
        %v965 = vpop.permute.xlu0 %964
        %966 = vrot.lane.b32.xlu0 %v620, 80
        %v967 = vpop.permute.xlu0 %966
        %v968 = vsel %vm633, %v965, 0
        %v970 = vsel %vm633, %v967, 0
        %972 = vmatprep.subr.mxu0 0.0
        %973 = vmatpush1.xpose.msra.mxu0 0.0
        %974 = vmatprep.subr.mxu0 0.0
        %975 = vmatpush1.xpose.msra.mxu0 0.0
        %976 = vmatprep.subr.mxu0 0.0
        %977 = vmatpush1.xpose.msra.mxu0 0.0
        %978 = vmatprep.subr.mxu0 0.0
        %979 = vmatpush1.xpose.msra.mxu0 0.0
        %980 = vmatprep.subr.mxu0 0.0
        %981 = vmatpush1.xpose.msra.mxu0 0.0
        %982 = vmatprep.subr.mxu0 0.0
        %983 = vmatpush1.xpose.msra.mxu0 0.0
        %984 = vmatprep.subr.mxu0 0.0
        %985 = vmatpush1.xpose.msra.mxu0 0.0
        %986 = vmatprep.subr.mxu0 0.0
        %987 = vmatpush1.xpose.msra.mxu0 0.0
        %988 = vmatprep.subr.mxu0 0.0
        %989 = vmatpush1.xpose.msra.mxu0 0.0
        %990 = vmatprep.subr.mxu0 0.0
        %991 = vmatpush1.xpose.msra.mxu0 0.0
        %992 = vmatprep.subr.mxu0 0.0
        %993 = vmatpush1.xpose.msra.mxu0 0.0
        %994 = vmatprep.subr.mxu0 0.0
        %995 = vmatpush1.xpose.msra.mxu0 0.0
        %996 = vmatprep.subr.mxu0 0.0
        %997 = vmatpush1.xpose.msra.mxu0 0.0
        %998 = vmatprep.subr.mxu0 0.0
        %999 = vmatpush1.xpose.msra.mxu0 0.0
        %1000 = vmatprep.subr.mxu0 0.0
        %1001 = vmatpush1.xpose.msra.mxu0 0.0
        %1002 = vmatprep.subr.mxu0 0.0
        %1003 = vmatpush1.xpose.msra.mxu0 %v970
        %1004 = vmatprep.subr.mxu0 0.0
        %1005 = vmatpush2.xpose.msra.mxu0 0.0
        %1006 = vmatprep.subr.mxu0 0.0
        %1007 = vmatpush2.xpose.msra.mxu0 0.0
        %1008 = vmatprep.subr.mxu0 0.0
        %1009 = vmatpush2.xpose.msra.mxu0 0.0
        %1010 = vmatprep.subr.mxu0 0.0
        %1011 = vmatpush2.xpose.msra.mxu0 0.0
        %1012 = vmatprep.subr.mxu0 0.0
        %1013 = vmatpush2.xpose.msra.mxu0 0.0
        %1014 = vmatprep.subr.mxu0 0.0
        %1015 = vmatpush2.xpose.msra.mxu0 0.0
        %1016 = vmatprep.subr.mxu0 0.0
        %1017 = vmatpush2.xpose.msra.mxu0 0.0
        %1018 = vmatprep.subr.mxu0 0.0
        %1019 = vmatpush2.xpose.msra.mxu0 0.0
        %1020 = vmatprep.subr.mxu0 0.0
        %1021 = vmatpush2.xpose.msra.mxu0 0.0
        %1022 = vmatprep.subr.mxu0 0.0
        %1023 = vmatpush2.xpose.msra.mxu0 0.0
        %1024 = vmatprep.subr.mxu0 0.0
        %1025 = vmatpush2.xpose.msra.mxu0 0.0
        %1026 = vmatprep.subr.mxu0 0.0
        %1027 = vmatpush2.xpose.msra.mxu0 0.0
        %1028 = vmatprep.subr.mxu0 0.0
        %1029 = vmatpush2.xpose.msra.mxu0 0.0
        %1030 = vmatprep.subr.mxu0 0.0
        %1031 = vmatpush2.xpose.msra.mxu0 0.0
        %1032 = vmatprep.subr.mxu0 0.0
        %1033 = vmatpush2.xpose.msra.mxu0 0.0
        %1034 = vmatprep.subr.mxu0 0.0
        %1035 = vmatpush2.xpose.msra.mxu0 0.0
        %1036 = vmatprep.mubr.f32.mxu0 0.0
        %1037 = vmatmul.mubr.f32.gmra.mxu0 %v968
        %v1038 = vpop.f32.mrf.mxu0
        %v1039 = vadd.f32 0.0, %v1038
        %v1040 = vpop.f32.mrf.mxu0
        %1041 = vdwg.mxu0
        %v1042 = vmul.f32 %v1039, 0.35355338
        %v1043 = vadd.f32 %v1042, %v555
        %v1044 = vsel %vm633, %v1043, -inf
        %1045 = vmax.xlane.f32.xlu0 %v1044
        %v1046 = vpop.xlane.xlu0 %1045
        %v1047 = vsub.f32 %v1043, %v1046
        %v1048 = vmul.f32 %v1047, 1.442695
        %v1049 = vpow.pop %v1048
        %v1050 = vsel %vm633, %v1049, 0.0
        %1051 = vadd.xlane.f32.xlu0 %v1050
        %v1052 = vpop.xlane.xlu0 %1051
        %v1053 = vrcp.pop %v1052
        %v1054 = vmul.f32 %v1049, %v1053
        %1055 = vrot.lane.b32.xlu0 %v620, 48
        %v1056 = vpop.permute.xlu0 %1055
        %v1059 = vsel %vm633, %v1054, 0
        %1061 = vmatprep.subr.mxu0 0.0
        %1062 = vmatpush1.msra.mxu0 0.0
        %1063 = vmatprep.subr.mxu0 0.0
        %1064 = vmatpush1.msra.mxu0 0.0
        %1065 = vmatprep.subr.mxu0 0.0
        %1066 = vmatpush1.msra.mxu0 0.0
        %1067 = vmatprep.subr.mxu0 0.0
        %1068 = vmatpush1.msra.mxu0 0.0
        %1069 = vmatprep.subr.mxu0 0.0
        %1070 = vmatpush1.msra.mxu0 0.0
        %1071 = vmatprep.subr.mxu0 0.0
        %1072 = vmatpush1.msra.mxu0 0.0
        %1073 = vmatprep.subr.mxu0 0.0
        %1074 = vmatpush1.msra.mxu0 0.0
        %1075 = vmatprep.subr.mxu0 0.0
        %1076 = vmatpush1.msra.mxu0 0.0
        %1077 = vmatprep.subr.mxu0 0.0
        %1078 = vmatpush1.msra.mxu0 0.0
        %1079 = vmatprep.subr.mxu0 0.0
        %1080 = vmatpush1.msra.mxu0 0.0
        %1081 = vmatprep.subr.mxu0 0.0
        %1082 = vmatpush1.msra.mxu0 0.0
        %1083 = vmatprep.subr.mxu0 0.0
        %1084 = vmatpush1.msra.mxu0 0.0
        %1085 = vmatprep.subr.mxu0 0.0
        %1086 = vmatpush1.msra.mxu0 0.0
        %1087 = vmatprep.subr.mxu0 0.0
        %1088 = vmatpush1.msra.mxu0 0.0
        %1089 = vmatprep.subr.mxu0 0.0
        %1090 = vmatpush1.msra.mxu0 0.0
        %1091 = vmatprep.subr.mxu0 0.0
        %1092 = vmatpush1.msra.mxu0 %v1056
        %1093 = vmatprep.subr.mxu0 0.0
        %1094 = vmatpush2.msra.mxu0 0.0
        %1095 = vmatprep.subr.mxu0 0.0
        %1096 = vmatpush2.msra.mxu0 0.0
        %1097 = vmatprep.subr.mxu0 0.0
        %1098 = vmatpush2.msra.mxu0 0.0
        %1099 = vmatprep.subr.mxu0 0.0
        %1100 = vmatpush2.msra.mxu0 0.0
        %1101 = vmatprep.subr.mxu0 0.0
        %1102 = vmatpush2.msra.mxu0 0.0
        %1103 = vmatprep.subr.mxu0 0.0
        %1104 = vmatpush2.msra.mxu0 0.0
        %1105 = vmatprep.subr.mxu0 0.0
        %1106 = vmatpush2.msra.mxu0 0.0
        %1107 = vmatprep.subr.mxu0 0.0
        %1108 = vmatpush2.msra.mxu0 0.0
        %1109 = vmatprep.subr.mxu0 0.0
        %1110 = vmatpush2.msra.mxu0 0.0
        %1111 = vmatprep.subr.mxu0 0.0
        %1112 = vmatpush2.msra.mxu0 0.0
        %1113 = vmatprep.subr.mxu0 0.0
        %1114 = vmatpush2.msra.mxu0 0.0
        %1115 = vmatprep.subr.mxu0 0.0
        %1116 = vmatpush2.msra.mxu0 0.0
        %1117 = vmatprep.subr.mxu0 0.0
        %1118 = vmatpush2.msra.mxu0 0.0
        %1119 = vmatprep.subr.mxu0 0.0
        %1120 = vmatpush2.msra.mxu0 0.0
        %1121 = vmatprep.subr.mxu0 0.0
        %1122 = vmatpush2.msra.mxu0 0.0
        %1123 = vmatprep.subr.mxu0 0.0
        %1124 = vmatpush2.msra.mxu0 0.0
        %1125 = vmatprep.mubr.f32.mxu0 0.0
        %1126 = vmatmul.mubr.f32.gmra.mxu0 %v1059
        %v1127 = vpop.f32.mrf.mxu0
        %v1128 = vadd.f32 0.0, %v1127
        %v1129 = vpop.f32.mrf.mxu0
        %1130 = vdwg.mxu0
        %1131 = vrot.lane.b32.xlu0 %v620, 104
        %v1132 = vpop.permute.xlu0 %1131
        %1133 = vrot.lane.b32.xlu0 %v620, 72
        %v1134 = vpop.permute.xlu0 %1133
        %v1135 = vsel %vm633, %v1132, 0
        %v1137 = vsel %vm633, %v1134, 0
        %1139 = vmatprep.subr.mxu0 0.0
        %1140 = vmatpush1.xpose.msra.mxu0 0.0
        %1141 = vmatprep.subr.mxu0 0.0
        %1142 = vmatpush1.xpose.msra.mxu0 0.0
        %1143 = vmatprep.subr.mxu0 0.0
        %1144 = vmatpush1.xpose.msra.mxu0 0.0
        %1145 = vmatprep.subr.mxu0 0.0
        %1146 = vmatpush1.xpose.msra.mxu0 0.0
        %1147 = vmatprep.subr.mxu0 0.0
        %1148 = vmatpush1.xpose.msra.mxu0 0.0
        %1149 = vmatprep.subr.mxu0 0.0
        %1150 = vmatpush1.xpose.msra.mxu0 0.0
        %1151 = vmatprep.subr.mxu0 0.0
        %1152 = vmatpush1.xpose.msra.mxu0 0.0
        %1153 = vmatprep.subr.mxu0 0.0
        %1154 = vmatpush1.xpose.msra.mxu0 0.0
        %1155 = vmatprep.subr.mxu0 0.0
        %1156 = vmatpush1.xpose.msra.mxu0 0.0
        %1157 = vmatprep.subr.mxu0 0.0
        %1158 = vmatpush1.xpose.msra.mxu0 0.0
        %1159 = vmatprep.subr.mxu0 0.0
        %1160 = vmatpush1.xpose.msra.mxu0 0.0
        %1161 = vmatprep.subr.mxu0 0.0
        %1162 = vmatpush1.xpose.msra.mxu0 0.0
        %1163 = vmatprep.subr.mxu0 0.0
        %1164 = vmatpush1.xpose.msra.mxu0 0.0
        %1165 = vmatprep.subr.mxu0 0.0
        %1166 = vmatpush1.xpose.msra.mxu0 0.0
        %1167 = vmatprep.subr.mxu0 0.0
        %1168 = vmatpush1.xpose.msra.mxu0 0.0
        %1169 = vmatprep.subr.mxu0 0.0
        %1170 = vmatpush1.xpose.msra.mxu0 %v1137
        %1171 = vmatprep.subr.mxu0 0.0
        %1172 = vmatpush2.xpose.msra.mxu0 0.0
        %1173 = vmatprep.subr.mxu0 0.0
        %1174 = vmatpush2.xpose.msra.mxu0 0.0
        %1175 = vmatprep.subr.mxu0 0.0
        %1176 = vmatpush2.xpose.msra.mxu0 0.0
        %1177 = vmatprep.subr.mxu0 0.0
        %1178 = vmatpush2.xpose.msra.mxu0 0.0
        %1179 = vmatprep.subr.mxu0 0.0
        %1180 = vmatpush2.xpose.msra.mxu0 0.0
        %1181 = vmatprep.subr.mxu0 0.0
        %1182 = vmatpush2.xpose.msra.mxu0 0.0
        %1183 = vmatprep.subr.mxu0 0.0
        %1184 = vmatpush2.xpose.msra.mxu0 0.0
        %1185 = vmatprep.subr.mxu0 0.0
        %1186 = vmatpush2.xpose.msra.mxu0 0.0
        %1187 = vmatprep.subr.mxu0 0.0
        %1188 = vmatpush2.xpose.msra.mxu0 0.0
        %1189 = vmatprep.subr.mxu0 0.0
        %1190 = vmatpush2.xpose.msra.mxu0 0.0
        %1191 = vmatprep.subr.mxu0 0.0
        %1192 = vmatpush2.xpose.msra.mxu0 0.0
        %1193 = vmatprep.subr.mxu0 0.0
        %1194 = vmatpush2.xpose.msra.mxu0 0.0
        %1195 = vmatprep.subr.mxu0 0.0
        %1196 = vmatpush2.xpose.msra.mxu0 0.0
        %1197 = vmatprep.subr.mxu0 0.0
        %1198 = vmatpush2.xpose.msra.mxu0 0.0
        %1199 = vmatprep.subr.mxu0 0.0
        %1200 = vmatpush2.xpose.msra.mxu0 0.0
        %1201 = vmatprep.subr.mxu0 0.0
        %1202 = vmatpush2.xpose.msra.mxu0 0.0
        %1203 = vmatprep.mubr.f32.mxu0 0.0
        %1204 = vmatmul.mubr.f32.gmra.mxu0 %v1135
        %v1205 = vpop.f32.mrf.mxu0
        %v1206 = vadd.f32 0.0, %v1205
        %v1207 = vpop.f32.mrf.mxu0
        %1208 = vdwg.mxu0
        %v1209 = vmul.f32 %v1206, 0.35355338
        %v1210 = vadd.f32 %v1209, %v555
        %v1211 = vsel %vm633, %v1210, -inf
        %1212 = vmax.xlane.f32.xlu0 %v1211
        %v1213 = vpop.xlane.xlu0 %1212
        %v1214 = vsub.f32 %v1210, %v1213
        %v1215 = vmul.f32 %v1214, 1.442695
        %v1216 = vpow.pop %v1215
        %v1217 = vsel %vm633, %v1216, 0.0
        %1218 = vadd.xlane.f32.xlu0 %v1217
        %v1219 = vpop.xlane.xlu0 %1218
        %v1220 = vrcp.pop %v1219
        %v1221 = vmul.f32 %v1216, %v1220
        %1222 = vrot.lane.b32.xlu0 %v620, 40
        %v1223 = vpop.permute.xlu0 %1222
        %v1226 = vsel %vm633, %v1221, 0
        %1228 = vmatprep.subr.mxu0 0.0
        %1229 = vmatpush1.msra.mxu0 0.0
        %1230 = vmatprep.subr.mxu0 0.0
        %1231 = vmatpush1.msra.mxu0 0.0
        %1232 = vmatprep.subr.mxu0 0.0
        %1233 = vmatpush1.msra.mxu0 0.0
        %1234 = vmatprep.subr.mxu0 0.0
        %1235 = vmatpush1.msra.mxu0 0.0
        %1236 = vmatprep.subr.mxu0 0.0
        %1237 = vmatpush1.msra.mxu0 0.0
        %1238 = vmatprep.subr.mxu0 0.0
        %1239 = vmatpush1.msra.mxu0 0.0
        %1240 = vmatprep.subr.mxu0 0.0
        %1241 = vmatpush1.msra.mxu0 0.0
        %1242 = vmatprep.subr.mxu0 0.0
        %1243 = vmatpush1.msra.mxu0 0.0
        %1244 = vmatprep.subr.mxu0 0.0
        %1245 = vmatpush1.msra.mxu0 0.0
        %1246 = vmatprep.subr.mxu0 0.0
        %1247 = vmatpush1.msra.mxu0 0.0
        %1248 = vmatprep.subr.mxu0 0.0
        %1249 = vmatpush1.msra.mxu0 0.0
        %1250 = vmatprep.subr.mxu0 0.0
        %1251 = vmatpush1.msra.mxu0 0.0
        %1252 = vmatprep.subr.mxu0 0.0
        %1253 = vmatpush1.msra.mxu0 0.0
        %1254 = vmatprep.subr.mxu0 0.0
        %1255 = vmatpush1.msra.mxu0 0.0
        %1256 = vmatprep.subr.mxu0 0.0
        %1257 = vmatpush1.msra.mxu0 0.0
        %1258 = vmatprep.subr.mxu0 0.0
        %1259 = vmatpush1.msra.mxu0 %v1223
        %1260 = vmatprep.subr.mxu0 0.0
        %1261 = vmatpush2.msra.mxu0 0.0
        %1262 = vmatprep.subr.mxu0 0.0
        %1263 = vmatpush2.msra.mxu0 0.0
        %1264 = vmatprep.subr.mxu0 0.0
        %1265 = vmatpush2.msra.mxu0 0.0
        %1266 = vmatprep.subr.mxu0 0.0
        %1267 = vmatpush2.msra.mxu0 0.0
        %1268 = vmatprep.subr.mxu0 0.0
        %1269 = vmatpush2.msra.mxu0 0.0
        %1270 = vmatprep.subr.mxu0 0.0
        %1271 = vmatpush2.msra.mxu0 0.0
        %1272 = vmatprep.subr.mxu0 0.0
        %1273 = vmatpush2.msra.mxu0 0.0
        %1274 = vmatprep.subr.mxu0 0.0
        %1275 = vmatpush2.msra.mxu0 0.0
        %1276 = vmatprep.subr.mxu0 0.0
        %1277 = vmatpush2.msra.mxu0 0.0
        %1278 = vmatprep.subr.mxu0 0.0
        %1279 = vmatpush2.msra.mxu0 0.0
        %1280 = vmatprep.subr.mxu0 0.0
        %1281 = vmatpush2.msra.mxu0 0.0
        %1282 = vmatprep.subr.mxu0 0.0
        %1283 = vmatpush2.msra.mxu0 0.0
        %1284 = vmatprep.subr.mxu0 0.0
        %1285 = vmatpush2.msra.mxu0 0.0
        %1286 = vmatprep.subr.mxu0 0.0
        %1287 = vmatpush2.msra.mxu0 0.0
        %1288 = vmatprep.subr.mxu0 0.0
        %1289 = vmatpush2.msra.mxu0 0.0
        %1290 = vmatprep.subr.mxu0 0.0
        %1291 = vmatpush2.msra.mxu0 0.0
        %1292 = vmatprep.mubr.f32.mxu0 0.0
        %1293 = vmatmul.mubr.f32.gmra.mxu0 %v1226
        %v1294 = vpop.f32.mrf.mxu0
        %v1295 = vadd.f32 0.0, %v1294
        %v1296 = vpop.f32.mrf.mxu0
        %1297 = vdwg.mxu0
        %1299 = vrot.lane.b32.xlu0 %v961, 8
        %v1300 = vpop.permute.xlu0 %1299
        %1303 = vrot.lane.b32.xlu0 %v1128, 16
        %v1304 = vpop.permute.xlu0 %1303
        %1307 = vrot.lane.b32.xlu0 %v1295, 24
        %v1308 = vpop.permute.xlu0 %1307
        %v1310 = vsel %vm633, %v794, %v1300
        %vm1311 = vcmask 130048
        %v1312 = vsel %vm1311, %v1310, %v1304
        %vm1313 = vcmask 195584
        %v1314 = vsel %vm1313, %v1312, %v1308
        %v1315 = vpack.c.bf16 %v1314, %v1314
        %v1317 = vlaneseq
        %v1318 = vshrl.u32 %v1317, 7
        %v1319 = vsub.s32 0, %v1318
        %v1320 = vrot.slane %v629, %v1319
        %v1326 = vunpack.c.l.b16 %v625
        %v1327 = vunpack.c.l.b16 %v626
        %v1328 = vunpack.c.l.b16 %v627
        %v1329 = vunpack.c.l.b16 %v628
        %v1330 = vpack.c.b16 %v1327, %v1326
        %v1331 = vpack.c.b16 %v1329, %v1328
        %v1335 = vsel %vm581, %v1315, 0
        %1337 = vmatprep.subr.bf16.mxu0 0
        %1338 = vmatpush1.bf16.msra.mxu0 0
        %1339 = vmatprep.subr.bf16.mxu0 0
        %1340 = vmatpush1.bf16.msra.mxu0 0
        %1341 = vmatprep.subr.bf16.mxu0 0
        %1342 = vmatpush1.bf16.msra.mxu0 0
        %1343 = vmatprep.subr.bf16.mxu0 0
        %1344 = vmatpush1.bf16.msra.mxu0 0
        %1345 = vmatprep.subr.bf16.mxu0 0
        %1346 = vmatpush1.bf16.msra.mxu0 0
        %1347 = vmatprep.subr.bf16.mxu0 0
        %1348 = vmatpush1.bf16.msra.mxu0 0
        %1349 = vmatprep.subr.bf16.mxu0 0
        %1350 = vmatpush1.bf16.msra.mxu0 %v1331
        %1351 = vmatprep.subr.bf16.mxu0 0
        %1352 = vmatpush1.bf16.msra.mxu0 %v1330
        %1353 = vmatprep.subr.bf16.mxu0 0
        %1354 = vmatpush2.bf16.msra.mxu0 0
        %1355 = vmatprep.subr.bf16.mxu0 0
        %1356 = vmatpush2.bf16.msra.mxu0 0
        %1357 = vmatprep.subr.bf16.mxu0 0
        %1358 = vmatpush2.bf16.msra.mxu0 0
        %1359 = vmatprep.subr.bf16.mxu0 0
        %1360 = vmatpush2.bf16.msra.mxu0 0
        %1361 = vmatprep.subr.bf16.mxu0 0
        %1362 = vmatpush2.bf16.msra.mxu0 0
        %1363 = vmatprep.subr.bf16.mxu0 0
        %1364 = vmatpush2.bf16.msra.mxu0 0
        %1365 = vmatprep.subr.bf16.mxu0 0
        %1366 = vmatpush2.bf16.msra.mxu0 0
        %1367 = vmatprep.subr.bf16.mxu0 0
        %1368 = vmatpush2.bf16.msra.mxu0 0
        %1369 = vmatprep.mubr.bf16.mxu0 0
        %1370 = vmatmul.mubr.bf16.gmra.mxu0 %v1335
        %v1371 = vpop.f32.mrf.mxu0
        %v1372 = vadd.f32 %v1320, %v1371
        %v1373 = vpop.f32.mrf.mxu0
        %v1374 = vpop.f32.mrf.mxu0
        %v1375 = vpop.f32.mrf.mxu0
        %1376 = vdwg.mxu0
        %v1377 = vadd.f32 %v552, %v1372
        %v1378 = vld [vmem:[%s12] sm:$0x1]
        %v1379 = vld [vmem:[%s13] sm:$0x1]
        %v1380 = vsel %vm581, %v1377, 0.0
        %1381 = vadd.xlane.f32.xlu0 %v1380
        %v1382 = vpop.xlane.xlu0 %1381
        %v1383 = vrcp.pop 32.0
        %v1384 = vmul.f32 %v1382, %v1383
        %v1385 = vsub.f32 %v1377, %v1384
        %v1386 = vmul.f32 %v1385, %v1385
        %v1387 = vsel %vm581, %v1386, 0.0
        %1388 = vadd.xlane.f32.xlu0 %v1387
        %v1389 = vpop.xlane.xlu0 %1388
        %v1390 = vmul.f32 %v1389, %v1383
        %v1391 = vadd.f32 %v1390, 1e-05
        %v1392 = vrsqrt.pop %v1391
        %v1393 = vmul.f32 %v1385, %v1392
        %v1395 = vlaneseq
        %v1396 = vshrl.u32 %v1395, 7
        %v1397 = vsub.s32 0, %v1396
        %v1398 = vrot.slane %v1378, %v1397
        %v1400 = vmul.f32 %v1393, %v1398
        %v1402 = vlaneseq
        %v1403 = vshrl.u32 %v1402, 7
        %v1404 = vsub.s32 0, %v1403
        %v1405 = vrot.slane %v1379, %v1404
        %v1407 = vadd.f32 %v1400, %v1405
        %s1408 = scalar_lea.vmem %s4, 16
        %v1409 = vld [vmem:[%s1408] sm:$0xf]
        %v1410 = vld [vmem:[%s1408 + $0x4] sm:$0xf]
        %v1411 = vld [vmem:[%s1408 + $0x8] sm:$0xf]
        %v1412 = vld [vmem:[%s1408 + $0xc] sm:$0xf]
        %s1413 = scalar_lea.vmem %s5, 1
        %v1414 = vld [vmem:[%s1413] sm:$0x1]
        %v1415 = vpack.c.bf16 %v1407, %v1407
        %v1417 = vlaneseq
        %v1418 = vshrl.u32 %v1417, 7
        %v1419 = vsub.s32 0, %v1418
        %v1420 = vrot.slane %v1414, %v1419
        %v1426 = vunpack.c.l.b16 %v1409
        %v1427 = vunpack.c.l.b16 %v1410
        %v1428 = vunpack.c.l.b16 %v1411
        %v1429 = vunpack.c.l.b16 %v1412
        %v1430 = vpack.c.b16 %v1427, %v1426
        %v1431 = vpack.c.b16 %v1429, %v1428
        %v1435 = vsel %vm581, %v1415, 0
        %1437 = vmatprep.subr.bf16.mxu0 0
        %1438 = vmatpush1.bf16.msra.mxu0 0
        %1439 = vmatprep.subr.bf16.mxu0 0
        %1440 = vmatpush1.bf16.msra.mxu0 0
        %1441 = vmatprep.subr.bf16.mxu0 0
        %1442 = vmatpush1.bf16.msra.mxu0 0
        %1443 = vmatprep.subr.bf16.mxu0 0
        %1444 = vmatpush1.bf16.msra.mxu0 0
        %1445 = vmatprep.subr.bf16.mxu0 0
        %1446 = vmatpush1.bf16.msra.mxu0 0
        %1447 = vmatprep.subr.bf16.mxu0 0
        %1448 = vmatpush1.bf16.msra.mxu0 0
        %1449 = vmatprep.subr.bf16.mxu0 0
        %1450 = vmatpush1.bf16.msra.mxu0 %v1431
        %1451 = vmatprep.subr.bf16.mxu0 0
        %1452 = vmatpush1.bf16.msra.mxu0 %v1430
        %1453 = vmatprep.subr.bf16.mxu0 0
        %1454 = vmatpush2.bf16.msra.mxu0 0
        %1455 = vmatprep.subr.bf16.mxu0 0
        %1456 = vmatpush2.bf16.msra.mxu0 0
        %1457 = vmatprep.subr.bf16.mxu0 0
        %1458 = vmatpush2.bf16.msra.mxu0 0
        %1459 = vmatprep.subr.bf16.mxu0 0
        %1460 = vmatpush2.bf16.msra.mxu0 0
        %1461 = vmatprep.subr.bf16.mxu0 0
        %1462 = vmatpush2.bf16.msra.mxu0 0
        %1463 = vmatprep.subr.bf16.mxu0 0
        %1464 = vmatpush2.bf16.msra.mxu0 0
        %1465 = vmatprep.subr.bf16.mxu0 0
        %1466 = vmatpush2.bf16.msra.mxu0 0
        %1467 = vmatprep.subr.bf16.mxu0 0
        %1468 = vmatpush2.bf16.msra.mxu0 0
        %1469 = vmatprep.mubr.bf16.mxu0 0
        %1470 = vmatmul.mubr.bf16.gmra.mxu0 %v1435
        %v1471 = vpop.f32.mrf.mxu0
        %v1472 = vadd.f32 %v1420, %v1471
        %v1473 = vpop.f32.mrf.mxu0
        %v1474 = vpop.f32.mrf.mxu0
        %v1475 = vpop.f32.mrf.mxu0
        %1476 = vdwg.mxu0
        %v1477 = vpack.c.bf16 %v554, %v553
        %1478 = vrot.lane.b32.xlu0 %v1430, 96
        %v1479 = vpop.permute.xlu0 %1478
        %1480 = vrot.lane.b32.xlu0 %v1431, 96
        %v1481 = vpop.permute.xlu0 %1480
        %1484 = vrot.lane.b32.xlu0 %v1420, 96
        %v1485 = vpop.permute.xlu0 %1484
        %v1488 = vsel %vm581, %v1477, 0
        %1490 = vmatprep.subr.bf16.mxu0 0
        %1491 = vmatpush1.bf16.msra.mxu0 0
        %1492 = vmatprep.subr.bf16.mxu0 0
        %1493 = vmatpush1.bf16.msra.mxu0 0
        %1494 = vmatprep.subr.bf16.mxu0 0
        %1495 = vmatpush1.bf16.msra.mxu0 0
        %1496 = vmatprep.subr.bf16.mxu0 0
        %1497 = vmatpush1.bf16.msra.mxu0 0
        %1498 = vmatprep.subr.bf16.mxu0 0
        %1499 = vmatpush1.bf16.msra.mxu0 0
        %1500 = vmatprep.subr.bf16.mxu0 0
        %1501 = vmatpush1.bf16.msra.mxu0 0
        %1502 = vmatprep.subr.bf16.mxu0 0
        %1503 = vmatpush1.bf16.msra.mxu0 %v1481
        %1504 = vmatprep.subr.bf16.mxu0 0
        %1505 = vmatpush1.bf16.msra.mxu0 %v1479
        %1506 = vmatprep.subr.bf16.mxu0 0
        %1507 = vmatpush2.bf16.msra.mxu0 0
        %1508 = vmatprep.subr.bf16.mxu0 0
        %1509 = vmatpush2.bf16.msra.mxu0 0
        %1510 = vmatprep.subr.bf16.mxu0 0
        %1511 = vmatpush2.bf16.msra.mxu0 0
        %1512 = vmatprep.subr.bf16.mxu0 0
        %1513 = vmatpush2.bf16.msra.mxu0 0
        %1514 = vmatprep.subr.bf16.mxu0 0
        %1515 = vmatpush2.bf16.msra.mxu0 0
        %1516 = vmatprep.subr.bf16.mxu0 0
        %1517 = vmatpush2.bf16.msra.mxu0 0
        %1518 = vmatprep.subr.bf16.mxu0 0
        %1519 = vmatpush2.bf16.msra.mxu0 0
        %1520 = vmatprep.subr.bf16.mxu0 0
        %1521 = vmatpush2.bf16.msra.mxu0 0
        %1522 = vmatprep.mubr.bf16.mxu0 0
        %1523 = vmatmul.mubr.bf16.gmra.mxu0 %v1488
        %v1524 = vpop.f32.mrf.mxu0
        %v1525 = vadd.f32 %v1485, %v1524
        %v1526 = vpop.f32.mrf.mxu0
        %v1527 = vpop.f32.mrf.mxu0
        %v1528 = vadd.f32 %v1485, %v1527
        %v1529 = vpop.f32.mrf.mxu0
        %1530 = vdwg.mxu0
        %s1531 = scalar_lea.vmem %s6, 16
        %v1532 = vld [vmem:[%s1531] sm:$0xf]
        %v1533 = vld [vmem:[%s1531 + $0x4] sm:$0xf]
        %v1534 = vld [vmem:[%s1531 + $0x8] sm:$0xf]
        %v1535 = vld [vmem:[%s1531 + $0xc] sm:$0xf]
        %s1536 = scalar_lea.vmem %s7, 1
        %v1537 = vld [vmem:[%s1536] sm:$0x1]
        %v1539 = vsel %vm633, %v1472, 0
        %v1542 = vsel %vm633, %v1525, 0
        %v1545 = vsel %vm633, %v1528, 0
        %1547 = vmatprep.subr.mxu0 0.0
        %1548 = vmatpush1.xpose.msra.mxu0 0.0
        %1549 = vmatprep.subr.mxu0 0.0
        %1550 = vmatpush1.xpose.msra.mxu0 0.0
        %1551 = vmatprep.subr.mxu0 0.0
        %1552 = vmatpush1.xpose.msra.mxu0 0.0
        %1553 = vmatprep.subr.mxu0 0.0
        %1554 = vmatpush1.xpose.msra.mxu0 0.0
        %1555 = vmatprep.subr.mxu0 0.0
        %1556 = vmatpush1.xpose.msra.mxu0 0.0
        %1557 = vmatprep.subr.mxu0 0.0
        %1558 = vmatpush1.xpose.msra.mxu0 0.0
        %1559 = vmatprep.subr.mxu0 0.0
        %1560 = vmatpush1.xpose.msra.mxu0 0.0
        %1561 = vmatprep.subr.mxu0 0.0
        %1562 = vmatpush1.xpose.msra.mxu0 0.0
        %1563 = vmatprep.subr.mxu0 0.0
        %1564 = vmatpush1.xpose.msra.mxu0 0.0
        %1565 = vmatprep.subr.mxu0 0.0
        %1566 = vmatpush1.xpose.msra.mxu0 0.0
        %1567 = vmatprep.subr.mxu0 0.0
        %1568 = vmatpush1.xpose.msra.mxu0 0.0
        %1569 = vmatprep.subr.mxu0 0.0
        %1570 = vmatpush1.xpose.msra.mxu0 0.0
        %1571 = vmatprep.subr.mxu0 0.0
        %1572 = vmatpush1.xpose.msra.mxu0 0.0
        %1573 = vmatprep.subr.mxu0 0.0
        %1574 = vmatpush1.xpose.msra.mxu0 0.0
        %1575 = vmatprep.subr.mxu0 0.0
        %1576 = vmatpush1.xpose.msra.mxu0 %v1545
        %1577 = vmatprep.subr.mxu0 0.0
        %1578 = vmatpush1.xpose.msra.mxu0 %v1542
        %1579 = vmatprep.subr.mxu0 0.0
        %1580 = vmatpush2.xpose.msra.mxu0 0.0
        %1581 = vmatprep.subr.mxu0 0.0
        %1582 = vmatpush2.xpose.msra.mxu0 0.0
        %1583 = vmatprep.subr.mxu0 0.0
        %1584 = vmatpush2.xpose.msra.mxu0 0.0
        %1585 = vmatprep.subr.mxu0 0.0
        %1586 = vmatpush2.xpose.msra.mxu0 0.0
        %1587 = vmatprep.subr.mxu0 0.0
        %1588 = vmatpush2.xpose.msra.mxu0 0.0
        %1589 = vmatprep.subr.mxu0 0.0
        %1590 = vmatpush2.xpose.msra.mxu0 0.0
        %1591 = vmatprep.subr.mxu0 0.0
        %1592 = vmatpush2.xpose.msra.mxu0 0.0
        %1593 = vmatprep.subr.mxu0 0.0
        %1594 = vmatpush2.xpose.msra.mxu0 0.0
        %1595 = vmatprep.subr.mxu0 0.0
        %1596 = vmatpush2.xpose.msra.mxu0 0.0
        %1597 = vmatprep.subr.mxu0 0.0
        %1598 = vmatpush2.xpose.msra.mxu0 0.0
        %1599 = vmatprep.subr.mxu0 0.0
        %1600 = vmatpush2.xpose.msra.mxu0 0.0
        %1601 = vmatprep.subr.mxu0 0.0
        %1602 = vmatpush2.xpose.msra.mxu0 0.0
        %1603 = vmatprep.subr.mxu0 0.0
        %1604 = vmatpush2.xpose.msra.mxu0 0.0
        %1605 = vmatprep.subr.mxu0 0.0
        %1606 = vmatpush2.xpose.msra.mxu0 0.0
        %1607 = vmatprep.subr.mxu0 0.0
        %1608 = vmatpush2.xpose.msra.mxu0 0.0
        %1609 = vmatprep.subr.mxu0 0.0
        %1610 = vmatpush2.xpose.msra.mxu0 0.0
        %1611 = vmatprep.mubr.f32.mxu0 0.0
        %1612 = vmatmul.mubr.f32.gmra.mxu0 %v1539
        %v1613 = vpop.f32.mrf.mxu0
        %v1614 = vadd.f32 0.0, %v1613
        %v1615 = vpop.f32.mrf.mxu0
        %1616 = vdwg.mxu0
        %v1617 = vmul.f32 %v1614, 0.35355338
        %v1619 = vlaneseq
        %v1620 = vshrl.u32 %v1619, 7
        %v1621 = vsub.s32 0, %v1620
        %v1622 = vrot.slane %v556, %v1621
        %v1624 = vadd.f32 %v1617, %v1622
        %vm1625 = vcmask 80896
        %v1626 = vsel %vm1625, %v1624, -inf
        %1627 = vmax.xlane.f32.xlu0 %v1626
        %v1628 = vpop.xlane.xlu0 %1627
        %v1629 = vsub.f32 %v1624, %v1628
        %v1630 = vmul.f32 %v1629, 1.442695
        %v1631 = vpow.pop %v1630
        %v1632 = vsel %vm1625, %v1631, 0.0
        %1633 = vadd.xlane.f32.xlu0 %v1632
        %v1634 = vpop.xlane.xlu0 %1633
        %v1635 = vrcp.pop %v1634
        %v1636 = vmul.f32 %v1631, %v1635
        %1637 = vrot.lane.b32.xlu0 %v1525, 96
        %v1638 = vpop.permute.xlu0 %1637
        %1639 = vrot.lane.b32.xlu0 %v1528, 96
        %v1640 = vpop.permute.xlu0 %1639
        %v1643 = vsel %vm1625, %v1636, 0
        %vm1645 = vcmask 1041408
        %v1646 = vsel %vm1645, %v1640, 0
        %1648 = vmatprep.subr.mxu0 0.0
        %1649 = vmatpush1.msra.mxu0 0.0
        %1650 = vmatprep.subr.mxu0 0.0
        %1651 = vmatpush1.msra.mxu0 0.0
        %1652 = vmatprep.subr.mxu0 0.0
        %1653 = vmatpush1.msra.mxu0 0.0
        %1654 = vmatprep.subr.mxu0 0.0
        %1655 = vmatpush1.msra.mxu0 0.0
        %1656 = vmatprep.subr.mxu0 0.0
        %1657 = vmatpush1.msra.mxu0 0.0
        %1658 = vmatprep.subr.mxu0 0.0
        %1659 = vmatpush1.msra.mxu0 0.0
        %1660 = vmatprep.subr.mxu0 0.0
        %1661 = vmatpush1.msra.mxu0 0.0
        %1662 = vmatprep.subr.mxu0 0.0
        %1663 = vmatpush1.msra.mxu0 0.0
        %1664 = vmatprep.subr.mxu0 0.0
        %1665 = vmatpush1.msra.mxu0 0.0
        %1666 = vmatprep.subr.mxu0 0.0
        %1667 = vmatpush1.msra.mxu0 0.0
        %1668 = vmatprep.subr.mxu0 0.0
        %1669 = vmatpush1.msra.mxu0 0.0
        %1670 = vmatprep.subr.mxu0 0.0
        %1671 = vmatpush1.msra.mxu0 0.0
        %1672 = vmatprep.subr.mxu0 0.0
        %1673 = vmatpush1.msra.mxu0 0.0
        %1674 = vmatprep.subr.mxu0 0.0
        %1675 = vmatpush1.msra.mxu0 0.0
        %1676 = vmatprep.subr.mxu0 0.0
        %1677 = vmatpush1.msra.mxu0 %v1646
        %1678 = vmatprep.subr.mxu0 0.0
        %1679 = vmatpush1.msra.mxu0 %v1638
        %1680 = vmatprep.subr.mxu0 0.0
        %1681 = vmatpush2.msra.mxu0 0.0
        %1682 = vmatprep.subr.mxu0 0.0
        %1683 = vmatpush2.msra.mxu0 0.0
        %1684 = vmatprep.subr.mxu0 0.0
        %1685 = vmatpush2.msra.mxu0 0.0
        %1686 = vmatprep.subr.mxu0 0.0
        %1687 = vmatpush2.msra.mxu0 0.0
        %1688 = vmatprep.subr.mxu0 0.0
        %1689 = vmatpush2.msra.mxu0 0.0
        %1690 = vmatprep.subr.mxu0 0.0
        %1691 = vmatpush2.msra.mxu0 0.0
        %1692 = vmatprep.subr.mxu0 0.0
        %1693 = vmatpush2.msra.mxu0 0.0
        %1694 = vmatprep.subr.mxu0 0.0
        %1695 = vmatpush2.msra.mxu0 0.0
        %1696 = vmatprep.subr.mxu0 0.0
        %1697 = vmatpush2.msra.mxu0 0.0
        %1698 = vmatprep.subr.mxu0 0.0
        %1699 = vmatpush2.msra.mxu0 0.0
        %1700 = vmatprep.subr.mxu0 0.0
        %1701 = vmatpush2.msra.mxu0 0.0
        %1702 = vmatprep.subr.mxu0 0.0
        %1703 = vmatpush2.msra.mxu0 0.0
        %1704 = vmatprep.subr.mxu0 0.0
        %1705 = vmatpush2.msra.mxu0 0.0
        %1706 = vmatprep.subr.mxu0 0.0
        %1707 = vmatpush2.msra.mxu0 0.0
        %1708 = vmatprep.subr.mxu0 0.0
        %1709 = vmatpush2.msra.mxu0 0.0
        %1710 = vmatprep.subr.mxu0 0.0
        %1711 = vmatpush2.msra.mxu0 0.0
        %1712 = vmatprep.mubr.f32.mxu0 0.0
        %1713 = vmatmul.mubr.f32.gmra.mxu0 %v1643
        %v1714 = vpop.f32.mrf.mxu0
        %v1715 = vadd.f32 0.0, %v1714
        %v1716 = vpop.f32.mrf.mxu0
        %1717 = vdwg.mxu0
        %1718 = vrot.lane.b32.xlu0 %v1472, 120
        %v1719 = vpop.permute.xlu0 %1718
        %1720 = vrot.lane.b32.xlu0 %v1525, 120
        %v1721 = vpop.permute.xlu0 %1720
        %1722 = vrot.lane.b32.xlu0 %v1528, 120
        %v1723 = vpop.permute.xlu0 %1722
        %v1724 = vsel %vm633, %v1719, 0
        %v1726 = vsel %vm633, %v1721, 0
        %v1728 = vsel %vm633, %v1723, 0
        %1730 = vmatprep.subr.mxu0 0.0
        %1731 = vmatpush1.xpose.msra.mxu0 0.0
        %1732 = vmatprep.subr.mxu0 0.0
        %1733 = vmatpush1.xpose.msra.mxu0 0.0
        %1734 = vmatprep.subr.mxu0 0.0
        %1735 = vmatpush1.xpose.msra.mxu0 0.0
        %1736 = vmatprep.subr.mxu0 0.0
        %1737 = vmatpush1.xpose.msra.mxu0 0.0
        %1738 = vmatprep.subr.mxu0 0.0
        %1739 = vmatpush1.xpose.msra.mxu0 0.0
        %1740 = vmatprep.subr.mxu0 0.0
        %1741 = vmatpush1.xpose.msra.mxu0 0.0
        %1742 = vmatprep.subr.mxu0 0.0
        %1743 = vmatpush1.xpose.msra.mxu0 0.0
        %1744 = vmatprep.subr.mxu0 0.0
        %1745 = vmatpush1.xpose.msra.mxu0 0.0
        %1746 = vmatprep.subr.mxu0 0.0
        %1747 = vmatpush1.xpose.msra.mxu0 0.0
        %1748 = vmatprep.subr.mxu0 0.0
        %1749 = vmatpush1.xpose.msra.mxu0 0.0
        %1750 = vmatprep.subr.mxu0 0.0
        %1751 = vmatpush1.xpose.msra.mxu0 0.0
        %1752 = vmatprep.subr.mxu0 0.0
        %1753 = vmatpush1.xpose.msra.mxu0 0.0
        %1754 = vmatprep.subr.mxu0 0.0
        %1755 = vmatpush1.xpose.msra.mxu0 0.0
        %1756 = vmatprep.subr.mxu0 0.0
        %1757 = vmatpush1.xpose.msra.mxu0 0.0
        %1758 = vmatprep.subr.mxu0 0.0
        %1759 = vmatpush1.xpose.msra.mxu0 %v1728
        %1760 = vmatprep.subr.mxu0 0.0
        %1761 = vmatpush1.xpose.msra.mxu0 %v1726
        %1762 = vmatprep.subr.mxu0 0.0
        %1763 = vmatpush2.xpose.msra.mxu0 0.0
        %1764 = vmatprep.subr.mxu0 0.0
        %1765 = vmatpush2.xpose.msra.mxu0 0.0
        %1766 = vmatprep.subr.mxu0 0.0
        %1767 = vmatpush2.xpose.msra.mxu0 0.0
        %1768 = vmatprep.subr.mxu0 0.0
        %1769 = vmatpush2.xpose.msra.mxu0 0.0
        %1770 = vmatprep.subr.mxu0 0.0
        %1771 = vmatpush2.xpose.msra.mxu0 0.0
        %1772 = vmatprep.subr.mxu0 0.0
        %1773 = vmatpush2.xpose.msra.mxu0 0.0
        %1774 = vmatprep.subr.mxu0 0.0
        %1775 = vmatpush2.xpose.msra.mxu0 0.0
        %1776 = vmatprep.subr.mxu0 0.0
        %1777 = vmatpush2.xpose.msra.mxu0 0.0
        %1778 = vmatprep.subr.mxu0 0.0
        %1779 = vmatpush2.xpose.msra.mxu0 0.0
        %1780 = vmatprep.subr.mxu0 0.0
        %1781 = vmatpush2.xpose.msra.mxu0 0.0
        %1782 = vmatprep.subr.mxu0 0.0
        %1783 = vmatpush2.xpose.msra.mxu0 0.0
        %1784 = vmatprep.subr.mxu0 0.0
        %1785 = vmatpush2.xpose.msra.mxu0 0.0
        %1786 = vmatprep.subr.mxu0 0.0
        %1787 = vmatpush2.xpose.msra.mxu0 0.0
        %1788 = vmatprep.subr.mxu0 0.0
        %1789 = vmatpush2.xpose.msra.mxu0 0.0
        %1790 = vmatprep.subr.mxu0 0.0
        %1791 = vmatpush2.xpose.msra.mxu0 0.0
        %1792 = vmatprep.subr.mxu0 0.0
        %1793 = vmatpush2.xpose.msra.mxu0 0.0
        %1794 = vmatprep.mubr.f32.mxu0 0.0
        %1795 = vmatmul.mubr.f32.gmra.mxu0 %v1724
        %v1796 = vpop.f32.mrf.mxu0
        %v1797 = vadd.f32 0.0, %v1796
        %v1798 = vpop.f32.mrf.mxu0
        %1799 = vdwg.mxu0
        %v1800 = vmul.f32 %v1797, 0.35355338
        %v1801 = vadd.f32 %v1800, %v1622
        %v1802 = vsel %vm1625, %v1801, -inf
        %1803 = vmax.xlane.f32.xlu0 %v1802
        %v1804 = vpop.xlane.xlu0 %1803
        %v1805 = vsub.f32 %v1801, %v1804
        %v1806 = vmul.f32 %v1805, 1.442695
        %v1807 = vpow.pop %v1806
        %v1808 = vsel %vm1625, %v1807, 0.0
        %1809 = vadd.xlane.f32.xlu0 %v1808
        %v1810 = vpop.xlane.xlu0 %1809
        %v1811 = vrcp.pop %v1810
        %v1812 = vmul.f32 %v1807, %v1811
        %1813 = vrot.lane.b32.xlu0 %v1525, 88
        %v1814 = vpop.permute.xlu0 %1813
        %1815 = vrot.lane.b32.xlu0 %v1528, 88
        %v1816 = vpop.permute.xlu0 %1815
        %v1819 = vsel %vm1625, %v1812, 0
        %v1821 = vsel %vm1645, %v1816, 0
        %1823 = vmatprep.subr.mxu0 0.0
        %1824 = vmatpush1.msra.mxu0 0.0
        %1825 = vmatprep.subr.mxu0 0.0
        %1826 = vmatpush1.msra.mxu0 0.0
        %1827 = vmatprep.subr.mxu0 0.0
        %1828 = vmatpush1.msra.mxu0 0.0
        %1829 = vmatprep.subr.mxu0 0.0
        %1830 = vmatpush1.msra.mxu0 0.0
        %1831 = vmatprep.subr.mxu0 0.0
        %1832 = vmatpush1.msra.mxu0 0.0
        %1833 = vmatprep.subr.mxu0 0.0
        %1834 = vmatpush1.msra.mxu0 0.0
        %1835 = vmatprep.subr.mxu0 0.0
        %1836 = vmatpush1.msra.mxu0 0.0
        %1837 = vmatprep.subr.mxu0 0.0
        %1838 = vmatpush1.msra.mxu0 0.0
        %1839 = vmatprep.subr.mxu0 0.0
        %1840 = vmatpush1.msra.mxu0 0.0
        %1841 = vmatprep.subr.mxu0 0.0
        %1842 = vmatpush1.msra.mxu0 0.0
        %1843 = vmatprep.subr.mxu0 0.0
        %1844 = vmatpush1.msra.mxu0 0.0
        %1845 = vmatprep.subr.mxu0 0.0
        %1846 = vmatpush1.msra.mxu0 0.0
        %1847 = vmatprep.subr.mxu0 0.0
        %1848 = vmatpush1.msra.mxu0 0.0
        %1849 = vmatprep.subr.mxu0 0.0
        %1850 = vmatpush1.msra.mxu0 0.0
        %1851 = vmatprep.subr.mxu0 0.0
        %1852 = vmatpush1.msra.mxu0 %v1821
        %1853 = vmatprep.subr.mxu0 0.0
        %1854 = vmatpush1.msra.mxu0 %v1814
        %1855 = vmatprep.subr.mxu0 0.0
        %1856 = vmatpush2.msra.mxu0 0.0
        %1857 = vmatprep.subr.mxu0 0.0
        %1858 = vmatpush2.msra.mxu0 0.0
        %1859 = vmatprep.subr.mxu0 0.0
        %1860 = vmatpush2.msra.mxu0 0.0
        %1861 = vmatprep.subr.mxu0 0.0
        %1862 = vmatpush2.msra.mxu0 0.0
        %1863 = vmatprep.subr.mxu0 0.0
        %1864 = vmatpush2.msra.mxu0 0.0
        %1865 = vmatprep.subr.mxu0 0.0
        %1866 = vmatpush2.msra.mxu0 0.0
        %1867 = vmatprep.subr.mxu0 0.0
        %1868 = vmatpush2.msra.mxu0 0.0
        %1869 = vmatprep.subr.mxu0 0.0
        %1870 = vmatpush2.msra.mxu0 0.0
        %1871 = vmatprep.subr.mxu0 0.0
        %1872 = vmatpush2.msra.mxu0 0.0
        %1873 = vmatprep.subr.mxu0 0.0
        %1874 = vmatpush2.msra.mxu0 0.0
        %1875 = vmatprep.subr.mxu0 0.0
        %1876 = vmatpush2.msra.mxu0 0.0
        %1877 = vmatprep.subr.mxu0 0.0
        %1878 = vmatpush2.msra.mxu0 0.0
        %1879 = vmatprep.subr.mxu0 0.0
        %1880 = vmatpush2.msra.mxu0 0.0
        %1881 = vmatprep.subr.mxu0 0.0
        %1882 = vmatpush2.msra.mxu0 0.0
        %1883 = vmatprep.subr.mxu0 0.0
        %1884 = vmatpush2.msra.mxu0 0.0
        %1885 = vmatprep.subr.mxu0 0.0
        %1886 = vmatpush2.msra.mxu0 0.0
        %1887 = vmatprep.mubr.f32.mxu0 0.0
        %1888 = vmatmul.mubr.f32.gmra.mxu0 %v1819
        %v1889 = vpop.f32.mrf.mxu0
        %v1890 = vadd.f32 0.0, %v1889
        %v1891 = vpop.f32.mrf.mxu0
        %1892 = vdwg.mxu0
        %1893 = vrot.lane.b32.xlu0 %v1472, 112
        %v1894 = vpop.permute.xlu0 %1893
        %1895 = vrot.lane.b32.xlu0 %v1525, 112
        %v1896 = vpop.permute.xlu0 %1895
        %1897 = vrot.lane.b32.xlu0 %v1528, 112
        %v1898 = vpop.permute.xlu0 %1897
        %v1899 = vsel %vm633, %v1894, 0
        %v1901 = vsel %vm633, %v1896, 0
        %v1903 = vsel %vm633, %v1898, 0
        %1905 = vmatprep.subr.mxu0 0.0
        %1906 = vmatpush1.xpose.msra.mxu0 0.0
        %1907 = vmatprep.subr.mxu0 0.0
        %1908 = vmatpush1.xpose.msra.mxu0 0.0
        %1909 = vmatprep.subr.mxu0 0.0
        %1910 = vmatpush1.xpose.msra.mxu0 0.0
        %1911 = vmatprep.subr.mxu0 0.0
        %1912 = vmatpush1.xpose.msra.mxu0 0.0
        %1913 = vmatprep.subr.mxu0 0.0
        %1914 = vmatpush1.xpose.msra.mxu0 0.0
        %1915 = vmatprep.subr.mxu0 0.0
        %1916 = vmatpush1.xpose.msra.mxu0 0.0
        %1917 = vmatprep.subr.mxu0 0.0
        %1918 = vmatpush1.xpose.msra.mxu0 0.0
        %1919 = vmatprep.subr.mxu0 0.0
        %1920 = vmatpush1.xpose.msra.mxu0 0.0
        %1921 = vmatprep.subr.mxu0 0.0
        %1922 = vmatpush1.xpose.msra.mxu0 0.0
        %1923 = vmatprep.subr.mxu0 0.0
        %1924 = vmatpush1.xpose.msra.mxu0 0.0
        %1925 = vmatprep.subr.mxu0 0.0
        %1926 = vmatpush1.xpose.msra.mxu0 0.0
        %1927 = vmatprep.subr.mxu0 0.0
        %1928 = vmatpush1.xpose.msra.mxu0 0.0
        %1929 = vmatprep.subr.mxu0 0.0
        %1930 = vmatpush1.xpose.msra.mxu0 0.0
        %1931 = vmatprep.subr.mxu0 0.0
        %1932 = vmatpush1.xpose.msra.mxu0 0.0
        %1933 = vmatprep.subr.mxu0 0.0
        %1934 = vmatpush1.xpose.msra.mxu0 %v1903
        %1935 = vmatprep.subr.mxu0 0.0
        %1936 = vmatpush1.xpose.msra.mxu0 %v1901
        %1937 = vmatprep.subr.mxu0 0.0
        %1938 = vmatpush2.xpose.msra.mxu0 0.0
        %1939 = vmatprep.subr.mxu0 0.0
        %1940 = vmatpush2.xpose.msra.mxu0 0.0
        %1941 = vmatprep.subr.mxu0 0.0
        %1942 = vmatpush2.xpose.msra.mxu0 0.0
        %1943 = vmatprep.subr.mxu0 0.0
        %1944 = vmatpush2.xpose.msra.mxu0 0.0
        %1945 = vmatprep.subr.mxu0 0.0
        %1946 = vmatpush2.xpose.msra.mxu0 0.0
        %1947 = vmatprep.subr.mxu0 0.0
        %1948 = vmatpush2.xpose.msra.mxu0 0.0
        %1949 = vmatprep.subr.mxu0 0.0
        %1950 = vmatpush2.xpose.msra.mxu0 0.0
        %1951 = vmatprep.subr.mxu0 0.0
        %1952 = vmatpush2.xpose.msra.mxu0 0.0
        %1953 = vmatprep.subr.mxu0 0.0
        %1954 = vmatpush2.xpose.msra.mxu0 0.0
        %1955 = vmatprep.subr.mxu0 0.0
        %1956 = vmatpush2.xpose.msra.mxu0 0.0
        %1957 = vmatprep.subr.mxu0 0.0
        %1958 = vmatpush2.xpose.msra.mxu0 0.0
        %1959 = vmatprep.subr.mxu0 0.0
        %1960 = vmatpush2.xpose.msra.mxu0 0.0
        %1961 = vmatprep.subr.mxu0 0.0
        %1962 = vmatpush2.xpose.msra.mxu0 0.0
        %1963 = vmatprep.subr.mxu0 0.0
        %1964 = vmatpush2.xpose.msra.mxu0 0.0
        %1965 = vmatprep.subr.mxu0 0.0
        %1966 = vmatpush2.xpose.msra.mxu0 0.0
        %1967 = vmatprep.subr.mxu0 0.0
        %1968 = vmatpush2.xpose.msra.mxu0 0.0
        %1969 = vmatprep.mubr.f32.mxu0 0.0
        %1970 = vmatmul.mubr.f32.gmra.mxu0 %v1899
        %v1971 = vpop.f32.mrf.mxu0
        %v1972 = vadd.f32 0.0, %v1971
        %v1973 = vpop.f32.mrf.mxu0
        %1974 = vdwg.mxu0
        %v1975 = vmul.f32 %v1972, 0.35355338
        %v1976 = vadd.f32 %v1975, %v1622
        %v1977 = vsel %vm1625, %v1976, -inf
        %1978 = vmax.xlane.f32.xlu0 %v1977
        %v1979 = vpop.xlane.xlu0 %1978
        %v1980 = vsub.f32 %v1976, %v1979
        %v1981 = vmul.f32 %v1980, 1.442695
        %v1982 = vpow.pop %v1981
        %v1983 = vsel %vm1625, %v1982, 0.0
        %1984 = vadd.xlane.f32.xlu0 %v1983
        %v1985 = vpop.xlane.xlu0 %1984
        %v1986 = vrcp.pop %v1985
        %v1987 = vmul.f32 %v1982, %v1986
        %1988 = vrot.lane.b32.xlu0 %v1525, 80
        %v1989 = vpop.permute.xlu0 %1988
        %1990 = vrot.lane.b32.xlu0 %v1528, 80
        %v1991 = vpop.permute.xlu0 %1990
        %v1994 = vsel %vm1625, %v1987, 0
        %v1996 = vsel %vm1645, %v1991, 0
        %1998 = vmatprep.subr.mxu0 0.0
        %1999 = vmatpush1.msra.mxu0 0.0
        %2000 = vmatprep.subr.mxu0 0.0
        %2001 = vmatpush1.msra.mxu0 0.0
        %2002 = vmatprep.subr.mxu0 0.0
        %2003 = vmatpush1.msra.mxu0 0.0
        %2004 = vmatprep.subr.mxu0 0.0
        %2005 = vmatpush1.msra.mxu0 0.0
        %2006 = vmatprep.subr.mxu0 0.0
        %2007 = vmatpush1.msra.mxu0 0.0
        %2008 = vmatprep.subr.mxu0 0.0
        %2009 = vmatpush1.msra.mxu0 0.0
        %2010 = vmatprep.subr.mxu0 0.0
        %2011 = vmatpush1.msra.mxu0 0.0
        %2012 = vmatprep.subr.mxu0 0.0
        %2013 = vmatpush1.msra.mxu0 0.0
        %2014 = vmatprep.subr.mxu0 0.0
        %2015 = vmatpush1.msra.mxu0 0.0
        %2016 = vmatprep.subr.mxu0 0.0
        %2017 = vmatpush1.msra.mxu0 0.0
        %2018 = vmatprep.subr.mxu0 0.0
        %2019 = vmatpush1.msra.mxu0 0.0
        %2020 = vmatprep.subr.mxu0 0.0
        %2021 = vmatpush1.msra.mxu0 0.0
        %2022 = vmatprep.subr.mxu0 0.0
        %2023 = vmatpush1.msra.mxu0 0.0
        %2024 = vmatprep.subr.mxu0 0.0
        %2025 = vmatpush1.msra.mxu0 0.0
        %2026 = vmatprep.subr.mxu0 0.0
        %2027 = vmatpush1.msra.mxu0 %v1996
        %2028 = vmatprep.subr.mxu0 0.0
        %2029 = vmatpush1.msra.mxu0 %v1989
        %2030 = vmatprep.subr.mxu0 0.0
        %2031 = vmatpush2.msra.mxu0 0.0
        %2032 = vmatprep.subr.mxu0 0.0
        %2033 = vmatpush2.msra.mxu0 0.0
        %2034 = vmatprep.subr.mxu0 0.0
        %2035 = vmatpush2.msra.mxu0 0.0
        %2036 = vmatprep.subr.mxu0 0.0
        %2037 = vmatpush2.msra.mxu0 0.0
        %2038 = vmatprep.subr.mxu0 0.0
        %2039 = vmatpush2.msra.mxu0 0.0
        %2040 = vmatprep.subr.mxu0 0.0
        %2041 = vmatpush2.msra.mxu0 0.0
        %2042 = vmatprep.subr.mxu0 0.0
        %2043 = vmatpush2.msra.mxu0 0.0
        %2044 = vmatprep.subr.mxu0 0.0
        %2045 = vmatpush2.msra.mxu0 0.0
        %2046 = vmatprep.subr.mxu0 0.0
        %2047 = vmatpush2.msra.mxu0 0.0
        %2048 = vmatprep.subr.mxu0 0.0
        %2049 = vmatpush2.msra.mxu0 0.0
        %2050 = vmatprep.subr.mxu0 0.0
        %2051 = vmatpush2.msra.mxu0 0.0
        %2052 = vmatprep.subr.mxu0 0.0
        %2053 = vmatpush2.msra.mxu0 0.0
        %2054 = vmatprep.subr.mxu0 0.0
        %2055 = vmatpush2.msra.mxu0 0.0
        %2056 = vmatprep.subr.mxu0 0.0
        %2057 = vmatpush2.msra.mxu0 0.0
        %2058 = vmatprep.subr.mxu0 0.0
        %2059 = vmatpush2.msra.mxu0 0.0
        %2060 = vmatprep.subr.mxu0 0.0
        %2061 = vmatpush2.msra.mxu0 0.0
        %2062 = vmatprep.mubr.f32.mxu0 0.0
        %2063 = vmatmul.mubr.f32.gmra.mxu0 %v1994
        %v2064 = vpop.f32.mrf.mxu0
        %v2065 = vadd.f32 0.0, %v2064
        %v2066 = vpop.f32.mrf.mxu0
        %2067 = vdwg.mxu0
        %2068 = vrot.lane.b32.xlu0 %v1472, 104
        %v2069 = vpop.permute.xlu0 %2068
        %2070 = vrot.lane.b32.xlu0 %v1525, 104
        %v2071 = vpop.permute.xlu0 %2070
        %2072 = vrot.lane.b32.xlu0 %v1528, 104
        %v2073 = vpop.permute.xlu0 %2072
        %v2074 = vsel %vm633, %v2069, 0
        %v2076 = vsel %vm633, %v2071, 0
        %v2078 = vsel %vm633, %v2073, 0
        %2080 = vmatprep.subr.mxu0 0.0
        %2081 = vmatpush1.xpose.msra.mxu0 0.0
        %2082 = vmatprep.subr.mxu0 0.0
        %2083 = vmatpush1.xpose.msra.mxu0 0.0
        %2084 = vmatprep.subr.mxu0 0.0
        %2085 = vmatpush1.xpose.msra.mxu0 0.0
        %2086 = vmatprep.subr.mxu0 0.0
        %2087 = vmatpush1.xpose.msra.mxu0 0.0
        %2088 = vmatprep.subr.mxu0 0.0
        %2089 = vmatpush1.xpose.msra.mxu0 0.0
        %2090 = vmatprep.subr.mxu0 0.0
        %2091 = vmatpush1.xpose.msra.mxu0 0.0
        %2092 = vmatprep.subr.mxu0 0.0
        %2093 = vmatpush1.xpose.msra.mxu0 0.0
        %2094 = vmatprep.subr.mxu0 0.0
        %2095 = vmatpush1.xpose.msra.mxu0 0.0
        %2096 = vmatprep.subr.mxu0 0.0
        %2097 = vmatpush1.xpose.msra.mxu0 0.0
        %2098 = vmatprep.subr.mxu0 0.0
        %2099 = vmatpush1.xpose.msra.mxu0 0.0
        %2100 = vmatprep.subr.mxu0 0.0
        %2101 = vmatpush1.xpose.msra.mxu0 0.0
        %2102 = vmatprep.subr.mxu0 0.0
        %2103 = vmatpush1.xpose.msra.mxu0 0.0
        %2104 = vmatprep.subr.mxu0 0.0
        %2105 = vmatpush1.xpose.msra.mxu0 0.0
        %2106 = vmatprep.subr.mxu0 0.0
        %2107 = vmatpush1.xpose.msra.mxu0 0.0
        %2108 = vmatprep.subr.mxu0 0.0
        %2109 = vmatpush1.xpose.msra.mxu0 %v2078
        %2110 = vmatprep.subr.mxu0 0.0
        %2111 = vmatpush1.xpose.msra.mxu0 %v2076
        %2112 = vmatprep.subr.mxu0 0.0
        %2113 = vmatpush2.xpose.msra.mxu0 0.0
        %2114 = vmatprep.subr.mxu0 0.0
        %2115 = vmatpush2.xpose.msra.mxu0 0.0
        %2116 = vmatprep.subr.mxu0 0.0
        %2117 = vmatpush2.xpose.msra.mxu0 0.0
        %2118 = vmatprep.subr.mxu0 0.0
        %2119 = vmatpush2.xpose.msra.mxu0 0.0
        %2120 = vmatprep.subr.mxu0 0.0
        %2121 = vmatpush2.xpose.msra.mxu0 0.0
        %2122 = vmatprep.subr.mxu0 0.0
        %2123 = vmatpush2.xpose.msra.mxu0 0.0
        %2124 = vmatprep.subr.mxu0 0.0
        %2125 = vmatpush2.xpose.msra.mxu0 0.0
        %2126 = vmatprep.subr.mxu0 0.0
        %2127 = vmatpush2.xpose.msra.mxu0 0.0
        %2128 = vmatprep.subr.mxu0 0.0
        %2129 = vmatpush2.xpose.msra.mxu0 0.0
        %2130 = vmatprep.subr.mxu0 0.0
        %2131 = vmatpush2.xpose.msra.mxu0 0.0
        %2132 = vmatprep.subr.mxu0 0.0
        %2133 = vmatpush2.xpose.msra.mxu0 0.0
        %2134 = vmatprep.subr.mxu0 0.0
        %2135 = vmatpush2.xpose.msra.mxu0 0.0
        %2136 = vmatprep.subr.mxu0 0.0
        %2137 = vmatpush2.xpose.msra.mxu0 0.0
        %2138 = vmatprep.subr.mxu0 0.0
        %2139 = vmatpush2.xpose.msra.mxu0 0.0
        %2140 = vmatprep.subr.mxu0 0.0
        %2141 = vmatpush2.xpose.msra.mxu0 0.0
        %2142 = vmatprep.subr.mxu0 0.0
        %2143 = vmatpush2.xpose.msra.mxu0 0.0
        %2144 = vmatprep.mubr.f32.mxu0 0.0
        %2145 = vmatmul.mubr.f32.gmra.mxu0 %v2074
        %v2146 = vpop.f32.mrf.mxu0
        %v2147 = vadd.f32 0.0, %v2146
        %v2148 = vpop.f32.mrf.mxu0
        %2149 = vdwg.mxu0
        %v2150 = vmul.f32 %v2147, 0.35355338
        %v2151 = vadd.f32 %v2150, %v1622
        %v2152 = vsel %vm1625, %v2151, -inf
        %2153 = vmax.xlane.f32.xlu0 %v2152
        %v2154 = vpop.xlane.xlu0 %2153
        %v2155 = vsub.f32 %v2151, %v2154
        %v2156 = vmul.f32 %v2155, 1.442695
        %v2157 = vpow.pop %v2156
        %v2158 = vsel %vm1625, %v2157, 0.0
        %2159 = vadd.xlane.f32.xlu0 %v2158
        %v2160 = vpop.xlane.xlu0 %2159
        %v2161 = vrcp.pop %v2160
        %v2162 = vmul.f32 %v2157, %v2161
        %2163 = vrot.lane.b32.xlu0 %v1525, 72
        %v2164 = vpop.permute.xlu0 %2163
        %2165 = vrot.lane.b32.xlu0 %v1528, 72
        %v2166 = vpop.permute.xlu0 %2165
        %v2169 = vsel %vm1625, %v2162, 0
        %v2171 = vsel %vm1645, %v2166, 0
        %2173 = vmatprep.subr.mxu0 0.0
        %2174 = vmatpush1.msra.mxu0 0.0
        %2175 = vmatprep.subr.mxu0 0.0
        %2176 = vmatpush1.msra.mxu0 0.0
        %2177 = vmatprep.subr.mxu0 0.0
        %2178 = vmatpush1.msra.mxu0 0.0
        %2179 = vmatprep.subr.mxu0 0.0
        %2180 = vmatpush1.msra.mxu0 0.0
        %2181 = vmatprep.subr.mxu0 0.0
        %2182 = vmatpush1.msra.mxu0 0.0
        %2183 = vmatprep.subr.mxu0 0.0
        %2184 = vmatpush1.msra.mxu0 0.0
        %2185 = vmatprep.subr.mxu0 0.0
        %2186 = vmatpush1.msra.mxu0 0.0
        %2187 = vmatprep.subr.mxu0 0.0
        %2188 = vmatpush1.msra.mxu0 0.0
        %2189 = vmatprep.subr.mxu0 0.0
        %2190 = vmatpush1.msra.mxu0 0.0
        %2191 = vmatprep.subr.mxu0 0.0
        %2192 = vmatpush1.msra.mxu0 0.0
        %2193 = vmatprep.subr.mxu0 0.0
        %2194 = vmatpush1.msra.mxu0 0.0
        %2195 = vmatprep.subr.mxu0 0.0
        %2196 = vmatpush1.msra.mxu0 0.0
        %2197 = vmatprep.subr.mxu0 0.0
        %2198 = vmatpush1.msra.mxu0 0.0
        %2199 = vmatprep.subr.mxu0 0.0
        %2200 = vmatpush1.msra.mxu0 0.0
        %2201 = vmatprep.subr.mxu0 0.0
        %2202 = vmatpush1.msra.mxu0 %v2171
        %2203 = vmatprep.subr.mxu0 0.0
        %2204 = vmatpush1.msra.mxu0 %v2164
        %2205 = vmatprep.subr.mxu0 0.0
        %2206 = vmatpush2.msra.mxu0 0.0
        %2207 = vmatprep.subr.mxu0 0.0
        %2208 = vmatpush2.msra.mxu0 0.0
        %2209 = vmatprep.subr.mxu0 0.0
        %2210 = vmatpush2.msra.mxu0 0.0
        %2211 = vmatprep.subr.mxu0 0.0
        %2212 = vmatpush2.msra.mxu0 0.0
        %2213 = vmatprep.subr.mxu0 0.0
        %2214 = vmatpush2.msra.mxu0 0.0
        %2215 = vmatprep.subr.mxu0 0.0
        %2216 = vmatpush2.msra.mxu0 0.0
        %2217 = vmatprep.subr.mxu0 0.0
        %2218 = vmatpush2.msra.mxu0 0.0
        %2219 = vmatprep.subr.mxu0 0.0
        %2220 = vmatpush2.msra.mxu0 0.0
        %2221 = vmatprep.subr.mxu0 0.0
        %2222 = vmatpush2.msra.mxu0 0.0
        %2223 = vmatprep.subr.mxu0 0.0
        %2224 = vmatpush2.msra.mxu0 0.0
        %2225 = vmatprep.subr.mxu0 0.0
        %2226 = vmatpush2.msra.mxu0 0.0
        %2227 = vmatprep.subr.mxu0 0.0
        %2228 = vmatpush2.msra.mxu0 0.0
        %2229 = vmatprep.subr.mxu0 0.0
        %2230 = vmatpush2.msra.mxu0 0.0
        %2231 = vmatprep.subr.mxu0 0.0
        %2232 = vmatpush2.msra.mxu0 0.0
        %2233 = vmatprep.subr.mxu0 0.0
        %2234 = vmatpush2.msra.mxu0 0.0
        %2235 = vmatprep.subr.mxu0 0.0
        %2236 = vmatpush2.msra.mxu0 0.0
        %2237 = vmatprep.mubr.f32.mxu0 0.0
        %2238 = vmatmul.mubr.f32.gmra.mxu0 %v2169
        %v2239 = vpop.f32.mrf.mxu0
        %v2240 = vadd.f32 0.0, %v2239
        %v2241 = vpop.f32.mrf.mxu0
        %2242 = vdwg.mxu0
        %2244 = vrot.lane.b32.xlu0 %v1890, 8
        %v2245 = vpop.permute.xlu0 %2244
        %2248 = vrot.lane.b32.xlu0 %v2065, 16
        %v2249 = vpop.permute.xlu0 %2248
        %2252 = vrot.lane.b32.xlu0 %v2240, 24
        %v2253 = vpop.permute.xlu0 %2252
        %v2255 = vsel %vm633, %v1715, %v2245
        %v2256 = vsel %vm1311, %v2255, %v2249
        %v2257 = vsel %vm1313, %v2256, %v2253
        %v2258 = vpack.c.bf16 %v2257, %v2257
        %v2260 = vlaneseq
        %v2261 = vshrl.u32 %v2260, 7
        %v2262 = vsub.s32 0, %v2261
        %v2263 = vrot.slane %v1537, %v2262
        %v2269 = vunpack.c.l.b16 %v1532
        %v2270 = vunpack.c.l.b16 %v1533
        %v2271 = vunpack.c.l.b16 %v1534
        %v2272 = vunpack.c.l.b16 %v1535
        %v2273 = vpack.c.b16 %v2270, %v2269
        %v2274 = vpack.c.b16 %v2272, %v2271
        %v2278 = vsel %vm581, %v2258, 0
        %2280 = vmatprep.subr.bf16.mxu0 0
        %2281 = vmatpush1.bf16.msra.mxu0 0
        %2282 = vmatprep.subr.bf16.mxu0 0
        %2283 = vmatpush1.bf16.msra.mxu0 0
        %2284 = vmatprep.subr.bf16.mxu0 0
        %2285 = vmatpush1.bf16.msra.mxu0 0
        %2286 = vmatprep.subr.bf16.mxu0 0
        %2287 = vmatpush1.bf16.msra.mxu0 0
        %2288 = vmatprep.subr.bf16.mxu0 0
        %2289 = vmatpush1.bf16.msra.mxu0 0
        %2290 = vmatprep.subr.bf16.mxu0 0
        %2291 = vmatpush1.bf16.msra.mxu0 0
        %2292 = vmatprep.subr.bf16.mxu0 0
        %2293 = vmatpush1.bf16.msra.mxu0 %v2274
        %2294 = vmatprep.subr.bf16.mxu0 0
        %2295 = vmatpush1.bf16.msra.mxu0 %v2273
        %2296 = vmatprep.subr.bf16.mxu0 0
        %2297 = vmatpush2.bf16.msra.mxu0 0
        %2298 = vmatprep.subr.bf16.mxu0 0
        %2299 = vmatpush2.bf16.msra.mxu0 0
        %2300 = vmatprep.subr.bf16.mxu0 0
        %2301 = vmatpush2.bf16.msra.mxu0 0
        %2302 = vmatprep.subr.bf16.mxu0 0
        %2303 = vmatpush2.bf16.msra.mxu0 0
        %2304 = vmatprep.subr.bf16.mxu0 0
        %2305 = vmatpush2.bf16.msra.mxu0 0
        %2306 = vmatprep.subr.bf16.mxu0 0
        %2307 = vmatpush2.bf16.msra.mxu0 0
        %2308 = vmatprep.subr.bf16.mxu0 0
        %2309 = vmatpush2.bf16.msra.mxu0 0
        %2310 = vmatprep.subr.bf16.mxu0 0
        %2311 = vmatpush2.bf16.msra.mxu0 0
        %2312 = vmatprep.mubr.bf16.mxu0 0
        %2313 = vmatmul.mubr.bf16.gmra.mxu0 %v2278
        %v2314 = vpop.f32.mrf.mxu0
        %v2315 = vadd.f32 %v2263, %v2314
        %v2316 = vpop.f32.mrf.mxu0
        %v2317 = vpop.f32.mrf.mxu0
        %v2318 = vpop.f32.mrf.mxu0
        %2319 = vdwg.mxu0
        %v2320 = vadd.f32 %v1407, %v2315
        %s2321 = scalar_lea.vmem %s12, 1
        %v2322 = vld [vmem:[%s2321] sm:$0x1]
        %s2323 = scalar_lea.vmem %s13, 1
        %v2324 = vld [vmem:[%s2323] sm:$0x1]
        %v2325 = vsel %vm581, %v2320, 0.0
        %2326 = vadd.xlane.f32.xlu0 %v2325
        %v2327 = vpop.xlane.xlu0 %2326
        %v2328 = vmul.f32 %v2327, %v1383
        %v2329 = vsub.f32 %v2320, %v2328
        %v2330 = vmul.f32 %v2329, %v2329
        %v2331 = vsel %vm581, %v2330, 0.0
        %2332 = vadd.xlane.f32.xlu0 %v2331
        %v2333 = vpop.xlane.xlu0 %2332
        %v2334 = vmul.f32 %v2333, %v1383
        %v2335 = vadd.f32 %v2334, 1e-05
        %v2336 = vrsqrt.pop %v2335
        %v2337 = vmul.f32 %v2329, %v2336
        %v2339 = vlaneseq
        %v2340 = vshrl.u32 %v2339, 7
        %v2341 = vsub.s32 0, %v2340
        %v2342 = vrot.slane %v2322, %v2341
        %v2344 = vmul.f32 %v2337, %v2342
        %v2346 = vlaneseq
        %v2347 = vshrl.u32 %v2346, 7
        %v2348 = vsub.s32 0, %v2347
        %v2349 = vrot.slane %v2324, %v2348
        %v2351 = vadd.f32 %v2344, %v2349
        %v2352 = vld [vmem:[%s8] sm:$0xf]
        %v2353 = vld [vmem:[%s8 + $0x4] sm:$0xf]
        %v2354 = vld [vmem:[%s8 + $0x8] sm:$0xf]
        %v2355 = vld [vmem:[%s8 + $0xc] sm:$0xf]
        %v2356 = vpack.c.bf16 %v2351, %v2351
        %v2357 = vld [vmem:[%s9] sm:$0x1]
        %v2359 = vlaneseq
        %v2360 = vshrl.u32 %v2359, 7
        %v2361 = vsub.s32 0, %v2360
        %v2362 = vrot.slane %v2357, %v2361
        %v2368 = vunpack.c.l.b16 %v2352
        %v2369 = vunpack.c.l.b16 %v2353
        %v2370 = vunpack.c.l.b16 %v2354
        %v2371 = vunpack.c.l.b16 %v2355
        %v2372 = vpack.c.b16 %v2369, %v2368
        %v2373 = vpack.c.b16 %v2371, %v2370
        %v2377 = vsel %vm581, %v2356, 0
        %2379 = vmatprep.subr.bf16.mxu0 0
        %2380 = vmatpush1.bf16.msra.mxu0 0
        %2381 = vmatprep.subr.bf16.mxu0 0
        %2382 = vmatpush1.bf16.msra.mxu0 0
        %2383 = vmatprep.subr.bf16.mxu0 0
        %2384 = vmatpush1.bf16.msra.mxu0 0
        %2385 = vmatprep.subr.bf16.mxu0 0
        %2386 = vmatpush1.bf16.msra.mxu0 0
        %2387 = vmatprep.subr.bf16.mxu0 0
        %2388 = vmatpush1.bf16.msra.mxu0 0
        %2389 = vmatprep.subr.bf16.mxu0 0
        %2390 = vmatpush1.bf16.msra.mxu0 0
        %2391 = vmatprep.subr.bf16.mxu0 0
        %2392 = vmatpush1.bf16.msra.mxu0 %v2373
        %2393 = vmatprep.subr.bf16.mxu0 0
        %2394 = vmatpush1.bf16.msra.mxu0 %v2372
        %2395 = vmatprep.subr.bf16.mxu0 0
        %2396 = vmatpush2.bf16.msra.mxu0 0
        %2397 = vmatprep.subr.bf16.mxu0 0
        %2398 = vmatpush2.bf16.msra.mxu0 0
        %2399 = vmatprep.subr.bf16.mxu0 0
        %2400 = vmatpush2.bf16.msra.mxu0 0
        %2401 = vmatprep.subr.bf16.mxu0 0
        %2402 = vmatpush2.bf16.msra.mxu0 0
        %2403 = vmatprep.subr.bf16.mxu0 0
        %2404 = vmatpush2.bf16.msra.mxu0 0
        %2405 = vmatprep.subr.bf16.mxu0 0
        %2406 = vmatpush2.bf16.msra.mxu0 0
        %2407 = vmatprep.subr.bf16.mxu0 0
        %2408 = vmatpush2.bf16.msra.mxu0 0
        %2409 = vmatprep.subr.bf16.mxu0 0
        %2410 = vmatpush2.bf16.msra.mxu0 0
        %2411 = vmatprep.mubr.bf16.mxu0 0
        %2412 = vmatmul.mubr.bf16.gmra.mxu0 %v2377
        %v2413 = vpop.f32.mrf.mxu0
        %v2414 = vadd.f32 %v2362, %v2413
        %v2415 = vpop.f32.mrf.mxu0
        %v2416 = vpop.f32.mrf.mxu0
        %v2417 = vpop.f32.mrf.mxu0
        %2418 = vdwg.mxu0
        %v2419 = vmax.f32 %v2414, 0.0
        %v2420 = vld [vmem:[%s10] sm:$0xf]
        %v2421 = vld [vmem:[%s10 + $0x4] sm:$0xf]
        %v2422 = vld [vmem:[%s10 + $0x8] sm:$0xf]
        %v2423 = vld [vmem:[%s10 + $0xc] sm:$0xf]
        %v2424 = vld [vmem:[%s10 + $0x10] sm:$0xf]
        %v2425 = vld [vmem:[%s10 + $0x14] sm:$0xf]
        %v2426 = vld [vmem:[%s10 + $0x18] sm:$0xf]
        %v2427 = vld [vmem:[%s10 + $0x1c] sm:$0xf]
        %v2428 = vpack.c.bf16 %v2419, %v2419
        %v2429 = vld [vmem:[%s11] sm:$0x1]
        %v2431 = vlaneseq
        %v2432 = vshrl.u32 %v2431, 7
        %v2433 = vsub.s32 0, %v2432
        %v2434 = vrot.slane %v2429, %v2433
        %v2444 = vunpack.c.l.b16 %v2420
        %v2445 = vunpack.c.l.b16 %v2421
        %v2446 = vunpack.c.l.b16 %v2422
        %v2447 = vunpack.c.l.b16 %v2423
        %v2448 = vunpack.c.l.b16 %v2424
        %v2449 = vunpack.c.l.b16 %v2425
        %v2450 = vunpack.c.l.b16 %v2426
        %v2451 = vunpack.c.l.b16 %v2427
        %v2452 = vpack.c.b16 %v2445, %v2444
        %v2453 = vpack.c.b16 %v2447, %v2446
        %v2454 = vpack.c.b16 %v2449, %v2448
        %v2455 = vpack.c.b16 %v2451, %v2450
        %vm2460 = vcmask 523264
        %v2462 = vsel %vm2460, %v2428, 0
        %2464 = vmatprep.subr.bf16.mxu0 0
        %2465 = vmatpush1.bf16.msra.mxu0 0
        %2466 = vmatprep.subr.bf16.mxu0 0
        %2467 = vmatpush1.bf16.msra.mxu0 0
        %2468 = vmatprep.subr.bf16.mxu0 0
        %2469 = vmatpush1.bf16.msra.mxu0 0
        %2470 = vmatprep.subr.bf16.mxu0 0
        %2471 = vmatpush1.bf16.msra.mxu0 0
        %2472 = vmatprep.subr.bf16.mxu0 0
        %2473 = vmatpush1.bf16.msra.mxu0 %v2455
        %2474 = vmatprep.subr.bf16.mxu0 0
        %2475 = vmatpush1.bf16.msra.mxu0 %v2454
        %2476 = vmatprep.subr.bf16.mxu0 0
        %2477 = vmatpush1.bf16.msra.mxu0 %v2453
        %2478 = vmatprep.subr.bf16.mxu0 0
        %2479 = vmatpush1.bf16.msra.mxu0 %v2452
        %2480 = vmatprep.subr.bf16.mxu0 0
        %2481 = vmatpush2.bf16.msra.mxu0 0
        %2482 = vmatprep.subr.bf16.mxu0 0
        %2483 = vmatpush2.bf16.msra.mxu0 0
        %2484 = vmatprep.subr.bf16.mxu0 0
        %2485 = vmatpush2.bf16.msra.mxu0 0
        %2486 = vmatprep.subr.bf16.mxu0 0
        %2487 = vmatpush2.bf16.msra.mxu0 0
        %2488 = vmatprep.subr.bf16.mxu0 0
        %2489 = vmatpush2.bf16.msra.mxu0 0
        %2490 = vmatprep.subr.bf16.mxu0 0
        %2491 = vmatpush2.bf16.msra.mxu0 0
        %2492 = vmatprep.subr.bf16.mxu0 0
        %2493 = vmatpush2.bf16.msra.mxu0 0
        %2494 = vmatprep.subr.bf16.mxu0 0
        %2495 = vmatpush2.bf16.msra.mxu0 0
        %2496 = vmatprep.mubr.bf16.mxu0 0
        %2497 = vmatmul.mubr.bf16.gmra.mxu0 %v2462
        %v2498 = vpop.f32.mrf.mxu0
        %v2499 = vadd.f32 %v2434, %v2498
        %v2500 = vpop.f32.mrf.mxu0
        %v2501 = vpop.f32.mrf.mxu0
        %v2502 = vpop.f32.mrf.mxu0
        %2503 = vdwg.mxu0
        %v2504 = vadd.f32 %v2351, %v2499
        %s2505 = scalar_lea.vmem %s12, 2
        %v2506 = vld [vmem:[%s2505] sm:$0x1]
        %s2507 = scalar_lea.vmem %s13, 2
        %v2508 = vld [vmem:[%s2507] sm:$0x1]
        %v2509 = vsel %vm581, %v2504, 0.0
        %2510 = vadd.xlane.f32.xlu0 %v2509
        %v2511 = vpop.xlane.xlu0 %2510
        %v2512 = vmul.f32 %v2511, %v1383
        %v2513 = vsub.f32 %v2504, %v2512
        %v2514 = vmul.f32 %v2513, %v2513
        %v2515 = vsel %vm581, %v2514, 0.0
        %2516 = vadd.xlane.f32.xlu0 %v2515
        %v2517 = vpop.xlane.xlu0 %2516
        %v2518 = vmul.f32 %v2517, %v1383
        %v2519 = vadd.f32 %v2518, 1e-05
        %v2520 = vrsqrt.pop %v2519
        %v2521 = vmul.f32 %v2513, %v2520
        %v2523 = vlaneseq
        %v2524 = vshrl.u32 %v2523, 7
        %v2525 = vsub.s32 0, %v2524
        %v2526 = vrot.slane %v2506, %v2525
        %v2528 = vmul.f32 %v2521, %v2526
        %v2530 = vlaneseq
        %v2531 = vshrl.u32 %v2530, 7
        %v2532 = vsub.s32 0, %v2531
        %v2533 = vrot.slane %v2508, %v2532
        %v2535 = vadd.f32 %v2528, %v2533
        %s2536 = scalar_lea.vmem %s4, 32
        %v2537 = vld [vmem:[%s2536] sm:$0xf]
        %v2538 = vld [vmem:[%s2536 + $0x4] sm:$0xf]
        %v2539 = vld [vmem:[%s2536 + $0x8] sm:$0xf]
        %v2540 = vld [vmem:[%s2536 + $0xc] sm:$0xf]
        %v2541 = vpack.c.bf16 %v2535, %v2535
        %s2542 = scalar_lea.vmem %s5, 2
        %v2543 = vld [vmem:[%s2542] sm:$0x1]
        %v2545 = vlaneseq
        %v2546 = vshrl.u32 %v2545, 7
        %v2547 = vsub.s32 0, %v2546
        %v2548 = vrot.slane %v2543, %v2547
        %v2554 = vunpack.c.l.b16 %v2537
        %v2555 = vunpack.c.l.b16 %v2538
        %v2556 = vunpack.c.l.b16 %v2539
        %v2557 = vunpack.c.l.b16 %v2540
        %v2558 = vpack.c.b16 %v2555, %v2554
        %v2559 = vpack.c.b16 %v2557, %v2556
        %v2563 = vsel %vm581, %v2541, 0
        %2565 = vmatprep.subr.bf16.mxu0 0
        %2566 = vmatpush1.bf16.msra.mxu0 0
        %2567 = vmatprep.subr.bf16.mxu0 0
        %2568 = vmatpush1.bf16.msra.mxu0 0
        %2569 = vmatprep.subr.bf16.mxu0 0
        %2570 = vmatpush1.bf16.msra.mxu0 0
        %2571 = vmatprep.subr.bf16.mxu0 0
        %2572 = vmatpush1.bf16.msra.mxu0 0
        %2573 = vmatprep.subr.bf16.mxu0 0
        %2574 = vmatpush1.bf16.msra.mxu0 0
        %2575 = vmatprep.subr.bf16.mxu0 0
        %2576 = vmatpush1.bf16.msra.mxu0 0
        %2577 = vmatprep.subr.bf16.mxu0 0
        %2578 = vmatpush1.bf16.msra.mxu0 %v2559
        %2579 = vmatprep.subr.bf16.mxu0 0
        %2580 = vmatpush1.bf16.msra.mxu0 %v2558
        %2581 = vmatprep.subr.bf16.mxu0 0
        %2582 = vmatpush2.bf16.msra.mxu0 0
        %2583 = vmatprep.subr.bf16.mxu0 0
        %2584 = vmatpush2.bf16.msra.mxu0 0
        %2585 = vmatprep.subr.bf16.mxu0 0
        %2586 = vmatpush2.bf16.msra.mxu0 0
        %2587 = vmatprep.subr.bf16.mxu0 0
        %2588 = vmatpush2.bf16.msra.mxu0 0
        %2589 = vmatprep.subr.bf16.mxu0 0
        %2590 = vmatpush2.bf16.msra.mxu0 0
        %2591 = vmatprep.subr.bf16.mxu0 0
        %2592 = vmatpush2.bf16.msra.mxu0 0
        %2593 = vmatprep.subr.bf16.mxu0 0
        %2594 = vmatpush2.bf16.msra.mxu0 0
        %2595 = vmatprep.subr.bf16.mxu0 0
        %2596 = vmatpush2.bf16.msra.mxu0 0
        %2597 = vmatprep.mubr.bf16.mxu0 0
        %2598 = vmatmul.mubr.bf16.gmra.mxu0 %v2563
        %v2599 = vpop.f32.mrf.mxu0
        %v2600 = vadd.f32 %v2548, %v2599
        %v2601 = vpop.f32.mrf.mxu0
        %v2602 = vpop.f32.mrf.mxu0
        %v2603 = vpop.f32.mrf.mxu0
        %2604 = vdwg.mxu0
        %s2605 = scalar_lea.vmem %s6, 32
        %v2606 = vld [vmem:[%s2605] sm:$0xf]
        %v2607 = vld [vmem:[%s2605 + $0x4] sm:$0xf]
        %v2608 = vld [vmem:[%s2605 + $0x8] sm:$0xf]
        %v2609 = vld [vmem:[%s2605 + $0xc] sm:$0xf]
        %s2610 = scalar_lea.vmem %s7, 2
        %v2611 = vld [vmem:[%s2610] sm:$0x1]
        %2613 = vrot.lane.b32.xlu0 %v2600, 96
        %v2614 = vpop.permute.xlu0 %2613
        %v2615 = vsel %vm633, %v2600, 0
        %v2617 = vsel %vm633, %v2614, 0
        %2619 = vmatprep.subr.mxu0 0.0
        %2620 = vmatpush1.xpose.msra.mxu0 0.0
        %2621 = vmatprep.subr.mxu0 0.0
        %2622 = vmatpush1.xpose.msra.mxu0 0.0
        %2623 = vmatprep.subr.mxu0 0.0
        %2624 = vmatpush1.xpose.msra.mxu0 0.0
        %2625 = vmatprep.subr.mxu0 0.0
        %2626 = vmatpush1.xpose.msra.mxu0 0.0
        %2627 = vmatprep.subr.mxu0 0.0
        %2628 = vmatpush1.xpose.msra.mxu0 0.0
        %2629 = vmatprep.subr.mxu0 0.0
        %2630 = vmatpush1.xpose.msra.mxu0 0.0
        %2631 = vmatprep.subr.mxu0 0.0
        %2632 = vmatpush1.xpose.msra.mxu0 0.0
        %2633 = vmatprep.subr.mxu0 0.0
        %2634 = vmatpush1.xpose.msra.mxu0 0.0
        %2635 = vmatprep.subr.mxu0 0.0
        %2636 = vmatpush1.xpose.msra.mxu0 0.0
        %2637 = vmatprep.subr.mxu0 0.0
        %2638 = vmatpush1.xpose.msra.mxu0 0.0
        %2639 = vmatprep.subr.mxu0 0.0
        %2640 = vmatpush1.xpose.msra.mxu0 0.0
        %2641 = vmatprep.subr.mxu0 0.0
        %2642 = vmatpush1.xpose.msra.mxu0 0.0
        %2643 = vmatprep.subr.mxu0 0.0
        %2644 = vmatpush1.xpose.msra.mxu0 0.0
        %2645 = vmatprep.subr.mxu0 0.0
        %2646 = vmatpush1.xpose.msra.mxu0 0.0
        %2647 = vmatprep.subr.mxu0 0.0
        %2648 = vmatpush1.xpose.msra.mxu0 0.0
        %2649 = vmatprep.subr.mxu0 0.0
        %2650 = vmatpush1.xpose.msra.mxu0 %v2617
        %2651 = vmatprep.subr.mxu0 0.0
        %2652 = vmatpush2.xpose.msra.mxu0 0.0
        %2653 = vmatprep.subr.mxu0 0.0
        %2654 = vmatpush2.xpose.msra.mxu0 0.0
        %2655 = vmatprep.subr.mxu0 0.0
        %2656 = vmatpush2.xpose.msra.mxu0 0.0
        %2657 = vmatprep.subr.mxu0 0.0
        %2658 = vmatpush2.xpose.msra.mxu0 0.0
        %2659 = vmatprep.subr.mxu0 0.0
        %2660 = vmatpush2.xpose.msra.mxu0 0.0
        %2661 = vmatprep.subr.mxu0 0.0
        %2662 = vmatpush2.xpose.msra.mxu0 0.0
        %2663 = vmatprep.subr.mxu0 0.0
        %2664 = vmatpush2.xpose.msra.mxu0 0.0
        %2665 = vmatprep.subr.mxu0 0.0
        %2666 = vmatpush2.xpose.msra.mxu0 0.0
        %2667 = vmatprep.subr.mxu0 0.0
        %2668 = vmatpush2.xpose.msra.mxu0 0.0
        %2669 = vmatprep.subr.mxu0 0.0
        %2670 = vmatpush2.xpose.msra.mxu0 0.0
        %2671 = vmatprep.subr.mxu0 0.0
        %2672 = vmatpush2.xpose.msra.mxu0 0.0
        %2673 = vmatprep.subr.mxu0 0.0
        %2674 = vmatpush2.xpose.msra.mxu0 0.0
        %2675 = vmatprep.subr.mxu0 0.0
        %2676 = vmatpush2.xpose.msra.mxu0 0.0
        %2677 = vmatprep.subr.mxu0 0.0
        %2678 = vmatpush2.xpose.msra.mxu0 0.0
        %2679 = vmatprep.subr.mxu0 0.0
        %2680 = vmatpush2.xpose.msra.mxu0 0.0
        %2681 = vmatprep.subr.mxu0 0.0
        %2682 = vmatpush2.xpose.msra.mxu0 0.0
        %2683 = vmatprep.mubr.f32.mxu0 0.0
        %2684 = vmatmul.mubr.f32.gmra.mxu0 %v2615
        %v2685 = vpop.f32.mrf.mxu0
        %v2686 = vadd.f32 0.0, %v2685
        %v2687 = vpop.f32.mrf.mxu0
        %2688 = vdwg.mxu0
        %v2689 = vmul.f32 %v2686, 0.35355338
        %v2690 = vadd.f32 %v2689, %v555
        %v2691 = vsel %vm633, %v2690, -inf
        %2692 = vmax.xlane.f32.xlu0 %v2691
        %v2693 = vpop.xlane.xlu0 %2692
        %v2694 = vsub.f32 %v2690, %v2693
        %v2695 = vmul.f32 %v2694, 1.442695
        %v2696 = vpow.pop %v2695
        %v2697 = vsel %vm633, %v2696, 0.0
        %2698 = vadd.xlane.f32.xlu0 %v2697
        %v2699 = vpop.xlane.xlu0 %2698
        %v2700 = vrcp.pop %v2699
        %v2701 = vmul.f32 %v2696, %v2700
        %2702 = vrot.lane.b32.xlu0 %v2600, 64
        %v2703 = vpop.permute.xlu0 %2702
        %v2706 = vsel %vm633, %v2701, 0
        %2708 = vmatprep.subr.mxu0 0.0
        %2709 = vmatpush1.msra.mxu0 0.0
        %2710 = vmatprep.subr.mxu0 0.0
        %2711 = vmatpush1.msra.mxu0 0.0
        %2712 = vmatprep.subr.mxu0 0.0
        %2713 = vmatpush1.msra.mxu0 0.0
        %2714 = vmatprep.subr.mxu0 0.0
        %2715 = vmatpush1.msra.mxu0 0.0
        %2716 = vmatprep.subr.mxu0 0.0
        %2717 = vmatpush1.msra.mxu0 0.0
        %2718 = vmatprep.subr.mxu0 0.0
        %2719 = vmatpush1.msra.mxu0 0.0
        %2720 = vmatprep.subr.mxu0 0.0
        %2721 = vmatpush1.msra.mxu0 0.0
        %2722 = vmatprep.subr.mxu0 0.0
        %2723 = vmatpush1.msra.mxu0 0.0
        %2724 = vmatprep.subr.mxu0 0.0
        %2725 = vmatpush1.msra.mxu0 0.0
        %2726 = vmatprep.subr.mxu0 0.0
        %2727 = vmatpush1.msra.mxu0 0.0
        %2728 = vmatprep.subr.mxu0 0.0
        %2729 = vmatpush1.msra.mxu0 0.0
        %2730 = vmatprep.subr.mxu0 0.0
        %2731 = vmatpush1.msra.mxu0 0.0
        %2732 = vmatprep.subr.mxu0 0.0
        %2733 = vmatpush1.msra.mxu0 0.0
        %2734 = vmatprep.subr.mxu0 0.0
        %2735 = vmatpush1.msra.mxu0 0.0
        %2736 = vmatprep.subr.mxu0 0.0
        %2737 = vmatpush1.msra.mxu0 0.0
        %2738 = vmatprep.subr.mxu0 0.0
        %2739 = vmatpush1.msra.mxu0 %v2703
        %2740 = vmatprep.subr.mxu0 0.0
        %2741 = vmatpush2.msra.mxu0 0.0
        %2742 = vmatprep.subr.mxu0 0.0
        %2743 = vmatpush2.msra.mxu0 0.0
        %2744 = vmatprep.subr.mxu0 0.0
        %2745 = vmatpush2.msra.mxu0 0.0
        %2746 = vmatprep.subr.mxu0 0.0
        %2747 = vmatpush2.msra.mxu0 0.0
        %2748 = vmatprep.subr.mxu0 0.0
        %2749 = vmatpush2.msra.mxu0 0.0
        %2750 = vmatprep.subr.mxu0 0.0
        %2751 = vmatpush2.msra.mxu0 0.0
        %2752 = vmatprep.subr.mxu0 0.0
        %2753 = vmatpush2.msra.mxu0 0.0
        %2754 = vmatprep.subr.mxu0 0.0
        %2755 = vmatpush2.msra.mxu0 0.0
        %2756 = vmatprep.subr.mxu0 0.0
        %2757 = vmatpush2.msra.mxu0 0.0
        %2758 = vmatprep.subr.mxu0 0.0
        %2759 = vmatpush2.msra.mxu0 0.0
        %2760 = vmatprep.subr.mxu0 0.0
        %2761 = vmatpush2.msra.mxu0 0.0
        %2762 = vmatprep.subr.mxu0 0.0
        %2763 = vmatpush2.msra.mxu0 0.0
        %2764 = vmatprep.subr.mxu0 0.0
        %2765 = vmatpush2.msra.mxu0 0.0
        %2766 = vmatprep.subr.mxu0 0.0
        %2767 = vmatpush2.msra.mxu0 0.0
        %2768 = vmatprep.subr.mxu0 0.0
        %2769 = vmatpush2.msra.mxu0 0.0
        %2770 = vmatprep.subr.mxu0 0.0
        %2771 = vmatpush2.msra.mxu0 0.0
        %2772 = vmatprep.mubr.f32.mxu0 0.0
        %2773 = vmatmul.mubr.f32.gmra.mxu0 %v2706
        %v2774 = vpop.f32.mrf.mxu0
        %v2775 = vadd.f32 0.0, %v2774
        %v2776 = vpop.f32.mrf.mxu0
        %2777 = vdwg.mxu0
        %2778 = vrot.lane.b32.xlu0 %v2600, 120
        %v2779 = vpop.permute.xlu0 %2778
        %2780 = vrot.lane.b32.xlu0 %v2600, 88
        %v2781 = vpop.permute.xlu0 %2780
        %v2782 = vsel %vm633, %v2779, 0
        %v2784 = vsel %vm633, %v2781, 0
        %2786 = vmatprep.subr.mxu0 0.0
        %2787 = vmatpush1.xpose.msra.mxu0 0.0
        %2788 = vmatprep.subr.mxu0 0.0
        %2789 = vmatpush1.xpose.msra.mxu0 0.0
        %2790 = vmatprep.subr.mxu0 0.0
        %2791 = vmatpush1.xpose.msra.mxu0 0.0
        %2792 = vmatprep.subr.mxu0 0.0
        %2793 = vmatpush1.xpose.msra.mxu0 0.0
        %2794 = vmatprep.subr.mxu0 0.0
        %2795 = vmatpush1.xpose.msra.mxu0 0.0
        %2796 = vmatprep.subr.mxu0 0.0
        %2797 = vmatpush1.xpose.msra.mxu0 0.0
        %2798 = vmatprep.subr.mxu0 0.0
        %2799 = vmatpush1.xpose.msra.mxu0 0.0
        %2800 = vmatprep.subr.mxu0 0.0
        %2801 = vmatpush1.xpose.msra.mxu0 0.0
        %2802 = vmatprep.subr.mxu0 0.0
        %2803 = vmatpush1.xpose.msra.mxu0 0.0
        %2804 = vmatprep.subr.mxu0 0.0
        %2805 = vmatpush1.xpose.msra.mxu0 0.0
        %2806 = vmatprep.subr.mxu0 0.0
        %2807 = vmatpush1.xpose.msra.mxu0 0.0
        %2808 = vmatprep.subr.mxu0 0.0
        %2809 = vmatpush1.xpose.msra.mxu0 0.0
        %2810 = vmatprep.subr.mxu0 0.0
        %2811 = vmatpush1.xpose.msra.mxu0 0.0
        %2812 = vmatprep.subr.mxu0 0.0
        %2813 = vmatpush1.xpose.msra.mxu0 0.0
        %2814 = vmatprep.subr.mxu0 0.0
        %2815 = vmatpush1.xpose.msra.mxu0 0.0
        %2816 = vmatprep.subr.mxu0 0.0
        %2817 = vmatpush1.xpose.msra.mxu0 %v2784
        %2818 = vmatprep.subr.mxu0 0.0
        %2819 = vmatpush2.xpose.msra.mxu0 0.0
        %2820 = vmatprep.subr.mxu0 0.0
        %2821 = vmatpush2.xpose.msra.mxu0 0.0
        %2822 = vmatprep.subr.mxu0 0.0
        %2823 = vmatpush2.xpose.msra.mxu0 0.0
        %2824 = vmatprep.subr.mxu0 0.0
        %2825 = vmatpush2.xpose.msra.mxu0 0.0
        %2826 = vmatprep.subr.mxu0 0.0
        %2827 = vmatpush2.xpose.msra.mxu0 0.0
        %2828 = vmatprep.subr.mxu0 0.0
        %2829 = vmatpush2.xpose.msra.mxu0 0.0
        %2830 = vmatprep.subr.mxu0 0.0
        %2831 = vmatpush2.xpose.msra.mxu0 0.0
        %2832 = vmatprep.subr.mxu0 0.0
        %2833 = vmatpush2.xpose.msra.mxu0 0.0
        %2834 = vmatprep.subr.mxu0 0.0
        %2835 = vmatpush2.xpose.msra.mxu0 0.0
        %2836 = vmatprep.subr.mxu0 0.0
        %2837 = vmatpush2.xpose.msra.mxu0 0.0
        %2838 = vmatprep.subr.mxu0 0.0
        %2839 = vmatpush2.xpose.msra.mxu0 0.0
        %2840 = vmatprep.subr.mxu0 0.0
        %2841 = vmatpush2.xpose.msra.mxu0 0.0
        %2842 = vmatprep.subr.mxu0 0.0
        %2843 = vmatpush2.xpose.msra.mxu0 0.0
        %2844 = vmatprep.subr.mxu0 0.0
        %2845 = vmatpush2.xpose.msra.mxu0 0.0
        %2846 = vmatprep.subr.mxu0 0.0
        %2847 = vmatpush2.xpose.msra.mxu0 0.0
        %2848 = vmatprep.subr.mxu0 0.0
        %2849 = vmatpush2.xpose.msra.mxu0 0.0
        %2850 = vmatprep.mubr.f32.mxu0 0.0
        %2851 = vmatmul.mubr.f32.gmra.mxu0 %v2782
        %v2852 = vpop.f32.mrf.mxu0
        %v2853 = vadd.f32 0.0, %v2852
        %v2854 = vpop.f32.mrf.mxu0
        %2855 = vdwg.mxu0
        %v2856 = vmul.f32 %v2853, 0.35355338
        %v2857 = vadd.f32 %v2856, %v555
        %v2858 = vsel %vm633, %v2857, -inf
        %2859 = vmax.xlane.f32.xlu0 %v2858
        %v2860 = vpop.xlane.xlu0 %2859
        %v2861 = vsub.f32 %v2857, %v2860
        %v2862 = vmul.f32 %v2861, 1.442695
        %v2863 = vpow.pop %v2862
        %v2864 = vsel %vm633, %v2863, 0.0
        %2865 = vadd.xlane.f32.xlu0 %v2864
        %v2866 = vpop.xlane.xlu0 %2865
        %v2867 = vrcp.pop %v2866
        %v2868 = vmul.f32 %v2863, %v2867
        %2869 = vrot.lane.b32.xlu0 %v2600, 56
        %v2870 = vpop.permute.xlu0 %2869
        %v2873 = vsel %vm633, %v2868, 0
        %2875 = vmatprep.subr.mxu0 0.0
        %2876 = vmatpush1.msra.mxu0 0.0
        %2877 = vmatprep.subr.mxu0 0.0
        %2878 = vmatpush1.msra.mxu0 0.0
        %2879 = vmatprep.subr.mxu0 0.0
        %2880 = vmatpush1.msra.mxu0 0.0
        %2881 = vmatprep.subr.mxu0 0.0
        %2882 = vmatpush1.msra.mxu0 0.0
        %2883 = vmatprep.subr.mxu0 0.0
        %2884 = vmatpush1.msra.mxu0 0.0
        %2885 = vmatprep.subr.mxu0 0.0
        %2886 = vmatpush1.msra.mxu0 0.0
        %2887 = vmatprep.subr.mxu0 0.0
        %2888 = vmatpush1.msra.mxu0 0.0
        %2889 = vmatprep.subr.mxu0 0.0
        %2890 = vmatpush1.msra.mxu0 0.0
        %2891 = vmatprep.subr.mxu0 0.0
        %2892 = vmatpush1.msra.mxu0 0.0
        %2893 = vmatprep.subr.mxu0 0.0
        %2894 = vmatpush1.msra.mxu0 0.0
        %2895 = vmatprep.subr.mxu0 0.0
        %2896 = vmatpush1.msra.mxu0 0.0
        %2897 = vmatprep.subr.mxu0 0.0
        %2898 = vmatpush1.msra.mxu0 0.0
        %2899 = vmatprep.subr.mxu0 0.0
        %2900 = vmatpush1.msra.mxu0 0.0
        %2901 = vmatprep.subr.mxu0 0.0
        %2902 = vmatpush1.msra.mxu0 0.0
        %2903 = vmatprep.subr.mxu0 0.0
        %2904 = vmatpush1.msra.mxu0 0.0
        %2905 = vmatprep.subr.mxu0 0.0
        %2906 = vmatpush1.msra.mxu0 %v2870
        %2907 = vmatprep.subr.mxu0 0.0
        %2908 = vmatpush2.msra.mxu0 0.0
        %2909 = vmatprep.subr.mxu0 0.0
        %2910 = vmatpush2.msra.mxu0 0.0
        %2911 = vmatprep.subr.mxu0 0.0
        %2912 = vmatpush2.msra.mxu0 0.0
        %2913 = vmatprep.subr.mxu0 0.0
        %2914 = vmatpush2.msra.mxu0 0.0
        %2915 = vmatprep.subr.mxu0 0.0
        %2916 = vmatpush2.msra.mxu0 0.0
        %2917 = vmatprep.subr.mxu0 0.0
        %2918 = vmatpush2.msra.mxu0 0.0
        %2919 = vmatprep.subr.mxu0 0.0
        %2920 = vmatpush2.msra.mxu0 0.0
        %2921 = vmatprep.subr.mxu0 0.0
        %2922 = vmatpush2.msra.mxu0 0.0
        %2923 = vmatprep.subr.mxu0 0.0
        %2924 = vmatpush2.msra.mxu0 0.0
        %2925 = vmatprep.subr.mxu0 0.0
        %2926 = vmatpush2.msra.mxu0 0.0
        %2927 = vmatprep.subr.mxu0 0.0
        %2928 = vmatpush2.msra.mxu0 0.0
        %2929 = vmatprep.subr.mxu0 0.0
        %2930 = vmatpush2.msra.mxu0 0.0
        %2931 = vmatprep.subr.mxu0 0.0
        %2932 = vmatpush2.msra.mxu0 0.0
        %2933 = vmatprep.subr.mxu0 0.0
        %2934 = vmatpush2.msra.mxu0 0.0
        %2935 = vmatprep.subr.mxu0 0.0
        %2936 = vmatpush2.msra.mxu0 0.0
        %2937 = vmatprep.subr.mxu0 0.0
        %2938 = vmatpush2.msra.mxu0 0.0
        %2939 = vmatprep.mubr.f32.mxu0 0.0
        %2940 = vmatmul.mubr.f32.gmra.mxu0 %v2873
        %v2941 = vpop.f32.mrf.mxu0
        %v2942 = vadd.f32 0.0, %v2941
        %v2943 = vpop.f32.mrf.mxu0
        %2944 = vdwg.mxu0
        %2945 = vrot.lane.b32.xlu0 %v2600, 112
        %v2946 = vpop.permute.xlu0 %2945
        %2947 = vrot.lane.b32.xlu0 %v2600, 80
        %v2948 = vpop.permute.xlu0 %2947
        %v2949 = vsel %vm633, %v2946, 0
        %v2951 = vsel %vm633, %v2948, 0
        %2953 = vmatprep.subr.mxu0 0.0
        %2954 = vmatpush1.xpose.msra.mxu0 0.0
        %2955 = vmatprep.subr.mxu0 0.0
        %2956 = vmatpush1.xpose.msra.mxu0 0.0
        %2957 = vmatprep.subr.mxu0 0.0
        %2958 = vmatpush1.xpose.msra.mxu0 0.0
        %2959 = vmatprep.subr.mxu0 0.0
        %2960 = vmatpush1.xpose.msra.mxu0 0.0
        %2961 = vmatprep.subr.mxu0 0.0
        %2962 = vmatpush1.xpose.msra.mxu0 0.0
        %2963 = vmatprep.subr.mxu0 0.0
        %2964 = vmatpush1.xpose.msra.mxu0 0.0
        %2965 = vmatprep.subr.mxu0 0.0
        %2966 = vmatpush1.xpose.msra.mxu0 0.0
        %2967 = vmatprep.subr.mxu0 0.0
        %2968 = vmatpush1.xpose.msra.mxu0 0.0
        %2969 = vmatprep.subr.mxu0 0.0
        %2970 = vmatpush1.xpose.msra.mxu0 0.0
        %2971 = vmatprep.subr.mxu0 0.0
        %2972 = vmatpush1.xpose.msra.mxu0 0.0
        %2973 = vmatprep.subr.mxu0 0.0
        %2974 = vmatpush1.xpose.msra.mxu0 0.0
        %2975 = vmatprep.subr.mxu0 0.0
        %2976 = vmatpush1.xpose.msra.mxu0 0.0
        %2977 = vmatprep.subr.mxu0 0.0
        %2978 = vmatpush1.xpose.msra.mxu0 0.0
        %2979 = vmatprep.subr.mxu0 0.0
        %2980 = vmatpush1.xpose.msra.mxu0 0.0
        %2981 = vmatprep.subr.mxu0 0.0
        %2982 = vmatpush1.xpose.msra.mxu0 0.0
        %2983 = vmatprep.subr.mxu0 0.0
        %2984 = vmatpush1.xpose.msra.mxu0 %v2951
        %2985 = vmatprep.subr.mxu0 0.0
        %2986 = vmatpush2.xpose.msra.mxu0 0.0
        %2987 = vmatprep.subr.mxu0 0.0
        %2988 = vmatpush2.xpose.msra.mxu0 0.0
        %2989 = vmatprep.subr.mxu0 0.0
        %2990 = vmatpush2.xpose.msra.mxu0 0.0
        %2991 = vmatprep.subr.mxu0 0.0
        %2992 = vmatpush2.xpose.msra.mxu0 0.0
        %2993 = vmatprep.subr.mxu0 0.0
        %2994 = vmatpush2.xpose.msra.mxu0 0.0
        %2995 = vmatprep.subr.mxu0 0.0
        %2996 = vmatpush2.xpose.msra.mxu0 0.0
        %2997 = vmatprep.subr.mxu0 0.0
        %2998 = vmatpush2.xpose.msra.mxu0 0.0
        %2999 = vmatprep.subr.mxu0 0.0
        %3000 = vmatpush2.xpose.msra.mxu0 0.0
        %3001 = vmatprep.subr.mxu0 0.0
        %3002 = vmatpush2.xpose.msra.mxu0 0.0
        %3003 = vmatprep.subr.mxu0 0.0
        %3004 = vmatpush2.xpose.msra.mxu0 0.0
        %3005 = vmatprep.subr.mxu0 0.0
        %3006 = vmatpush2.xpose.msra.mxu0 0.0
        %3007 = vmatprep.subr.mxu0 0.0
        %3008 = vmatpush2.xpose.msra.mxu0 0.0
        %3009 = vmatprep.subr.mxu0 0.0
        %3010 = vmatpush2.xpose.msra.mxu0 0.0
        %3011 = vmatprep.subr.mxu0 0.0
        %3012 = vmatpush2.xpose.msra.mxu0 0.0
        %3013 = vmatprep.subr.mxu0 0.0
        %3014 = vmatpush2.xpose.msra.mxu0 0.0
        %3015 = vmatprep.subr.mxu0 0.0
        %3016 = vmatpush2.xpose.msra.mxu0 0.0
        %3017 = vmatprep.mubr.f32.mxu0 0.0
        %3018 = vmatmul.mubr.f32.gmra.mxu0 %v2949
        %v3019 = vpop.f32.mrf.mxu0
        %v3020 = vadd.f32 0.0, %v3019
        %v3021 = vpop.f32.mrf.mxu0
        %3022 = vdwg.mxu0
        %v3023 = vmul.f32 %v3020, 0.35355338
        %v3024 = vadd.f32 %v3023, %v555
        %v3025 = vsel %vm633, %v3024, -inf
        %3026 = vmax.xlane.f32.xlu0 %v3025
        %v3027 = vpop.xlane.xlu0 %3026
        %v3028 = vsub.f32 %v3024, %v3027
        %v3029 = vmul.f32 %v3028, 1.442695
        %v3030 = vpow.pop %v3029
        %v3031 = vsel %vm633, %v3030, 0.0
        %3032 = vadd.xlane.f32.xlu0 %v3031
        %v3033 = vpop.xlane.xlu0 %3032
        %v3034 = vrcp.pop %v3033
        %v3035 = vmul.f32 %v3030, %v3034
        %3036 = vrot.lane.b32.xlu0 %v2600, 48
        %v3037 = vpop.permute.xlu0 %3036
        %v3040 = vsel %vm633, %v3035, 0
        %3042 = vmatprep.subr.mxu0 0.0
        %3043 = vmatpush1.msra.mxu0 0.0
        %3044 = vmatprep.subr.mxu0 0.0
        %3045 = vmatpush1.msra.mxu0 0.0
        %3046 = vmatprep.subr.mxu0 0.0
        %3047 = vmatpush1.msra.mxu0 0.0
        %3048 = vmatprep.subr.mxu0 0.0
        %3049 = vmatpush1.msra.mxu0 0.0
        %3050 = vmatprep.subr.mxu0 0.0
        %3051 = vmatpush1.msra.mxu0 0.0
        %3052 = vmatprep.subr.mxu0 0.0
        %3053 = vmatpush1.msra.mxu0 0.0
        %3054 = vmatprep.subr.mxu0 0.0
        %3055 = vmatpush1.msra.mxu0 0.0
        %3056 = vmatprep.subr.mxu0 0.0
        %3057 = vmatpush1.msra.mxu0 0.0
        %3058 = vmatprep.subr.mxu0 0.0
        %3059 = vmatpush1.msra.mxu0 0.0
        %3060 = vmatprep.subr.mxu0 0.0
        %3061 = vmatpush1.msra.mxu0 0.0
        %3062 = vmatprep.subr.mxu0 0.0
        %3063 = vmatpush1.msra.mxu0 0.0
        %3064 = vmatprep.subr.mxu0 0.0
        %3065 = vmatpush1.msra.mxu0 0.0
        %3066 = vmatprep.subr.mxu0 0.0
        %3067 = vmatpush1.msra.mxu0 0.0
        %3068 = vmatprep.subr.mxu0 0.0
        %3069 = vmatpush1.msra.mxu0 0.0
        %3070 = vmatprep.subr.mxu0 0.0
        %3071 = vmatpush1.msra.mxu0 0.0
        %3072 = vmatprep.subr.mxu0 0.0
        %3073 = vmatpush1.msra.mxu0 %v3037
        %3074 = vmatprep.subr.mxu0 0.0
        %3075 = vmatpush2.msra.mxu0 0.0
        %3076 = vmatprep.subr.mxu0 0.0
        %3077 = vmatpush2.msra.mxu0 0.0
        %3078 = vmatprep.subr.mxu0 0.0
        %3079 = vmatpush2.msra.mxu0 0.0
        %3080 = vmatprep.subr.mxu0 0.0
        %3081 = vmatpush2.msra.mxu0 0.0
        %3082 = vmatprep.subr.mxu0 0.0
        %3083 = vmatpush2.msra.mxu0 0.0
        %3084 = vmatprep.subr.mxu0 0.0
        %3085 = vmatpush2.msra.mxu0 0.0
        %3086 = vmatprep.subr.mxu0 0.0
        %3087 = vmatpush2.msra.mxu0 0.0
        %3088 = vmatprep.subr.mxu0 0.0
        %3089 = vmatpush2.msra.mxu0 0.0
        %3090 = vmatprep.subr.mxu0 0.0
        %3091 = vmatpush2.msra.mxu0 0.0
        %3092 = vmatprep.subr.mxu0 0.0
        %3093 = vmatpush2.msra.mxu0 0.0
        %3094 = vmatprep.subr.mxu0 0.0
        %3095 = vmatpush2.msra.mxu0 0.0
        %3096 = vmatprep.subr.mxu0 0.0
        %3097 = vmatpush2.msra.mxu0 0.0
        %3098 = vmatprep.subr.mxu0 0.0
        %3099 = vmatpush2.msra.mxu0 0.0
        %3100 = vmatprep.subr.mxu0 0.0
        %3101 = vmatpush2.msra.mxu0 0.0
        %3102 = vmatprep.subr.mxu0 0.0
        %3103 = vmatpush2.msra.mxu0 0.0
        %3104 = vmatprep.subr.mxu0 0.0
        %3105 = vmatpush2.msra.mxu0 0.0
        %3106 = vmatprep.mubr.f32.mxu0 0.0
        %3107 = vmatmul.mubr.f32.gmra.mxu0 %v3040
        %v3108 = vpop.f32.mrf.mxu0
        %v3109 = vadd.f32 0.0, %v3108
        %v3110 = vpop.f32.mrf.mxu0
        %3111 = vdwg.mxu0
        %3112 = vrot.lane.b32.xlu0 %v2600, 104
        %v3113 = vpop.permute.xlu0 %3112
        %3114 = vrot.lane.b32.xlu0 %v2600, 72
        %v3115 = vpop.permute.xlu0 %3114
        %v3116 = vsel %vm633, %v3113, 0
        %v3118 = vsel %vm633, %v3115, 0
        %3120 = vmatprep.subr.mxu0 0.0
        %3121 = vmatpush1.xpose.msra.mxu0 0.0
        %3122 = vmatprep.subr.mxu0 0.0
        %3123 = vmatpush1.xpose.msra.mxu0 0.0
        %3124 = vmatprep.subr.mxu0 0.0
        %3125 = vmatpush1.xpose.msra.mxu0 0.0
        %3126 = vmatprep.subr.mxu0 0.0
        %3127 = vmatpush1.xpose.msra.mxu0 0.0
        %3128 = vmatprep.subr.mxu0 0.0
        %3129 = vmatpush1.xpose.msra.mxu0 0.0
        %3130 = vmatprep.subr.mxu0 0.0
        %3131 = vmatpush1.xpose.msra.mxu0 0.0
        %3132 = vmatprep.subr.mxu0 0.0
        %3133 = vmatpush1.xpose.msra.mxu0 0.0
        %3134 = vmatprep.subr.mxu0 0.0
        %3135 = vmatpush1.xpose.msra.mxu0 0.0
        %3136 = vmatprep.subr.mxu0 0.0
        %3137 = vmatpush1.xpose.msra.mxu0 0.0
        %3138 = vmatprep.subr.mxu0 0.0
        %3139 = vmatpush1.xpose.msra.mxu0 0.0
        %3140 = vmatprep.subr.mxu0 0.0
        %3141 = vmatpush1.xpose.msra.mxu0 0.0
        %3142 = vmatprep.subr.mxu0 0.0
        %3143 = vmatpush1.xpose.msra.mxu0 0.0
        %3144 = vmatprep.subr.mxu0 0.0
        %3145 = vmatpush1.xpose.msra.mxu0 0.0
        %3146 = vmatprep.subr.mxu0 0.0
        %3147 = vmatpush1.xpose.msra.mxu0 0.0
        %3148 = vmatprep.subr.mxu0 0.0
        %3149 = vmatpush1.xpose.msra.mxu0 0.0
        %3150 = vmatprep.subr.mxu0 0.0
        %3151 = vmatpush1.xpose.msra.mxu0 %v3118
        %3152 = vmatprep.subr.mxu0 0.0
        %3153 = vmatpush2.xpose.msra.mxu0 0.0
        %3154 = vmatprep.subr.mxu0 0.0
        %3155 = vmatpush2.xpose.msra.mxu0 0.0
        %3156 = vmatprep.subr.mxu0 0.0
        %3157 = vmatpush2.xpose.msra.mxu0 0.0
        %3158 = vmatprep.subr.mxu0 0.0
        %3159 = vmatpush2.xpose.msra.mxu0 0.0
        %3160 = vmatprep.subr.mxu0 0.0
        %3161 = vmatpush2.xpose.msra.mxu0 0.0
        %3162 = vmatprep.subr.mxu0 0.0
        %3163 = vmatpush2.xpose.msra.mxu0 0.0
        %3164 = vmatprep.subr.mxu0 0.0
        %3165 = vmatpush2.xpose.msra.mxu0 0.0
        %3166 = vmatprep.subr.mxu0 0.0
        %3167 = vmatpush2.xpose.msra.mxu0 0.0
        %3168 = vmatprep.subr.mxu0 0.0
        %3169 = vmatpush2.xpose.msra.mxu0 0.0
        %3170 = vmatprep.subr.mxu0 0.0
        %3171 = vmatpush2.xpose.msra.mxu0 0.0
        %3172 = vmatprep.subr.mxu0 0.0
        %3173 = vmatpush2.xpose.msra.mxu0 0.0
        %3174 = vmatprep.subr.mxu0 0.0
        %3175 = vmatpush2.xpose.msra.mxu0 0.0
        %3176 = vmatprep.subr.mxu0 0.0
        %3177 = vmatpush2.xpose.msra.mxu0 0.0
        %3178 = vmatprep.subr.mxu0 0.0
        %3179 = vmatpush2.xpose.msra.mxu0 0.0
        %3180 = vmatprep.subr.mxu0 0.0
        %3181 = vmatpush2.xpose.msra.mxu0 0.0
        %3182 = vmatprep.subr.mxu0 0.0
        %3183 = vmatpush2.xpose.msra.mxu0 0.0
        %3184 = vmatprep.mubr.f32.mxu0 0.0
        %3185 = vmatmul.mubr.f32.gmra.mxu0 %v3116
        %v3186 = vpop.f32.mrf.mxu0
        %v3187 = vadd.f32 0.0, %v3186
        %v3188 = vpop.f32.mrf.mxu0
        %3189 = vdwg.mxu0
        %v3190 = vmul.f32 %v3187, 0.35355338
        %v3191 = vadd.f32 %v3190, %v555
        %v3192 = vsel %vm633, %v3191, -inf
        %3193 = vmax.xlane.f32.xlu0 %v3192
        %v3194 = vpop.xlane.xlu0 %3193
        %v3195 = vsub.f32 %v3191, %v3194
        %v3196 = vmul.f32 %v3195, 1.442695
        %v3197 = vpow.pop %v3196
        %v3198 = vsel %vm633, %v3197, 0.0
        %3199 = vadd.xlane.f32.xlu0 %v3198
        %v3200 = vpop.xlane.xlu0 %3199
        %v3201 = vrcp.pop %v3200
        %v3202 = vmul.f32 %v3197, %v3201
        %3203 = vrot.lane.b32.xlu0 %v2600, 40
        %v3204 = vpop.permute.xlu0 %3203
        %v3207 = vsel %vm633, %v3202, 0
        %3209 = vmatprep.subr.mxu0 0.0
        %3210 = vmatpush1.msra.mxu0 0.0
        %3211 = vmatprep.subr.mxu0 0.0
        %3212 = vmatpush1.msra.mxu0 0.0
        %3213 = vmatprep.subr.mxu0 0.0
        %3214 = vmatpush1.msra.mxu0 0.0
        %3215 = vmatprep.subr.mxu0 0.0
        %3216 = vmatpush1.msra.mxu0 0.0
        %3217 = vmatprep.subr.mxu0 0.0
        %3218 = vmatpush1.msra.mxu0 0.0
        %3219 = vmatprep.subr.mxu0 0.0
        %3220 = vmatpush1.msra.mxu0 0.0
        %3221 = vmatprep.subr.mxu0 0.0
        %3222 = vmatpush1.msra.mxu0 0.0
        %3223 = vmatprep.subr.mxu0 0.0
        %3224 = vmatpush1.msra.mxu0 0.0
        %3225 = vmatprep.subr.mxu0 0.0
        %3226 = vmatpush1.msra.mxu0 0.0
        %3227 = vmatprep.subr.mxu0 0.0
        %3228 = vmatpush1.msra.mxu0 0.0
        %3229 = vmatprep.subr.mxu0 0.0
        %3230 = vmatpush1.msra.mxu0 0.0
        %3231 = vmatprep.subr.mxu0 0.0
        %3232 = vmatpush1.msra.mxu0 0.0
        %3233 = vmatprep.subr.mxu0 0.0
        %3234 = vmatpush1.msra.mxu0 0.0
        %3235 = vmatprep.subr.mxu0 0.0
        %3236 = vmatpush1.msra.mxu0 0.0
        %3237 = vmatprep.subr.mxu0 0.0
        %3238 = vmatpush1.msra.mxu0 0.0
        %3239 = vmatprep.subr.mxu0 0.0
        %3240 = vmatpush1.msra.mxu0 %v3204
        %3241 = vmatprep.subr.mxu0 0.0
        %3242 = vmatpush2.msra.mxu0 0.0
        %3243 = vmatprep.subr.mxu0 0.0
        %3244 = vmatpush2.msra.mxu0 0.0
        %3245 = vmatprep.subr.mxu0 0.0
        %3246 = vmatpush2.msra.mxu0 0.0
        %3247 = vmatprep.subr.mxu0 0.0
        %3248 = vmatpush2.msra.mxu0 0.0
        %3249 = vmatprep.subr.mxu0 0.0
        %3250 = vmatpush2.msra.mxu0 0.0
        %3251 = vmatprep.subr.mxu0 0.0
        %3252 = vmatpush2.msra.mxu0 0.0
        %3253 = vmatprep.subr.mxu0 0.0
        %3254 = vmatpush2.msra.mxu0 0.0
        %3255 = vmatprep.subr.mxu0 0.0
        %3256 = vmatpush2.msra.mxu0 0.0
        %3257 = vmatprep.subr.mxu0 0.0
        %3258 = vmatpush2.msra.mxu0 0.0
        %3259 = vmatprep.subr.mxu0 0.0
        %3260 = vmatpush2.msra.mxu0 0.0
        %3261 = vmatprep.subr.mxu0 0.0
        %3262 = vmatpush2.msra.mxu0 0.0
        %3263 = vmatprep.subr.mxu0 0.0
        %3264 = vmatpush2.msra.mxu0 0.0
        %3265 = vmatprep.subr.mxu0 0.0
        %3266 = vmatpush2.msra.mxu0 0.0
        %3267 = vmatprep.subr.mxu0 0.0
        %3268 = vmatpush2.msra.mxu0 0.0
        %3269 = vmatprep.subr.mxu0 0.0
        %3270 = vmatpush2.msra.mxu0 0.0
        %3271 = vmatprep.subr.mxu0 0.0
        %3272 = vmatpush2.msra.mxu0 0.0
        %3273 = vmatprep.mubr.f32.mxu0 0.0
        %3274 = vmatmul.mubr.f32.gmra.mxu0 %v3207
        %v3275 = vpop.f32.mrf.mxu0
        %v3276 = vadd.f32 0.0, %v3275
        %v3277 = vpop.f32.mrf.mxu0
        %3278 = vdwg.mxu0
        %3280 = vrot.lane.b32.xlu0 %v2942, 8
        %v3281 = vpop.permute.xlu0 %3280
        %3284 = vrot.lane.b32.xlu0 %v3109, 16
        %v3285 = vpop.permute.xlu0 %3284
        %3288 = vrot.lane.b32.xlu0 %v3276, 24
        %v3289 = vpop.permute.xlu0 %3288
        %v3291 = vsel %vm633, %v2775, %v3281
        %v3292 = vsel %vm1311, %v3291, %v3285
        %v3293 = vsel %vm1313, %v3292, %v3289
        %v3294 = vpack.c.bf16 %v3293, %v3293
        %v3296 = vlaneseq
        %v3297 = vshrl.u32 %v3296, 7
        %v3298 = vsub.s32 0, %v3297
        %v3299 = vrot.slane %v2611, %v3298
        %v3305 = vunpack.c.l.b16 %v2606
        %v3306 = vunpack.c.l.b16 %v2607
        %v3307 = vunpack.c.l.b16 %v2608
        %v3308 = vunpack.c.l.b16 %v2609
        %v3309 = vpack.c.b16 %v3306, %v3305
        %v3310 = vpack.c.b16 %v3308, %v3307
        %v3314 = vsel %vm581, %v3294, 0
        %3316 = vmatprep.subr.bf16.mxu0 0
        %3317 = vmatpush1.bf16.msra.mxu0 0
        %3318 = vmatprep.subr.bf16.mxu0 0
        %3319 = vmatpush1.bf16.msra.mxu0 0
        %3320 = vmatprep.subr.bf16.mxu0 0
        %3321 = vmatpush1.bf16.msra.mxu0 0
        %3322 = vmatprep.subr.bf16.mxu0 0
        %3323 = vmatpush1.bf16.msra.mxu0 0
        %3324 = vmatprep.subr.bf16.mxu0 0
        %3325 = vmatpush1.bf16.msra.mxu0 0
        %3326 = vmatprep.subr.bf16.mxu0 0
        %3327 = vmatpush1.bf16.msra.mxu0 0
        %3328 = vmatprep.subr.bf16.mxu0 0
        %3329 = vmatpush1.bf16.msra.mxu0 %v3310
        %3330 = vmatprep.subr.bf16.mxu0 0
        %3331 = vmatpush1.bf16.msra.mxu0 %v3309
        %3332 = vmatprep.subr.bf16.mxu0 0
        %3333 = vmatpush2.bf16.msra.mxu0 0
        %3334 = vmatprep.subr.bf16.mxu0 0
        %3335 = vmatpush2.bf16.msra.mxu0 0
        %3336 = vmatprep.subr.bf16.mxu0 0
        %3337 = vmatpush2.bf16.msra.mxu0 0
        %3338 = vmatprep.subr.bf16.mxu0 0
        %3339 = vmatpush2.bf16.msra.mxu0 0
        %3340 = vmatprep.subr.bf16.mxu0 0
        %3341 = vmatpush2.bf16.msra.mxu0 0
        %3342 = vmatprep.subr.bf16.mxu0 0
        %3343 = vmatpush2.bf16.msra.mxu0 0
        %3344 = vmatprep.subr.bf16.mxu0 0
        %3345 = vmatpush2.bf16.msra.mxu0 0
        %3346 = vmatprep.subr.bf16.mxu0 0
        %3347 = vmatpush2.bf16.msra.mxu0 0
        %3348 = vmatprep.mubr.bf16.mxu0 0
        %3349 = vmatmul.mubr.bf16.gmra.mxu0 %v3314
        %v3350 = vpop.f32.mrf.mxu0
        %v3351 = vadd.f32 %v3299, %v3350
        %v3352 = vpop.f32.mrf.mxu0
        %v3353 = vpop.f32.mrf.mxu0
        %v3354 = vpop.f32.mrf.mxu0
        %3355 = vdwg.mxu0
        %v3356 = vadd.f32 %v2535, %v3351
        %s3357 = scalar_lea.vmem %s12, 3
        %v3358 = vld [vmem:[%s3357] sm:$0x1]
        %s3359 = scalar_lea.vmem %s13, 3
        %v3360 = vld [vmem:[%s3359] sm:$0x1]
        %v3361 = vsel %vm581, %v3356, 0.0
        %3362 = vadd.xlane.f32.xlu0 %v3361
        %v3363 = vpop.xlane.xlu0 %3362
        %v3364 = vmul.f32 %v3363, %v1383
        %v3365 = vsub.f32 %v3356, %v3364
        %v3366 = vmul.f32 %v3365, %v3365
        %v3367 = vsel %vm581, %v3366, 0.0
        %3368 = vadd.xlane.f32.xlu0 %v3367
        %v3369 = vpop.xlane.xlu0 %3368
        %v3370 = vmul.f32 %v3369, %v1383
        %v3371 = vadd.f32 %v3370, 1e-05
        %v3372 = vrsqrt.pop %v3371
        %v3373 = vmul.f32 %v3365, %v3372
        %v3375 = vlaneseq
        %v3376 = vshrl.u32 %v3375, 7
        %v3377 = vsub.s32 0, %v3376
        %v3378 = vrot.slane %v3358, %v3377
        %v3380 = vmul.f32 %v3373, %v3378
        %v3382 = vlaneseq
        %v3383 = vshrl.u32 %v3382, 7
        %v3384 = vsub.s32 0, %v3383
        %v3385 = vrot.slane %v3360, %v3384
        %v3387 = vadd.f32 %v3380, %v3385
        %s3388 = scalar_lea.vmem %s4, 48
        %v3389 = vld [vmem:[%s3388] sm:$0xf]
        %v3390 = vld [vmem:[%s3388 + $0x4] sm:$0xf]
        %v3391 = vld [vmem:[%s3388 + $0x8] sm:$0xf]
        %v3392 = vld [vmem:[%s3388 + $0xc] sm:$0xf]
        %s3393 = scalar_lea.vmem %s5, 3
        %v3394 = vld [vmem:[%s3393] sm:$0x1]
        %v3395 = vpack.c.bf16 %v3387, %v3387
        %v3397 = vlaneseq
        %v3398 = vshrl.u32 %v3397, 7
        %v3399 = vsub.s32 0, %v3398
        %v3400 = vrot.slane %v3394, %v3399
        %v3406 = vunpack.c.l.b16 %v3389
        %v3407 = vunpack.c.l.b16 %v3390
        %v3408 = vunpack.c.l.b16 %v3391
        %v3409 = vunpack.c.l.b16 %v3392
        %v3410 = vpack.c.b16 %v3407, %v3406
        %v3411 = vpack.c.b16 %v3409, %v3408
        %v3415 = vsel %vm581, %v3395, 0
        %3417 = vmatprep.subr.bf16.mxu0 0
        %3418 = vmatpush1.bf16.msra.mxu0 0
        %3419 = vmatprep.subr.bf16.mxu0 0
        %3420 = vmatpush1.bf16.msra.mxu0 0
        %3421 = vmatprep.subr.bf16.mxu0 0
        %3422 = vmatpush1.bf16.msra.mxu0 0
        %3423 = vmatprep.subr.bf16.mxu0 0
        %3424 = vmatpush1.bf16.msra.mxu0 0
        %3425 = vmatprep.subr.bf16.mxu0 0
        %3426 = vmatpush1.bf16.msra.mxu0 0
        %3427 = vmatprep.subr.bf16.mxu0 0
        %3428 = vmatpush1.bf16.msra.mxu0 0
        %3429 = vmatprep.subr.bf16.mxu0 0
        %3430 = vmatpush1.bf16.msra.mxu0 %v3411
        %3431 = vmatprep.subr.bf16.mxu0 0
        %3432 = vmatpush1.bf16.msra.mxu0 %v3410
        %3433 = vmatprep.subr.bf16.mxu0 0
        %3434 = vmatpush2.bf16.msra.mxu0 0
        %3435 = vmatprep.subr.bf16.mxu0 0
        %3436 = vmatpush2.bf16.msra.mxu0 0
        %3437 = vmatprep.subr.bf16.mxu0 0
        %3438 = vmatpush2.bf16.msra.mxu0 0
        %3439 = vmatprep.subr.bf16.mxu0 0
        %3440 = vmatpush2.bf16.msra.mxu0 0
        %3441 = vmatprep.subr.bf16.mxu0 0
        %3442 = vmatpush2.bf16.msra.mxu0 0
        %3443 = vmatprep.subr.bf16.mxu0 0
        %3444 = vmatpush2.bf16.msra.mxu0 0
        %3445 = vmatprep.subr.bf16.mxu0 0
        %3446 = vmatpush2.bf16.msra.mxu0 0
        %3447 = vmatprep.subr.bf16.mxu0 0
        %3448 = vmatpush2.bf16.msra.mxu0 0
        %3449 = vmatprep.mubr.bf16.mxu0 0
        %3450 = vmatmul.mubr.bf16.gmra.mxu0 %v3415
        %v3451 = vpop.f32.mrf.mxu0
        %v3452 = vadd.f32 %v3400, %v3451
        %v3453 = vpop.f32.mrf.mxu0
        %v3454 = vpop.f32.mrf.mxu0
        %v3455 = vpop.f32.mrf.mxu0
        %3456 = vdwg.mxu0
        %3457 = vrot.lane.b32.xlu0 %v3410, 96
        %v3458 = vpop.permute.xlu0 %3457
        %3459 = vrot.lane.b32.xlu0 %v3411, 96
        %v3460 = vpop.permute.xlu0 %3459
        %3463 = vrot.lane.b32.xlu0 %v3400, 96
        %v3464 = vpop.permute.xlu0 %3463
        %3466 = vmatprep.subr.bf16.mxu0 0
        %3467 = vmatpush1.bf16.msra.mxu0 0
        %3468 = vmatprep.subr.bf16.mxu0 0
        %3469 = vmatpush1.bf16.msra.mxu0 0
        %3470 = vmatprep.subr.bf16.mxu0 0
        %3471 = vmatpush1.bf16.msra.mxu0 0
        %3472 = vmatprep.subr.bf16.mxu0 0
        %3473 = vmatpush1.bf16.msra.mxu0 0
        %3474 = vmatprep.subr.bf16.mxu0 0
        %3475 = vmatpush1.bf16.msra.mxu0 0
        %3476 = vmatprep.subr.bf16.mxu0 0
        %3477 = vmatpush1.bf16.msra.mxu0 0
        %3478 = vmatprep.subr.bf16.mxu0 0
        %3479 = vmatpush1.bf16.msra.mxu0 %v3460
        %3480 = vmatprep.subr.bf16.mxu0 0
        %3481 = vmatpush1.bf16.msra.mxu0 %v3458
        %3482 = vmatprep.subr.bf16.mxu0 0
        %3483 = vmatpush2.bf16.msra.mxu0 0
        %3484 = vmatprep.subr.bf16.mxu0 0
        %3485 = vmatpush2.bf16.msra.mxu0 0
        %3486 = vmatprep.subr.bf16.mxu0 0
        %3487 = vmatpush2.bf16.msra.mxu0 0
        %3488 = vmatprep.subr.bf16.mxu0 0
        %3489 = vmatpush2.bf16.msra.mxu0 0
        %3490 = vmatprep.subr.bf16.mxu0 0
        %3491 = vmatpush2.bf16.msra.mxu0 0
        %3492 = vmatprep.subr.bf16.mxu0 0
        %3493 = vmatpush2.bf16.msra.mxu0 0
        %3494 = vmatprep.subr.bf16.mxu0 0
        %3495 = vmatpush2.bf16.msra.mxu0 0
        %3496 = vmatprep.subr.bf16.mxu0 0
        %3497 = vmatpush2.bf16.msra.mxu0 0
        %3498 = vmatprep.mubr.bf16.mxu0 0
        %3499 = vmatmul.mubr.bf16.gmra.mxu0 %v1488
        %v3500 = vpop.f32.mrf.mxu0
        %v3501 = vadd.f32 %v3464, %v3500
        %v3502 = vpop.f32.mrf.mxu0
        %v3503 = vpop.f32.mrf.mxu0
        %v3504 = vadd.f32 %v3464, %v3503
        %v3505 = vpop.f32.mrf.mxu0
        %3506 = vdwg.mxu0
        %s3507 = scalar_lea.vmem %s6, 48
        %v3508 = vld [vmem:[%s3507] sm:$0xf]
        %v3509 = vld [vmem:[%s3507 + $0x4] sm:$0xf]
        %v3510 = vld [vmem:[%s3507 + $0x8] sm:$0xf]
        %v3511 = vld [vmem:[%s3507 + $0xc] sm:$0xf]
        %s3512 = scalar_lea.vmem %s7, 3
        %v3513 = vld [vmem:[%s3512] sm:$0x1]
        %v3515 = vsel %vm633, %v3452, 0
        %v3518 = vsel %vm633, %v3501, 0
        %v3521 = vsel %vm633, %v3504, 0
        %3523 = vmatprep.subr.mxu0 0.0
        %3524 = vmatpush1.xpose.msra.mxu0 0.0
        %3525 = vmatprep.subr.mxu0 0.0
        %3526 = vmatpush1.xpose.msra.mxu0 0.0
        %3527 = vmatprep.subr.mxu0 0.0
        %3528 = vmatpush1.xpose.msra.mxu0 0.0
        %3529 = vmatprep.subr.mxu0 0.0
        %3530 = vmatpush1.xpose.msra.mxu0 0.0
        %3531 = vmatprep.subr.mxu0 0.0
        %3532 = vmatpush1.xpose.msra.mxu0 0.0
        %3533 = vmatprep.subr.mxu0 0.0
        %3534 = vmatpush1.xpose.msra.mxu0 0.0
        %3535 = vmatprep.subr.mxu0 0.0
        %3536 = vmatpush1.xpose.msra.mxu0 0.0
        %3537 = vmatprep.subr.mxu0 0.0
        %3538 = vmatpush1.xpose.msra.mxu0 0.0
        %3539 = vmatprep.subr.mxu0 0.0
        %3540 = vmatpush1.xpose.msra.mxu0 0.0
        %3541 = vmatprep.subr.mxu0 0.0
        %3542 = vmatpush1.xpose.msra.mxu0 0.0
        %3543 = vmatprep.subr.mxu0 0.0
        %3544 = vmatpush1.xpose.msra.mxu0 0.0
        %3545 = vmatprep.subr.mxu0 0.0
        %3546 = vmatpush1.xpose.msra.mxu0 0.0
        %3547 = vmatprep.subr.mxu0 0.0
        %3548 = vmatpush1.xpose.msra.mxu0 0.0
        %3549 = vmatprep.subr.mxu0 0.0
        %3550 = vmatpush1.xpose.msra.mxu0 0.0
        %3551 = vmatprep.subr.mxu0 0.0
        %3552 = vmatpush1.xpose.msra.mxu0 %v3521
        %3553 = vmatprep.subr.mxu0 0.0
        %3554 = vmatpush1.xpose.msra.mxu0 %v3518
        %3555 = vmatprep.subr.mxu0 0.0
        %3556 = vmatpush2.xpose.msra.mxu0 0.0
        %3557 = vmatprep.subr.mxu0 0.0
        %3558 = vmatpush2.xpose.msra.mxu0 0.0
        %3559 = vmatprep.subr.mxu0 0.0
        %3560 = vmatpush2.xpose.msra.mxu0 0.0
        %3561 = vmatprep.subr.mxu0 0.0
        %3562 = vmatpush2.xpose.msra.mxu0 0.0
        %3563 = vmatprep.subr.mxu0 0.0
        %3564 = vmatpush2.xpose.msra.mxu0 0.0
        %3565 = vmatprep.subr.mxu0 0.0
        %3566 = vmatpush2.xpose.msra.mxu0 0.0
        %3567 = vmatprep.subr.mxu0 0.0
        %3568 = vmatpush2.xpose.msra.mxu0 0.0
        %3569 = vmatprep.subr.mxu0 0.0
        %3570 = vmatpush2.xpose.msra.mxu0 0.0
        %3571 = vmatprep.subr.mxu0 0.0
        %3572 = vmatpush2.xpose.msra.mxu0 0.0
        %3573 = vmatprep.subr.mxu0 0.0
        %3574 = vmatpush2.xpose.msra.mxu0 0.0
        %3575 = vmatprep.subr.mxu0 0.0
        %3576 = vmatpush2.xpose.msra.mxu0 0.0
        %3577 = vmatprep.subr.mxu0 0.0
        %3578 = vmatpush2.xpose.msra.mxu0 0.0
        %3579 = vmatprep.subr.mxu0 0.0
        %3580 = vmatpush2.xpose.msra.mxu0 0.0
        %3581 = vmatprep.subr.mxu0 0.0
        %3582 = vmatpush2.xpose.msra.mxu0 0.0
        %3583 = vmatprep.subr.mxu0 0.0
        %3584 = vmatpush2.xpose.msra.mxu0 0.0
        %3585 = vmatprep.subr.mxu0 0.0
        %3586 = vmatpush2.xpose.msra.mxu0 0.0
        %3587 = vmatprep.mubr.f32.mxu0 0.0
        %3588 = vmatmul.mubr.f32.gmra.mxu0 %v3515
        %v3589 = vpop.f32.mrf.mxu0
        %v3590 = vadd.f32 0.0, %v3589
        %v3591 = vpop.f32.mrf.mxu0
        %3592 = vdwg.mxu0
        %v3593 = vmul.f32 %v3590, 0.35355338
        %v3594 = vadd.f32 %v3593, %v1622
        %v3595 = vsel %vm1625, %v3594, -inf
        %3596 = vmax.xlane.f32.xlu0 %v3595
        %v3597 = vpop.xlane.xlu0 %3596
        %v3598 = vsub.f32 %v3594, %v3597
        %v3599 = vmul.f32 %v3598, 1.442695
        %v3600 = vpow.pop %v3599
        %v3601 = vsel %vm1625, %v3600, 0.0
        %3602 = vadd.xlane.f32.xlu0 %v3601
        %v3603 = vpop.xlane.xlu0 %3602
        %v3604 = vrcp.pop %v3603
        %v3605 = vmul.f32 %v3600, %v3604
        %3606 = vrot.lane.b32.xlu0 %v3501, 96
        %v3607 = vpop.permute.xlu0 %3606
        %3608 = vrot.lane.b32.xlu0 %v3504, 96
        %v3609 = vpop.permute.xlu0 %3608
        %v3612 = vsel %vm1625, %v3605, 0
        %v3614 = vsel %vm1645, %v3609, 0
        %3616 = vmatprep.subr.mxu0 0.0
        %3617 = vmatpush1.msra.mxu0 0.0
        %3618 = vmatprep.subr.mxu0 0.0
        %3619 = vmatpush1.msra.mxu0 0.0
        %3620 = vmatprep.subr.mxu0 0.0
        %3621 = vmatpush1.msra.mxu0 0.0
        %3622 = vmatprep.subr.mxu0 0.0
        %3623 = vmatpush1.msra.mxu0 0.0
        %3624 = vmatprep.subr.mxu0 0.0
        %3625 = vmatpush1.msra.mxu0 0.0
        %3626 = vmatprep.subr.mxu0 0.0
        %3627 = vmatpush1.msra.mxu0 0.0
        %3628 = vmatprep.subr.mxu0 0.0
        %3629 = vmatpush1.msra.mxu0 0.0
        %3630 = vmatprep.subr.mxu0 0.0
        %3631 = vmatpush1.msra.mxu0 0.0
        %3632 = vmatprep.subr.mxu0 0.0
        %3633 = vmatpush1.msra.mxu0 0.0
        %3634 = vmatprep.subr.mxu0 0.0
        %3635 = vmatpush1.msra.mxu0 0.0
        %3636 = vmatprep.subr.mxu0 0.0
        %3637 = vmatpush1.msra.mxu0 0.0
        %3638 = vmatprep.subr.mxu0 0.0
        %3639 = vmatpush1.msra.mxu0 0.0
        %3640 = vmatprep.subr.mxu0 0.0
        %3641 = vmatpush1.msra.mxu0 0.0
        %3642 = vmatprep.subr.mxu0 0.0
        %3643 = vmatpush1.msra.mxu0 0.0
        %3644 = vmatprep.subr.mxu0 0.0
        %3645 = vmatpush1.msra.mxu0 %v3614
        %3646 = vmatprep.subr.mxu0 0.0
        %3647 = vmatpush1.msra.mxu0 %v3607
        %3648 = vmatprep.subr.mxu0 0.0
        %3649 = vmatpush2.msra.mxu0 0.0
        %3650 = vmatprep.subr.mxu0 0.0
        %3651 = vmatpush2.msra.mxu0 0.0
        %3652 = vmatprep.subr.mxu0 0.0
        %3653 = vmatpush2.msra.mxu0 0.0
        %3654 = vmatprep.subr.mxu0 0.0
        %3655 = vmatpush2.msra.mxu0 0.0
        %3656 = vmatprep.subr.mxu0 0.0
        %3657 = vmatpush2.msra.mxu0 0.0
        %3658 = vmatprep.subr.mxu0 0.0
        %3659 = vmatpush2.msra.mxu0 0.0
        %3660 = vmatprep.subr.mxu0 0.0
        %3661 = vmatpush2.msra.mxu0 0.0
        %3662 = vmatprep.subr.mxu0 0.0
        %3663 = vmatpush2.msra.mxu0 0.0
        %3664 = vmatprep.subr.mxu0 0.0
        %3665 = vmatpush2.msra.mxu0 0.0
        %3666 = vmatprep.subr.mxu0 0.0
        %3667 = vmatpush2.msra.mxu0 0.0
        %3668 = vmatprep.subr.mxu0 0.0
        %3669 = vmatpush2.msra.mxu0 0.0
        %3670 = vmatprep.subr.mxu0 0.0
        %3671 = vmatpush2.msra.mxu0 0.0
        %3672 = vmatprep.subr.mxu0 0.0
        %3673 = vmatpush2.msra.mxu0 0.0
        %3674 = vmatprep.subr.mxu0 0.0
        %3675 = vmatpush2.msra.mxu0 0.0
        %3676 = vmatprep.subr.mxu0 0.0
        %3677 = vmatpush2.msra.mxu0 0.0
        %3678 = vmatprep.subr.mxu0 0.0
        %3679 = vmatpush2.msra.mxu0 0.0
        %3680 = vmatprep.mubr.f32.mxu0 0.0
        %3681 = vmatmul.mubr.f32.gmra.mxu0 %v3612
        %v3682 = vpop.f32.mrf.mxu0
        %v3683 = vadd.f32 0.0, %v3682
        %v3684 = vpop.f32.mrf.mxu0
        %3685 = vdwg.mxu0
        %3686 = vrot.lane.b32.xlu0 %v3452, 120
        %v3687 = vpop.permute.xlu0 %3686
        %3688 = vrot.lane.b32.xlu0 %v3501, 120
        %v3689 = vpop.permute.xlu0 %3688
        %3690 = vrot.lane.b32.xlu0 %v3504, 120
        %v3691 = vpop.permute.xlu0 %3690
        %v3692 = vsel %vm633, %v3687, 0
        %v3694 = vsel %vm633, %v3689, 0
        %v3696 = vsel %vm633, %v3691, 0
        %3698 = vmatprep.subr.mxu0 0.0
        %3699 = vmatpush1.xpose.msra.mxu0 0.0
        %3700 = vmatprep.subr.mxu0 0.0
        %3701 = vmatpush1.xpose.msra.mxu0 0.0
        %3702 = vmatprep.subr.mxu0 0.0
        %3703 = vmatpush1.xpose.msra.mxu0 0.0
        %3704 = vmatprep.subr.mxu0 0.0
        %3705 = vmatpush1.xpose.msra.mxu0 0.0
        %3706 = vmatprep.subr.mxu0 0.0
        %3707 = vmatpush1.xpose.msra.mxu0 0.0
        %3708 = vmatprep.subr.mxu0 0.0
        %3709 = vmatpush1.xpose.msra.mxu0 0.0
        %3710 = vmatprep.subr.mxu0 0.0
        %3711 = vmatpush1.xpose.msra.mxu0 0.0
        %3712 = vmatprep.subr.mxu0 0.0
        %3713 = vmatpush1.xpose.msra.mxu0 0.0
        %3714 = vmatprep.subr.mxu0 0.0
        %3715 = vmatpush1.xpose.msra.mxu0 0.0
        %3716 = vmatprep.subr.mxu0 0.0
        %3717 = vmatpush1.xpose.msra.mxu0 0.0
        %3718 = vmatprep.subr.mxu0 0.0
        %3719 = vmatpush1.xpose.msra.mxu0 0.0
        %3720 = vmatprep.subr.mxu0 0.0
        %3721 = vmatpush1.xpose.msra.mxu0 0.0
        %3722 = vmatprep.subr.mxu0 0.0
        %3723 = vmatpush1.xpose.msra.mxu0 0.0
        %3724 = vmatprep.subr.mxu0 0.0
        %3725 = vmatpush1.xpose.msra.mxu0 0.0
        %3726 = vmatprep.subr.mxu0 0.0
        %3727 = vmatpush1.xpose.msra.mxu0 %v3696
        %3728 = vmatprep.subr.mxu0 0.0
        %3729 = vmatpush1.xpose.msra.mxu0 %v3694
        %3730 = vmatprep.subr.mxu0 0.0
        %3731 = vmatpush2.xpose.msra.mxu0 0.0
        %3732 = vmatprep.subr.mxu0 0.0
        %3733 = vmatpush2.xpose.msra.mxu0 0.0
        %3734 = vmatprep.subr.mxu0 0.0
        %3735 = vmatpush2.xpose.msra.mxu0 0.0
        %3736 = vmatprep.subr.mxu0 0.0
        %3737 = vmatpush2.xpose.msra.mxu0 0.0
        %3738 = vmatprep.subr.mxu0 0.0
        %3739 = vmatpush2.xpose.msra.mxu0 0.0
        %3740 = vmatprep.subr.mxu0 0.0
        %3741 = vmatpush2.xpose.msra.mxu0 0.0
        %3742 = vmatprep.subr.mxu0 0.0
        %3743 = vmatpush2.xpose.msra.mxu0 0.0
        %3744 = vmatprep.subr.mxu0 0.0
        %3745 = vmatpush2.xpose.msra.mxu0 0.0
        %3746 = vmatprep.subr.mxu0 0.0
        %3747 = vmatpush2.xpose.msra.mxu0 0.0
        %3748 = vmatprep.subr.mxu0 0.0
        %3749 = vmatpush2.xpose.msra.mxu0 0.0
        %3750 = vmatprep.subr.mxu0 0.0
        %3751 = vmatpush2.xpose.msra.mxu0 0.0
        %3752 = vmatprep.subr.mxu0 0.0
        %3753 = vmatpush2.xpose.msra.mxu0 0.0
        %3754 = vmatprep.subr.mxu0 0.0
        %3755 = vmatpush2.xpose.msra.mxu0 0.0
        %3756 = vmatprep.subr.mxu0 0.0
        %3757 = vmatpush2.xpose.msra.mxu0 0.0
        %3758 = vmatprep.subr.mxu0 0.0
        %3759 = vmatpush2.xpose.msra.mxu0 0.0
        %3760 = vmatprep.subr.mxu0 0.0
        %3761 = vmatpush2.xpose.msra.mxu0 0.0
        %3762 = vmatprep.mubr.f32.mxu0 0.0
        %3763 = vmatmul.mubr.f32.gmra.mxu0 %v3692
        %v3764 = vpop.f32.mrf.mxu0
        %v3765 = vadd.f32 0.0, %v3764
        %v3766 = vpop.f32.mrf.mxu0
        %3767 = vdwg.mxu0
        %v3768 = vmul.f32 %v3765, 0.35355338
        %v3769 = vadd.f32 %v3768, %v1622
        %v3770 = vsel %vm1625, %v3769, -inf
        %3771 = vmax.xlane.f32.xlu0 %v3770
        %v3772 = vpop.xlane.xlu0 %3771
        %v3773 = vsub.f32 %v3769, %v3772
        %v3774 = vmul.f32 %v3773, 1.442695
        %v3775 = vpow.pop %v3774
        %v3776 = vsel %vm1625, %v3775, 0.0
        %3777 = vadd.xlane.f32.xlu0 %v3776
        %v3778 = vpop.xlane.xlu0 %3777
        %v3779 = vrcp.pop %v3778
        %v3780 = vmul.f32 %v3775, %v3779
        %3781 = vrot.lane.b32.xlu0 %v3501, 88
        %v3782 = vpop.permute.xlu0 %3781
        %3783 = vrot.lane.b32.xlu0 %v3504, 88
        %v3784 = vpop.permute.xlu0 %3783
        %v3787 = vsel %vm1625, %v3780, 0
        %v3789 = vsel %vm1645, %v3784, 0
        %3791 = vmatprep.subr.mxu0 0.0
        %3792 = vmatpush1.msra.mxu0 0.0
        %3793 = vmatprep.subr.mxu0 0.0
        %3794 = vmatpush1.msra.mxu0 0.0
        %3795 = vmatprep.subr.mxu0 0.0
        %3796 = vmatpush1.msra.mxu0 0.0
        %3797 = vmatprep.subr.mxu0 0.0
        %3798 = vmatpush1.msra.mxu0 0.0
        %3799 = vmatprep.subr.mxu0 0.0
        %3800 = vmatpush1.msra.mxu0 0.0
        %3801 = vmatprep.subr.mxu0 0.0
        %3802 = vmatpush1.msra.mxu0 0.0
        %3803 = vmatprep.subr.mxu0 0.0
        %3804 = vmatpush1.msra.mxu0 0.0
        %3805 = vmatprep.subr.mxu0 0.0
        %3806 = vmatpush1.msra.mxu0 0.0
        %3807 = vmatprep.subr.mxu0 0.0
        %3808 = vmatpush1.msra.mxu0 0.0
        %3809 = vmatprep.subr.mxu0 0.0
        %3810 = vmatpush1.msra.mxu0 0.0
        %3811 = vmatprep.subr.mxu0 0.0
        %3812 = vmatpush1.msra.mxu0 0.0
        %3813 = vmatprep.subr.mxu0 0.0
        %3814 = vmatpush1.msra.mxu0 0.0
        %3815 = vmatprep.subr.mxu0 0.0
        %3816 = vmatpush1.msra.mxu0 0.0
        %3817 = vmatprep.subr.mxu0 0.0
        %3818 = vmatpush1.msra.mxu0 0.0
        %3819 = vmatprep.subr.mxu0 0.0
        %3820 = vmatpush1.msra.mxu0 %v3789
        %3821 = vmatprep.subr.mxu0 0.0
        %3822 = vmatpush1.msra.mxu0 %v3782
        %3823 = vmatprep.subr.mxu0 0.0
        %3824 = vmatpush2.msra.mxu0 0.0
        %3825 = vmatprep.subr.mxu0 0.0
        %3826 = vmatpush2.msra.mxu0 0.0
        %3827 = vmatprep.subr.mxu0 0.0
        %3828 = vmatpush2.msra.mxu0 0.0
        %3829 = vmatprep.subr.mxu0 0.0
        %3830 = vmatpush2.msra.mxu0 0.0
        %3831 = vmatprep.subr.mxu0 0.0
        %3832 = vmatpush2.msra.mxu0 0.0
        %3833 = vmatprep.subr.mxu0 0.0
        %3834 = vmatpush2.msra.mxu0 0.0
        %3835 = vmatprep.subr.mxu0 0.0
        %3836 = vmatpush2.msra.mxu0 0.0
        %3837 = vmatprep.subr.mxu0 0.0
        %3838 = vmatpush2.msra.mxu0 0.0
        %3839 = vmatprep.subr.mxu0 0.0
        %3840 = vmatpush2.msra.mxu0 0.0
        %3841 = vmatprep.subr.mxu0 0.0
        %3842 = vmatpush2.msra.mxu0 0.0
        %3843 = vmatprep.subr.mxu0 0.0
        %3844 = vmatpush2.msra.mxu0 0.0
        %3845 = vmatprep.subr.mxu0 0.0
        %3846 = vmatpush2.msra.mxu0 0.0
        %3847 = vmatprep.subr.mxu0 0.0
        %3848 = vmatpush2.msra.mxu0 0.0
        %3849 = vmatprep.subr.mxu0 0.0
        %3850 = vmatpush2.msra.mxu0 0.0
        %3851 = vmatprep.subr.mxu0 0.0
        %3852 = vmatpush2.msra.mxu0 0.0
        %3853 = vmatprep.subr.mxu0 0.0
        %3854 = vmatpush2.msra.mxu0 0.0
        %3855 = vmatprep.mubr.f32.mxu0 0.0
        %3856 = vmatmul.mubr.f32.gmra.mxu0 %v3787
        %v3857 = vpop.f32.mrf.mxu0
        %v3858 = vadd.f32 0.0, %v3857
        %v3859 = vpop.f32.mrf.mxu0
        %3860 = vdwg.mxu0
        %3861 = vrot.lane.b32.xlu0 %v3452, 112
        %v3862 = vpop.permute.xlu0 %3861
        %3863 = vrot.lane.b32.xlu0 %v3501, 112
        %v3864 = vpop.permute.xlu0 %3863
        %3865 = vrot.lane.b32.xlu0 %v3504, 112
        %v3866 = vpop.permute.xlu0 %3865
        %v3867 = vsel %vm633, %v3862, 0
        %v3869 = vsel %vm633, %v3864, 0
        %v3871 = vsel %vm633, %v3866, 0
        %3873 = vmatprep.subr.mxu0 0.0
        %3874 = vmatpush1.xpose.msra.mxu0 0.0
        %3875 = vmatprep.subr.mxu0 0.0
        %3876 = vmatpush1.xpose.msra.mxu0 0.0
        %3877 = vmatprep.subr.mxu0 0.0
        %3878 = vmatpush1.xpose.msra.mxu0 0.0
        %3879 = vmatprep.subr.mxu0 0.0
        %3880 = vmatpush1.xpose.msra.mxu0 0.0
        %3881 = vmatprep.subr.mxu0 0.0
        %3882 = vmatpush1.xpose.msra.mxu0 0.0
        %3883 = vmatprep.subr.mxu0 0.0
        %3884 = vmatpush1.xpose.msra.mxu0 0.0
        %3885 = vmatprep.subr.mxu0 0.0
        %3886 = vmatpush1.xpose.msra.mxu0 0.0
        %3887 = vmatprep.subr.mxu0 0.0
        %3888 = vmatpush1.xpose.msra.mxu0 0.0
        %3889 = vmatprep.subr.mxu0 0.0
        %3890 = vmatpush1.xpose.msra.mxu0 0.0
        %3891 = vmatprep.subr.mxu0 0.0
        %3892 = vmatpush1.xpose.msra.mxu0 0.0
        %3893 = vmatprep.subr.mxu0 0.0
        %3894 = vmatpush1.xpose.msra.mxu0 0.0
        %3895 = vmatprep.subr.mxu0 0.0
        %3896 = vmatpush1.xpose.msra.mxu0 0.0
        %3897 = vmatprep.subr.mxu0 0.0
        %3898 = vmatpush1.xpose.msra.mxu0 0.0
        %3899 = vmatprep.subr.mxu0 0.0
        %3900 = vmatpush1.xpose.msra.mxu0 0.0
        %3901 = vmatprep.subr.mxu0 0.0
        %3902 = vmatpush1.xpose.msra.mxu0 %v3871
        %3903 = vmatprep.subr.mxu0 0.0
        %3904 = vmatpush1.xpose.msra.mxu0 %v3869
        %3905 = vmatprep.subr.mxu0 0.0
        %3906 = vmatpush2.xpose.msra.mxu0 0.0
        %3907 = vmatprep.subr.mxu0 0.0
        %3908 = vmatpush2.xpose.msra.mxu0 0.0
        %3909 = vmatprep.subr.mxu0 0.0
        %3910 = vmatpush2.xpose.msra.mxu0 0.0
        %3911 = vmatprep.subr.mxu0 0.0
        %3912 = vmatpush2.xpose.msra.mxu0 0.0
        %3913 = vmatprep.subr.mxu0 0.0
        %3914 = vmatpush2.xpose.msra.mxu0 0.0
        %3915 = vmatprep.subr.mxu0 0.0
        %3916 = vmatpush2.xpose.msra.mxu0 0.0
        %3917 = vmatprep.subr.mxu0 0.0
        %3918 = vmatpush2.xpose.msra.mxu0 0.0
        %3919 = vmatprep.subr.mxu0 0.0
        %3920 = vmatpush2.xpose.msra.mxu0 0.0
        %3921 = vmatprep.subr.mxu0 0.0
        %3922 = vmatpush2.xpose.msra.mxu0 0.0
        %3923 = vmatprep.subr.mxu0 0.0
        %3924 = vmatpush2.xpose.msra.mxu0 0.0
        %3925 = vmatprep.subr.mxu0 0.0
        %3926 = vmatpush2.xpose.msra.mxu0 0.0
        %3927 = vmatprep.subr.mxu0 0.0
        %3928 = vmatpush2.xpose.msra.mxu0 0.0
        %3929 = vmatprep.subr.mxu0 0.0
        %3930 = vmatpush2.xpose.msra.mxu0 0.0
        %3931 = vmatprep.subr.mxu0 0.0
        %3932 = vmatpush2.xpose.msra.mxu0 0.0
        %3933 = vmatprep.subr.mxu0 0.0
        %3934 = vmatpush2.xpose.msra.mxu0 0.0
        %3935 = vmatprep.subr.mxu0 0.0
        %3936 = vmatpush2.xpose.msra.mxu0 0.0
        %3937 = vmatprep.mubr.f32.mxu0 0.0
        %3938 = vmatmul.mubr.f32.gmra.mxu0 %v3867
        %v3939 = vpop.f32.mrf.mxu0
        %v3940 = vadd.f32 0.0, %v3939
        %v3941 = vpop.f32.mrf.mxu0
        %3942 = vdwg.mxu0
        %v3943 = vmul.f32 %v3940, 0.35355338
        %v3944 = vadd.f32 %v3943, %v1622
        %v3945 = vsel %vm1625, %v3944, -inf
        %3946 = vmax.xlane.f32.xlu0 %v3945
        %v3947 = vpop.xlane.xlu0 %3946
        %v3948 = vsub.f32 %v3944, %v3947
        %v3949 = vmul.f32 %v3948, 1.442695
        %v3950 = vpow.pop %v3949
        %v3951 = vsel %vm1625, %v3950, 0.0
        %3952 = vadd.xlane.f32.xlu0 %v3951
        %v3953 = vpop.xlane.xlu0 %3952
        %v3954 = vrcp.pop %v3953
        %v3955 = vmul.f32 %v3950, %v3954
        %3956 = vrot.lane.b32.xlu0 %v3501, 80
        %v3957 = vpop.permute.xlu0 %3956
        %3958 = vrot.lane.b32.xlu0 %v3504, 80
        %v3959 = vpop.permute.xlu0 %3958
        %v3962 = vsel %vm1625, %v3955, 0
        %v3964 = vsel %vm1645, %v3959, 0
        %3966 = vmatprep.subr.mxu0 0.0
        %3967 = vmatpush1.msra.mxu0 0.0
        %3968 = vmatprep.subr.mxu0 0.0
        %3969 = vmatpush1.msra.mxu0 0.0
        %3970 = vmatprep.subr.mxu0 0.0
        %3971 = vmatpush1.msra.mxu0 0.0
        %3972 = vmatprep.subr.mxu0 0.0
        %3973 = vmatpush1.msra.mxu0 0.0
        %3974 = vmatprep.subr.mxu0 0.0
        %3975 = vmatpush1.msra.mxu0 0.0
        %3976 = vmatprep.subr.mxu0 0.0
        %3977 = vmatpush1.msra.mxu0 0.0
        %3978 = vmatprep.subr.mxu0 0.0
        %3979 = vmatpush1.msra.mxu0 0.0
        %3980 = vmatprep.subr.mxu0 0.0
        %3981 = vmatpush1.msra.mxu0 0.0
        %3982 = vmatprep.subr.mxu0 0.0
        %3983 = vmatpush1.msra.mxu0 0.0
        %3984 = vmatprep.subr.mxu0 0.0
        %3985 = vmatpush1.msra.mxu0 0.0
        %3986 = vmatprep.subr.mxu0 0.0
        %3987 = vmatpush1.msra.mxu0 0.0
        %3988 = vmatprep.subr.mxu0 0.0
        %3989 = vmatpush1.msra.mxu0 0.0
        %3990 = vmatprep.subr.mxu0 0.0
        %3991 = vmatpush1.msra.mxu0 0.0
        %3992 = vmatprep.subr.mxu0 0.0
        %3993 = vmatpush1.msra.mxu0 0.0
        %3994 = vmatprep.subr.mxu0 0.0
        %3995 = vmatpush1.msra.mxu0 %v3964
        %3996 = vmatprep.subr.mxu0 0.0
        %3997 = vmatpush1.msra.mxu0 %v3957
        %3998 = vmatprep.subr.mxu0 0.0
        %3999 = vmatpush2.msra.mxu0 0.0
        %4000 = vmatprep.subr.mxu0 0.0
        %4001 = vmatpush2.msra.mxu0 0.0
        %4002 = vmatprep.subr.mxu0 0.0
        %4003 = vmatpush2.msra.mxu0 0.0
        %4004 = vmatprep.subr.mxu0 0.0
        %4005 = vmatpush2.msra.mxu0 0.0
        %4006 = vmatprep.subr.mxu0 0.0
        %4007 = vmatpush2.msra.mxu0 0.0
        %4008 = vmatprep.subr.mxu0 0.0
        %4009 = vmatpush2.msra.mxu0 0.0
        %4010 = vmatprep.subr.mxu0 0.0
        %4011 = vmatpush2.msra.mxu0 0.0
        %4012 = vmatprep.subr.mxu0 0.0
        %4013 = vmatpush2.msra.mxu0 0.0
        %4014 = vmatprep.subr.mxu0 0.0
        %4015 = vmatpush2.msra.mxu0 0.0
        %4016 = vmatprep.subr.mxu0 0.0
        %4017 = vmatpush2.msra.mxu0 0.0
        %4018 = vmatprep.subr.mxu0 0.0
        %4019 = vmatpush2.msra.mxu0 0.0
        %4020 = vmatprep.subr.mxu0 0.0
        %4021 = vmatpush2.msra.mxu0 0.0
        %4022 = vmatprep.subr.mxu0 0.0
        %4023 = vmatpush2.msra.mxu0 0.0
        %4024 = vmatprep.subr.mxu0 0.0
        %4025 = vmatpush2.msra.mxu0 0.0
        %4026 = vmatprep.subr.mxu0 0.0
        %4027 = vmatpush2.msra.mxu0 0.0
        %4028 = vmatprep.subr.mxu0 0.0
        %4029 = vmatpush2.msra.mxu0 0.0
        %4030 = vmatprep.mubr.f32.mxu0 0.0
        %4031 = vmatmul.mubr.f32.gmra.mxu0 %v3962
        %v4032 = vpop.f32.mrf.mxu0
        %v4033 = vadd.f32 0.0, %v4032
        %v4034 = vpop.f32.mrf.mxu0
        %4035 = vdwg.mxu0
        %4036 = vrot.lane.b32.xlu0 %v3452, 104
        %v4037 = vpop.permute.xlu0 %4036
        %4038 = vrot.lane.b32.xlu0 %v3501, 104
        %v4039 = vpop.permute.xlu0 %4038
        %4040 = vrot.lane.b32.xlu0 %v3504, 104
        %v4041 = vpop.permute.xlu0 %4040
        %v4042 = vsel %vm633, %v4037, 0
        %v4044 = vsel %vm633, %v4039, 0
        %v4046 = vsel %vm633, %v4041, 0
        %4048 = vmatprep.subr.mxu0 0.0
        %4049 = vmatpush1.xpose.msra.mxu0 0.0
        %4050 = vmatprep.subr.mxu0 0.0
        %4051 = vmatpush1.xpose.msra.mxu0 0.0
        %4052 = vmatprep.subr.mxu0 0.0
        %4053 = vmatpush1.xpose.msra.mxu0 0.0
        %4054 = vmatprep.subr.mxu0 0.0
        %4055 = vmatpush1.xpose.msra.mxu0 0.0
        %4056 = vmatprep.subr.mxu0 0.0
        %4057 = vmatpush1.xpose.msra.mxu0 0.0
        %4058 = vmatprep.subr.mxu0 0.0
        %4059 = vmatpush1.xpose.msra.mxu0 0.0
        %4060 = vmatprep.subr.mxu0 0.0
        %4061 = vmatpush1.xpose.msra.mxu0 0.0
        %4062 = vmatprep.subr.mxu0 0.0
        %4063 = vmatpush1.xpose.msra.mxu0 0.0
        %4064 = vmatprep.subr.mxu0 0.0
        %4065 = vmatpush1.xpose.msra.mxu0 0.0
        %4066 = vmatprep.subr.mxu0 0.0
        %4067 = vmatpush1.xpose.msra.mxu0 0.0
        %4068 = vmatprep.subr.mxu0 0.0
        %4069 = vmatpush1.xpose.msra.mxu0 0.0
        %4070 = vmatprep.subr.mxu0 0.0
        %4071 = vmatpush1.xpose.msra.mxu0 0.0
        %4072 = vmatprep.subr.mxu0 0.0
        %4073 = vmatpush1.xpose.msra.mxu0 0.0
        %4074 = vmatprep.subr.mxu0 0.0
        %4075 = vmatpush1.xpose.msra.mxu0 0.0
        %4076 = vmatprep.subr.mxu0 0.0
        %4077 = vmatpush1.xpose.msra.mxu0 %v4046
        %4078 = vmatprep.subr.mxu0 0.0
        %4079 = vmatpush1.xpose.msra.mxu0 %v4044
        %4080 = vmatprep.subr.mxu0 0.0
        %4081 = vmatpush2.xpose.msra.mxu0 0.0
        %4082 = vmatprep.subr.mxu0 0.0
        %4083 = vmatpush2.xpose.msra.mxu0 0.0
        %4084 = vmatprep.subr.mxu0 0.0
        %4085 = vmatpush2.xpose.msra.mxu0 0.0
        %4086 = vmatprep.subr.mxu0 0.0
        %4087 = vmatpush2.xpose.msra.mxu0 0.0
        %4088 = vmatprep.subr.mxu0 0.0
        %4089 = vmatpush2.xpose.msra.mxu0 0.0
        %4090 = vmatprep.subr.mxu0 0.0
        %4091 = vmatpush2.xpose.msra.mxu0 0.0
        %4092 = vmatprep.subr.mxu0 0.0
        %4093 = vmatpush2.xpose.msra.mxu0 0.0
        %4094 = vmatprep.subr.mxu0 0.0
        %4095 = vmatpush2.xpose.msra.mxu0 0.0
        %4096 = vmatprep.subr.mxu0 0.0
        %4097 = vmatpush2.xpose.msra.mxu0 0.0
        %4098 = vmatprep.subr.mxu0 0.0
        %4099 = vmatpush2.xpose.msra.mxu0 0.0
        %4100 = vmatprep.subr.mxu0 0.0
        %4101 = vmatpush2.xpose.msra.mxu0 0.0
        %4102 = vmatprep.subr.mxu0 0.0
        %4103 = vmatpush2.xpose.msra.mxu0 0.0
        %4104 = vmatprep.subr.mxu0 0.0
        %4105 = vmatpush2.xpose.msra.mxu0 0.0
        %4106 = vmatprep.subr.mxu0 0.0
        %4107 = vmatpush2.xpose.msra.mxu0 0.0
        %4108 = vmatprep.subr.mxu0 0.0
        %4109 = vmatpush2.xpose.msra.mxu0 0.0
        %4110 = vmatprep.subr.mxu0 0.0
        %4111 = vmatpush2.xpose.msra.mxu0 0.0
        %4112 = vmatprep.mubr.f32.mxu0 0.0
        %4113 = vmatmul.mubr.f32.gmra.mxu0 %v4042
        %v4114 = vpop.f32.mrf.mxu0
        %v4115 = vadd.f32 0.0, %v4114
        %v4116 = vpop.f32.mrf.mxu0
        %4117 = vdwg.mxu0
        %v4118 = vmul.f32 %v4115, 0.35355338
        %v4119 = vadd.f32 %v4118, %v1622
        %v4120 = vsel %vm1625, %v4119, -inf
        %4121 = vmax.xlane.f32.xlu0 %v4120
        %v4122 = vpop.xlane.xlu0 %4121
        %v4123 = vsub.f32 %v4119, %v4122
        %v4124 = vmul.f32 %v4123, 1.442695
        %v4125 = vpow.pop %v4124
        %v4126 = vsel %vm1625, %v4125, 0.0
        %4127 = vadd.xlane.f32.xlu0 %v4126
        %v4128 = vpop.xlane.xlu0 %4127
        %v4129 = vrcp.pop %v4128
        %v4130 = vmul.f32 %v4125, %v4129
        %4131 = vrot.lane.b32.xlu0 %v3501, 72
        %v4132 = vpop.permute.xlu0 %4131
        %4133 = vrot.lane.b32.xlu0 %v3504, 72
        %v4134 = vpop.permute.xlu0 %4133
        %v4137 = vsel %vm1625, %v4130, 0
        %v4139 = vsel %vm1645, %v4134, 0
        %4141 = vmatprep.subr.mxu0 0.0
        %4142 = vmatpush1.msra.mxu0 0.0
        %4143 = vmatprep.subr.mxu0 0.0
        %4144 = vmatpush1.msra.mxu0 0.0
        %4145 = vmatprep.subr.mxu0 0.0
        %4146 = vmatpush1.msra.mxu0 0.0
        %4147 = vmatprep.subr.mxu0 0.0
        %4148 = vmatpush1.msra.mxu0 0.0
        %4149 = vmatprep.subr.mxu0 0.0
        %4150 = vmatpush1.msra.mxu0 0.0
        %4151 = vmatprep.subr.mxu0 0.0
        %4152 = vmatpush1.msra.mxu0 0.0
        %4153 = vmatprep.subr.mxu0 0.0
        %4154 = vmatpush1.msra.mxu0 0.0
        %4155 = vmatprep.subr.mxu0 0.0
        %4156 = vmatpush1.msra.mxu0 0.0
        %4157 = vmatprep.subr.mxu0 0.0
        %4158 = vmatpush1.msra.mxu0 0.0
        %4159 = vmatprep.subr.mxu0 0.0
        %4160 = vmatpush1.msra.mxu0 0.0
        %4161 = vmatprep.subr.mxu0 0.0
        %4162 = vmatpush1.msra.mxu0 0.0
        %4163 = vmatprep.subr.mxu0 0.0
        %4164 = vmatpush1.msra.mxu0 0.0
        %4165 = vmatprep.subr.mxu0 0.0
        %4166 = vmatpush1.msra.mxu0 0.0
        %4167 = vmatprep.subr.mxu0 0.0
        %4168 = vmatpush1.msra.mxu0 0.0
        %4169 = vmatprep.subr.mxu0 0.0
        %4170 = vmatpush1.msra.mxu0 %v4139
        %4171 = vmatprep.subr.mxu0 0.0
        %4172 = vmatpush1.msra.mxu0 %v4132
        %4173 = vmatprep.subr.mxu0 0.0
        %4174 = vmatpush2.msra.mxu0 0.0
        %4175 = vmatprep.subr.mxu0 0.0
        %4176 = vmatpush2.msra.mxu0 0.0
        %4177 = vmatprep.subr.mxu0 0.0
        %4178 = vmatpush2.msra.mxu0 0.0
        %4179 = vmatprep.subr.mxu0 0.0
        %4180 = vmatpush2.msra.mxu0 0.0
        %4181 = vmatprep.subr.mxu0 0.0
        %4182 = vmatpush2.msra.mxu0 0.0
        %4183 = vmatprep.subr.mxu0 0.0
        %4184 = vmatpush2.msra.mxu0 0.0
        %4185 = vmatprep.subr.mxu0 0.0
        %4186 = vmatpush2.msra.mxu0 0.0
        %4187 = vmatprep.subr.mxu0 0.0
        %4188 = vmatpush2.msra.mxu0 0.0
        %4189 = vmatprep.subr.mxu0 0.0
        %4190 = vmatpush2.msra.mxu0 0.0
        %4191 = vmatprep.subr.mxu0 0.0
        %4192 = vmatpush2.msra.mxu0 0.0
        %4193 = vmatprep.subr.mxu0 0.0
        %4194 = vmatpush2.msra.mxu0 0.0
        %4195 = vmatprep.subr.mxu0 0.0
        %4196 = vmatpush2.msra.mxu0 0.0
        %4197 = vmatprep.subr.mxu0 0.0
        %4198 = vmatpush2.msra.mxu0 0.0
        %4199 = vmatprep.subr.mxu0 0.0
        %4200 = vmatpush2.msra.mxu0 0.0
        %4201 = vmatprep.subr.mxu0 0.0
        %4202 = vmatpush2.msra.mxu0 0.0
        %4203 = vmatprep.subr.mxu0 0.0
        %4204 = vmatpush2.msra.mxu0 0.0
        %4205 = vmatprep.mubr.f32.mxu0 0.0
        %4206 = vmatmul.mubr.f32.gmra.mxu0 %v4137
        %v4207 = vpop.f32.mrf.mxu0
        %v4208 = vadd.f32 0.0, %v4207
        %v4209 = vpop.f32.mrf.mxu0
        %4210 = vdwg.mxu0
        %4212 = vrot.lane.b32.xlu0 %v3858, 8
        %v4213 = vpop.permute.xlu0 %4212
        %4216 = vrot.lane.b32.xlu0 %v4033, 16
        %v4217 = vpop.permute.xlu0 %4216
        %4220 = vrot.lane.b32.xlu0 %v4208, 24
        %v4221 = vpop.permute.xlu0 %4220
        %v4223 = vsel %vm633, %v3683, %v4213
        %v4224 = vsel %vm1311, %v4223, %v4217
        %v4225 = vsel %vm1313, %v4224, %v4221
        %v4226 = vpack.c.bf16 %v4225, %v4225
        %v4228 = vlaneseq
        %v4229 = vshrl.u32 %v4228, 7
        %v4230 = vsub.s32 0, %v4229
        %v4231 = vrot.slane %v3513, %v4230
        %v4237 = vunpack.c.l.b16 %v3508
        %v4238 = vunpack.c.l.b16 %v3509
        %v4239 = vunpack.c.l.b16 %v3510
        %v4240 = vunpack.c.l.b16 %v3511
        %v4241 = vpack.c.b16 %v4238, %v4237
        %v4242 = vpack.c.b16 %v4240, %v4239
        %v4246 = vsel %vm581, %v4226, 0
        %4248 = vmatprep.subr.bf16.mxu0 0
        %4249 = vmatpush1.bf16.msra.mxu0 0
        %4250 = vmatprep.subr.bf16.mxu0 0
        %4251 = vmatpush1.bf16.msra.mxu0 0
        %4252 = vmatprep.subr.bf16.mxu0 0
        %4253 = vmatpush1.bf16.msra.mxu0 0
        %4254 = vmatprep.subr.bf16.mxu0 0
        %4255 = vmatpush1.bf16.msra.mxu0 0
        %4256 = vmatprep.subr.bf16.mxu0 0
        %4257 = vmatpush1.bf16.msra.mxu0 0
        %4258 = vmatprep.subr.bf16.mxu0 0
        %4259 = vmatpush1.bf16.msra.mxu0 0
        %4260 = vmatprep.subr.bf16.mxu0 0
        %4261 = vmatpush1.bf16.msra.mxu0 %v4242
        %4262 = vmatprep.subr.bf16.mxu0 0
        %4263 = vmatpush1.bf16.msra.mxu0 %v4241
        %4264 = vmatprep.subr.bf16.mxu0 0
        %4265 = vmatpush2.bf16.msra.mxu0 0
        %4266 = vmatprep.subr.bf16.mxu0 0
        %4267 = vmatpush2.bf16.msra.mxu0 0
        %4268 = vmatprep.subr.bf16.mxu0 0
        %4269 = vmatpush2.bf16.msra.mxu0 0
        %4270 = vmatprep.subr.bf16.mxu0 0
        %4271 = vmatpush2.bf16.msra.mxu0 0
        %4272 = vmatprep.subr.bf16.mxu0 0
        %4273 = vmatpush2.bf16.msra.mxu0 0
        %4274 = vmatprep.subr.bf16.mxu0 0
        %4275 = vmatpush2.bf16.msra.mxu0 0
        %4276 = vmatprep.subr.bf16.mxu0 0
        %4277 = vmatpush2.bf16.msra.mxu0 0
        %4278 = vmatprep.subr.bf16.mxu0 0
        %4279 = vmatpush2.bf16.msra.mxu0 0
        %4280 = vmatprep.mubr.bf16.mxu0 0
        %4281 = vmatmul.mubr.bf16.gmra.mxu0 %v4246
        %v4282 = vpop.f32.mrf.mxu0
        %v4283 = vadd.f32 %v4231, %v4282
        %v4284 = vpop.f32.mrf.mxu0
        %v4285 = vpop.f32.mrf.mxu0
        %v4286 = vpop.f32.mrf.mxu0
        %4287 = vdwg.mxu0
        %v4288 = vadd.f32 %v3387, %v4283
        %s4289 = scalar_lea.vmem %s12, 4
        %v4290 = vld [vmem:[%s4289] sm:$0x1]
        %s4291 = scalar_lea.vmem %s13, 4
        %v4292 = vld [vmem:[%s4291] sm:$0x1]
        %v4293 = vsel %vm581, %v4288, 0.0
        %4294 = vadd.xlane.f32.xlu0 %v4293
        %v4295 = vpop.xlane.xlu0 %4294
        %v4296 = vmul.f32 %v4295, %v1383
        %v4297 = vsub.f32 %v4288, %v4296
        %v4298 = vmul.f32 %v4297, %v4297
        %v4299 = vsel %vm581, %v4298, 0.0
        %4300 = vadd.xlane.f32.xlu0 %v4299
        %v4301 = vpop.xlane.xlu0 %4300
        %v4302 = vmul.f32 %v4301, %v1383
        %v4303 = vadd.f32 %v4302, 1e-05
        %v4304 = vrsqrt.pop %v4303
        %v4305 = vmul.f32 %v4297, %v4304
        %v4307 = vlaneseq
        %v4308 = vshrl.u32 %v4307, 7
        %v4309 = vsub.s32 0, %v4308
        %v4310 = vrot.slane %v4290, %v4309
        %v4312 = vmul.f32 %v4305, %v4310
        %v4314 = vlaneseq
        %v4315 = vshrl.u32 %v4314, 7
        %v4316 = vsub.s32 0, %v4315
        %v4317 = vrot.slane %v4292, %v4316
        %v4319 = vadd.f32 %v4312, %v4317
        %s4320 = scalar_lea.vmem %s8, 16
        %v4321 = vld [vmem:[%s4320] sm:$0xf]
        %v4322 = vld [vmem:[%s4320 + $0x4] sm:$0xf]
        %v4323 = vld [vmem:[%s4320 + $0x8] sm:$0xf]
        %v4324 = vld [vmem:[%s4320 + $0xc] sm:$0xf]
        %v4325 = vpack.c.bf16 %v4319, %v4319
        %s4326 = scalar_lea.vmem %s9, 1
        %v4327 = vld [vmem:[%s4326] sm:$0x1]
        %v4329 = vlaneseq
        %v4330 = vshrl.u32 %v4329, 7
        %v4331 = vsub.s32 0, %v4330
        %v4332 = vrot.slane %v4327, %v4331
        %v4338 = vunpack.c.l.b16 %v4321
        %v4339 = vunpack.c.l.b16 %v4322
        %v4340 = vunpack.c.l.b16 %v4323
        %v4341 = vunpack.c.l.b16 %v4324
        %v4342 = vpack.c.b16 %v4339, %v4338
        %v4343 = vpack.c.b16 %v4341, %v4340
        %v4347 = vsel %vm581, %v4325, 0
        %4349 = vmatprep.subr.bf16.mxu0 0
        %4350 = vmatpush1.bf16.msra.mxu0 0
        %4351 = vmatprep.subr.bf16.mxu0 0
        %4352 = vmatpush1.bf16.msra.mxu0 0
        %4353 = vmatprep.subr.bf16.mxu0 0
        %4354 = vmatpush1.bf16.msra.mxu0 0
        %4355 = vmatprep.subr.bf16.mxu0 0
        %4356 = vmatpush1.bf16.msra.mxu0 0
        %4357 = vmatprep.subr.bf16.mxu0 0
        %4358 = vmatpush1.bf16.msra.mxu0 0
        %4359 = vmatprep.subr.bf16.mxu0 0
        %4360 = vmatpush1.bf16.msra.mxu0 0
        %4361 = vmatprep.subr.bf16.mxu0 0
        %4362 = vmatpush1.bf16.msra.mxu0 %v4343
        %4363 = vmatprep.subr.bf16.mxu0 0
        %4364 = vmatpush1.bf16.msra.mxu0 %v4342
        %4365 = vmatprep.subr.bf16.mxu0 0
        %4366 = vmatpush2.bf16.msra.mxu0 0
        %4367 = vmatprep.subr.bf16.mxu0 0
        %4368 = vmatpush2.bf16.msra.mxu0 0
        %4369 = vmatprep.subr.bf16.mxu0 0
        %4370 = vmatpush2.bf16.msra.mxu0 0
        %4371 = vmatprep.subr.bf16.mxu0 0
        %4372 = vmatpush2.bf16.msra.mxu0 0
        %4373 = vmatprep.subr.bf16.mxu0 0
        %4374 = vmatpush2.bf16.msra.mxu0 0
        %4375 = vmatprep.subr.bf16.mxu0 0
        %4376 = vmatpush2.bf16.msra.mxu0 0
        %4377 = vmatprep.subr.bf16.mxu0 0
        %4378 = vmatpush2.bf16.msra.mxu0 0
        %4379 = vmatprep.subr.bf16.mxu0 0
        %4380 = vmatpush2.bf16.msra.mxu0 0
        %4381 = vmatprep.mubr.bf16.mxu0 0
        %4382 = vmatmul.mubr.bf16.gmra.mxu0 %v4347
        %v4383 = vpop.f32.mrf.mxu0
        %v4384 = vadd.f32 %v4332, %v4383
        %v4385 = vpop.f32.mrf.mxu0
        %v4386 = vpop.f32.mrf.mxu0
        %v4387 = vpop.f32.mrf.mxu0
        %4388 = vdwg.mxu0
        %v4389 = vmax.f32 %v4384, 0.0
        %s4390 = scalar_lea.vmem %s10, 32
        %v4391 = vld [vmem:[%s4390] sm:$0xf]
        %v4392 = vld [vmem:[%s4390 + $0x4] sm:$0xf]
        %v4393 = vld [vmem:[%s4390 + $0x8] sm:$0xf]
        %v4394 = vld [vmem:[%s4390 + $0xc] sm:$0xf]
        %v4395 = vld [vmem:[%s4390 + $0x10] sm:$0xf]
        %v4396 = vld [vmem:[%s4390 + $0x14] sm:$0xf]
        %v4397 = vld [vmem:[%s4390 + $0x18] sm:$0xf]
        %v4398 = vld [vmem:[%s4390 + $0x1c] sm:$0xf]
        %v4399 = vpack.c.bf16 %v4389, %v4389
        %s4400 = scalar_lea.vmem %s11, 1
        %v4401 = vld [vmem:[%s4400] sm:$0x1]
        %v4403 = vlaneseq
        %v4404 = vshrl.u32 %v4403, 7
        %v4405 = vsub.s32 0, %v4404
        %v4406 = vrot.slane %v4401, %v4405
        %v4416 = vunpack.c.l.b16 %v4391
        %v4417 = vunpack.c.l.b16 %v4392
        %v4418 = vunpack.c.l.b16 %v4393
        %v4419 = vunpack.c.l.b16 %v4394
        %v4420 = vunpack.c.l.b16 %v4395
        %v4421 = vunpack.c.l.b16 %v4396
        %v4422 = vunpack.c.l.b16 %v4397
        %v4423 = vunpack.c.l.b16 %v4398
        %v4424 = vpack.c.b16 %v4417, %v4416
        %v4425 = vpack.c.b16 %v4419, %v4418
        %v4426 = vpack.c.b16 %v4421, %v4420
        %v4427 = vpack.c.b16 %v4423, %v4422
        %v4433 = vsel %vm2460, %v4399, 0
        %4435 = vmatprep.subr.bf16.mxu0 0
        %4436 = vmatpush1.bf16.msra.mxu0 0
        %4437 = vmatprep.subr.bf16.mxu0 0
        %4438 = vmatpush1.bf16.msra.mxu0 0
        %4439 = vmatprep.subr.bf16.mxu0 0
        %4440 = vmatpush1.bf16.msra.mxu0 0
        %4441 = vmatprep.subr.bf16.mxu0 0
        %4442 = vmatpush1.bf16.msra.mxu0 0
        %4443 = vmatprep.subr.bf16.mxu0 0
        %4444 = vmatpush1.bf16.msra.mxu0 %v4427
        %4445 = vmatprep.subr.bf16.mxu0 0
        %4446 = vmatpush1.bf16.msra.mxu0 %v4426
        %4447 = vmatprep.subr.bf16.mxu0 0
        %4448 = vmatpush1.bf16.msra.mxu0 %v4425
        %4449 = vmatprep.subr.bf16.mxu0 0
        %4450 = vmatpush1.bf16.msra.mxu0 %v4424
        %4451 = vmatprep.subr.bf16.mxu0 0
        %4452 = vmatpush2.bf16.msra.mxu0 0
        %4453 = vmatprep.subr.bf16.mxu0 0
        %4454 = vmatpush2.bf16.msra.mxu0 0
        %4455 = vmatprep.subr.bf16.mxu0 0
        %4456 = vmatpush2.bf16.msra.mxu0 0
        %4457 = vmatprep.subr.bf16.mxu0 0
        %4458 = vmatpush2.bf16.msra.mxu0 0
        %4459 = vmatprep.subr.bf16.mxu0 0
        %4460 = vmatpush2.bf16.msra.mxu0 0
        %4461 = vmatprep.subr.bf16.mxu0 0
        %4462 = vmatpush2.bf16.msra.mxu0 0
        %4463 = vmatprep.subr.bf16.mxu0 0
        %4464 = vmatpush2.bf16.msra.mxu0 0
        %4465 = vmatprep.subr.bf16.mxu0 0
        %4466 = vmatpush2.bf16.msra.mxu0 0
        %4467 = vmatprep.mubr.bf16.mxu0 0
        %4468 = vmatmul.mubr.bf16.gmra.mxu0 %v4433
        %v4469 = vpop.f32.mrf.mxu0
        %v4470 = vadd.f32 %v4406, %v4469
        %v4471 = vpop.f32.mrf.mxu0
        %v4472 = vpop.f32.mrf.mxu0
        %v4473 = vpop.f32.mrf.mxu0
        %4474 = vdwg.mxu0
        %v4475 = vadd.f32 %v4319, %v4470
        %s4476 = scalar_lea.vmem %s12, 5
        %v4477 = vld [vmem:[%s4476] sm:$0x1]
        %s4478 = scalar_lea.vmem %s13, 5
        %v4479 = vld [vmem:[%s4478] sm:$0x1]
        %v4480 = vsel %vm581, %v4475, 0.0
        %4481 = vadd.xlane.f32.xlu0 %v4480
        %v4482 = vpop.xlane.xlu0 %4481
        %v4483 = vmul.f32 %v4482, %v1383
        %v4484 = vsub.f32 %v4475, %v4483
        %v4485 = vmul.f32 %v4484, %v4484
        %v4486 = vsel %vm581, %v4485, 0.0
        %4487 = vadd.xlane.f32.xlu0 %v4486
        %v4488 = vpop.xlane.xlu0 %4487
        %v4489 = vmul.f32 %v4488, %v1383
        %v4490 = vadd.f32 %v4489, 1e-05
        %v4491 = vrsqrt.pop %v4490
        %v4492 = vmul.f32 %v4484, %v4491
        %v4494 = vlaneseq
        %v4495 = vshrl.u32 %v4494, 7
        %v4496 = vsub.s32 0, %v4495
        %v4497 = vrot.slane %v4477, %v4496
        %v4499 = vmul.f32 %v4492, %v4497
        %v4501 = vlaneseq
        %v4502 = vshrl.u32 %v4501, 7
        %v4503 = vsub.s32 0, %v4502
        %v4504 = vrot.slane %v4479, %v4503
        %v4506 = vadd.f32 %v4499, %v4504
        %v4507 = vld [vmem:[%s14] sm:$0xf]
        %v4508 = vld [vmem:[%s14 + $0x4] sm:$0xf]
        %v4509 = vld [vmem:[%s14 + $0x8] sm:$0xf]
        %v4510 = vld [vmem:[%s14 + $0xc] sm:$0xf]
        %v4511 = vpack.c.bf16 %v4506, %v4506
        %v4512 = vld [vmem:[%s15] sm:$0x1]
        %v4514 = vlaneseq
        %v4515 = vshrl.u32 %v4514, 7
        %v4516 = vsub.s32 0, %v4515
        %v4517 = vrot.slane %v4512, %v4516
        %v4523 = vunpack.c.l.b16 %v4507
        %v4524 = vunpack.c.l.b16 %v4508
        %v4525 = vunpack.c.l.b16 %v4509
        %v4526 = vunpack.c.l.b16 %v4510
        %v4527 = vpack.c.b16 %v4524, %v4523
        %v4528 = vpack.c.b16 %v4526, %v4525
        %v4532 = vsel %vm581, %v4511, 0
        %4534 = vmatprep.subr.bf16.mxu0 0
        %4535 = vmatpush1.bf16.msra.mxu0 0
        %4536 = vmatprep.subr.bf16.mxu0 0
        %4537 = vmatpush1.bf16.msra.mxu0 0
        %4538 = vmatprep.subr.bf16.mxu0 0
        %4539 = vmatpush1.bf16.msra.mxu0 0
        %4540 = vmatprep.subr.bf16.mxu0 0
        %4541 = vmatpush1.bf16.msra.mxu0 0
        %4542 = vmatprep.subr.bf16.mxu0 0
        %4543 = vmatpush1.bf16.msra.mxu0 0
        %4544 = vmatprep.subr.bf16.mxu0 0
        %4545 = vmatpush1.bf16.msra.mxu0 0
        %4546 = vmatprep.subr.bf16.mxu0 0
        %4547 = vmatpush1.bf16.msra.mxu0 %v4528
        %4548 = vmatprep.subr.bf16.mxu0 0
        %4549 = vmatpush1.bf16.msra.mxu0 %v4527
        %4550 = vmatprep.subr.bf16.mxu0 0
        %4551 = vmatpush2.bf16.msra.mxu0 0
        %4552 = vmatprep.subr.bf16.mxu0 0
        %4553 = vmatpush2.bf16.msra.mxu0 0
        %4554 = vmatprep.subr.bf16.mxu0 0
        %4555 = vmatpush2.bf16.msra.mxu0 0
        %4556 = vmatprep.subr.bf16.mxu0 0
        %4557 = vmatpush2.bf16.msra.mxu0 0
        %4558 = vmatprep.subr.bf16.mxu0 0
        %4559 = vmatpush2.bf16.msra.mxu0 0
        %4560 = vmatprep.subr.bf16.mxu0 0
        %4561 = vmatpush2.bf16.msra.mxu0 0
        %4562 = vmatprep.subr.bf16.mxu0 0
        %4563 = vmatpush2.bf16.msra.mxu0 0
        %4564 = vmatprep.subr.bf16.mxu0 0
        %4565 = vmatpush2.bf16.msra.mxu0 0
        %4566 = vmatprep.mubr.bf16.mxu0 0
        %4567 = vmatmul.mubr.bf16.gmra.mxu0 %v4532
        %v4568 = vpop.f32.mrf.mxu0
        %v4569 = vadd.f32 %v4517, %v4568
        %v4570 = vpop.f32.mrf.mxu0
        %v4571 = vpop.f32.mrf.mxu0
        %v4572 = vpop.f32.mrf.mxu0
        %4573 = vdwg.mxu0
        %4574 = vst [vmem:[%s538] sm:$0xff] %v4569
        %s4575 = sand.u32 %s389, 1
        %s4576 = scalar_lea.sflag [#allocation3], %s4575
        %s4577 = sand.u32 %s389, 1
        %s4578 = smul.addr %s4577, 8
        %s4579 = scalar_lea.vmem [#allocation2], %s4578
        // Predicated region
        $region85: #{transformer_decoder_forward.1} parent=83 // pred_check
          %p4580 = pneg %p399
        $region86: #{transformer_decoder_forward.1} parent=83 // pred_check_branch
          %4582 = sbr.rel (%p4580) target = $region88
        $region87: #{transformer_decoder_forward.1} parent=83 // pred_region
          %s4584 = ssub.s32 128, 128
          %4585 = vsyncadd %s4576, %s4584
          %s4586 = smul.addr %s30, 128
          %s4587 = scalar_lea.hbm %s16, %s4586
          %s4589 = sshll.u32 %s4579, 4
          %s4590 = int_to_ptr.vmem [resolvable:$true] %s4589
          %4592 = dma.vmem_to_hbm [thread:$0]  %s4590, 128, %s4587, %s4576
        $region88: #{transformer_decoder_forward.1} parent=83 // pred_fallthru
          _
      $region84: #{transformer_decoder_forward.1} parent=5 // pred_fallthru
        _
      %p4593 = scmp.le.s32.totalorder 2, %s25
      // Predicated region
      $region89: #{transformer_decoder_forward.1} parent=5 // pred_check
        %p4594 = pneg %p4593
      $region90: #{transformer_decoder_forward.1} parent=5 // pred_check_branch
        %4596 = sbr.rel (%p4594) target = $region92
      $region91: #{transformer_decoder_forward.1} parent=5 // pred_region
        %s4597 = ssub.s32 %s25, 2
        // Predicated region
        $region93: #{transformer_decoder_forward.1} parent=91 // pred_check
          %p4598 = pneg %p405
        $region94: #{transformer_decoder_forward.1} parent=91 // pred_check_branch
          %4600 = sbr.rel (%p4598) target = $region96
        $region95: #{transformer_decoder_forward.1} parent=91 // pred_region
          %s4601 = sand.u32 %s390, 1
          %s4602 = scalar_lea.sflag [#allocation3], %s4601
          %s4603 = sand.u32 %s390, 1
          %s4604 = smul.addr %s4603, 8
          %s4605 = scalar_lea.vmem [#allocation2], %s4604
          %4606 = dma.done %s4602, 128
        $region96: #{transformer_decoder_forward.1} parent=91 // pred_fallthru
          _
      $region92: #{transformer_decoder_forward.1} parent=5 // pred_fallthru
        _
    $region6: #{transformer_decoder_forward.1} parent=1 // loop_footer
      %s29 = sadd.s32 1, %s25
    $region7: #{transformer_decoder_forward.1} parent=1 // loop_footer_branch
      %24 = sbr.rel target = $region3
    $region8: #{transformer_decoder_forward.1} parent=1 // loop_exit
      _
    %4607 = vsyncpa [#allocation3], 1
    %s4608 = scalar_lea.sflag [#allocation3], 1
    %4609 = vsyncpa %s4608, 1

</llo_original>
